<compile_context>
chip_gen: v5e
topology: v5e:2x2
jax: 0.10.0
libtpu: 0.0.40
codegen_flags: <defaults>
</compile_context>

<pallas_src>
import functools

import jax
import jax.numpy as jnp
from jax.experimental import pallas as pl
from jax.experimental.pallas import tpu as pltpu


# ----------------------------------------------------------------------------
# Generation-aware VMEM / tiling budgets
# ----------------------------------------------------------------------------

def _detect_vmem_capacity():
    try:
        return int(pltpu.get_tpu_info().vmem_capacity_bytes)
    except Exception:
        # Unknown part / emulator: assume the smallest (v7x-like, 64 MiB).
        return 64 * 1024 * 1024


_VMEM_CAPACITY = _detect_vmem_capacity()
_BIG_VMEM = _VMEM_CAPACITY >= 100 * 1024 * 1024       # v5e / v6e (128 MiB VMEM)
_VMEM_LIMIT = (96 if _BIG_VMEM else 48) * 1024 * 1024
_EDGE_TM_CAP = 1024 if _BIG_VMEM else 512             # edge-conv row tile cap
_POOL_TN_CAP = 2048 if _BIG_VMEM else 1024            # pooled-conv row tile cap
_K_CHUNK = 4                                          # neighbors per MXU pass


def _pick_tile(n, cap, mult=16):
    """Largest tile <= cap that divides n (preferring multiples of `mult`).

    Never silently returns an oversized block: for n > cap it searches for an
    8/16-aligned divisor <= cap; only a pathological n (no aligned divisor at
    all) falls back to the full dimension, which is always a legal block.
    """
    if n <= cap:
        return n
    for m in (mult, 8):
        t = (cap // m) * m
        while t >= m:
            if n % t == 0:
                return t
            t -= m
    return n


# ----------------------------------------------------------------------------
# Edge conv kernel: (1x1 conv + BN + LeakyReLU(0.2) + max over k neighbors)
# ----------------------------------------------------------------------------

def _edge_conv_kernel(nbr_ref, ctr_ref, wd_ref, wc_ref, shift_ref, out_ref):
    """nbr_ref: (k, TM, C) bf16; ctr_ref: (TM, C) bf16;
    wd_ref / wc_ref: (C, Cout) bf16 (BN scale pre-folded);
    shift_ref: (1, Cout) f32; out_ref: (TM, Cout) bf16.
    """
    k, tm, c = nbr_ref.shape
    cout = wd_ref.shape[1]
    wd = wd_ref[...]
    # Center term and BN shift are constant across the k neighbors: add once.
    ctr = jnp.dot(ctr_ref[...], wc_ref[...], preferred_element_type=jnp.float32)
    # Chunk the k axis with a running max so the live f32 intermediate stays at
    # ~TM*Cout instead of k*TM*Cout (identical MXU work).
    nb_max = None
    for c0 in range(0, k, _K_CHUNK):
        kc = min(_K_CHUNK, k - c0)
        blk = nbr_ref[c0:c0 + kc]                                   # (kc, TM, C)
        y = jnp.dot(blk.reshape(kc * tm, c), wd,
                    preferred_element_type=jnp.float32)             # (kc*TM, Cout)
        m = jnp.max(y.reshape(kc, tm, cout), axis=0)                # (TM, Cout)
        nb_max = m if nb_max is None else jnp.maximum(nb_max, m)
    z = nb_max + ctr + shift_ref[...]
    # LeakyReLU commutes with the max over k (monotone), so apply it once.
    out_ref[...] = jnp.where(z > 0, z, 0.2 * z).astype(out_ref.dtype)


def _edge_conv_pallas(nbrs, center, w_diff, w_comb, shift):
    k, M, C = nbrs.shape
    Cout = w_diff.shape[1]
    TM = _pick_tile(M, _EDGE_TM_CAP)
    return pl.pallas_call(
        _edge_conv_kernel,
        out_shape=jax.ShapeDtypeStruct((M, Cout), jnp.bfloat16),
        grid=(M // TM,),
        in_specs=[
            pl.BlockSpec((k, TM, C), lambda i: (0, i, 0)),
            pl.BlockSpec((TM, C), lambda i: (i, 0)),
            pl.BlockSpec((C, Cout), lambda i: (0, 0)),
            pl.BlockSpec((C, Cout), lambda i: (0, 0)),
            pl.BlockSpec((1, Cout), lambda i: (0, 0)),
        ],
        out_specs=pl.BlockSpec((TM, Cout), lambda i: (i, 0)),
        compiler_params=pltpu.CompilerParams(
            dimension_semantics=("parallel",),
            vmem_limit_bytes=_VMEM_LIMIT),
    )(nbrs, center, w_diff, w_comb, shift)


def _edge_conv_jnp(nbrs, center, w_diff, w_comb, shift):
    """Plain-JAX edge conv used only for the 3-channel input layer."""
    y = jnp.einsum("kmc,cd->kmd", nbrs, w_diff,
                   preferred_element_type=jnp.float32)
    nb_max = jnp.max(y, axis=0)
    z = nb_max + jnp.dot(center, w_comb,
                         preferred_element_type=jnp.float32) + shift
    return jnp.where(z > 0, z, 0.2 * z).astype(jnp.bfloat16)


def edge_conv(nbrs, center, w_diff, w_comb, shift):
    """nbrs: (k, M, C) bf16, center: (M, C) bf16 -> (M, Cout) bf16."""
    if center.shape[-1] < 8:
        # Layer 0 (C=3): a (k, TM, 3) VMEM block pads lanes 3->128 (~40x VMEM
        # waste) and a K=3 MXU dot is ~1% utilization -- plain JAX is cheaper.
        return _edge_conv_jnp(nbrs, center, w_diff, w_comb, shift)
    return _edge_conv_pallas(nbrs, center, w_diff, w_comb, shift)


# ----------------------------------------------------------------------------
# Fused global conv (1x1) + BN + LeakyReLU + global max/avg pool + classifier
# ----------------------------------------------------------------------------

def _global_pool_clf_kernel(f1_ref, f2_ref, f3_ref, f4_ref,
                            gw1_ref, gw2_ref, gw3_ref, gw4_ref, gshift_ref,
                            w1m_ref, w1a_ref, b1_ref,
                            w2_ref, b2_ref, w3_ref, b3_ref,
                            out_ref, max_acc, sum_acc, *, inv_n):
    n = pl.program_id(1)
    tn = f1_ref.shape[1]
    e = gw1_ref.shape[1]
    # Row-split 512xE conv (bf16 operands, f32 acc): the (B, N, 512) concat is
    # never materialized in HBM.
    # TODO(synk): a single K=512 contraction via a column-stacked feature
    # buffer is blocked by the 128-lane output-block constraint for the two
    # 64-wide layers; revisit with a (512, M) row-stacked feature layout.
    y = (jnp.dot(f1_ref[0], gw1_ref[...], preferred_element_type=jnp.float32)
         + jnp.dot(f2_ref[0], gw2_ref[...], preferred_element_type=jnp.float32)
         + jnp.dot(f3_ref[0], gw3_ref[...], preferred_element_type=jnp.float32)
         + jnp.dot(f4_ref[0], gw4_ref[...], preferred_element_type=jnp.float32)
         + gshift_ref[...])
    y = jnp.where(y > 0, y, 0.2 * y)                              # (TN, E) f32
    # Accumulate into an (8, E) sublane tile; the cross-sublane 8->1 reduce
    # happens only once, in the final grid step.
    y8 = y.reshape(tn // 8, 8, e)
    t_max = jnp.max(y8, axis=0)                                   # (8, E)
    t_sum = jnp.sum(y8, axis=0)                                   # (8, E)

    @pl.when(n == 0)
    def _():
        max_acc[...] = t_max
        sum_acc[...] = t_sum

    @pl.when(n > 0)
    def _():
        max_acc[...] = jnp.maximum(max_acc[...], t_max)
        sum_acc[...] = sum_acc[...] + t_sum

    @pl.when(n == pl.num_programs(1) - 1)
    def _():
        g_max = jnp.max(max_acc[...], axis=0, keepdims=True)            # (1, E)
        g_avg = jnp.sum(sum_acc[...], axis=0, keepdims=True) * inv_n    # (1, E)
        # Classifier (eval mode: dropout = identity, BN folded into weights).
        h = (jnp.dot(g_max.astype(jnp.bfloat16), w1m_ref[...],
                     preferred_element_type=jnp.float32)
             + jnp.dot(g_avg.astype(jnp.bfloat16), w1a_ref[...],
                       preferred_element_type=jnp.float32)
             + b1_ref[...])
        h = jnp.where(h > 0, h, 0.2 * h)
        h = jnp.dot(h.astype(jnp.bfloat16), w2_ref[...],
                    preferred_element_type=jnp.float32) + b2_ref[...]
        h = jnp.where(h > 0, h, 0.2 * h)
        out_ref[0] = (jnp.dot(h.astype(jnp.bfloat16), w3_ref[...],
                              preferred_element_type=jnp.float32) + b3_ref[...])


def global_pool_classifier(feats, gp, cp):
    f1, f2, f3, f4 = feats                        # (B, N, 64/64/128/256) bf16
    B, N, _ = f1.shape
    E = gp["w1"].shape[1]
    nc = cp["w3"].shape[1]
    TN = _pick_tile(N, _POOL_TN_CAP)
    assert TN % 8 == 0, "pooled-conv row tile must be a multiple of 8"
    kernel = functools.partial(_global_pool_clf_kernel, inv_n=1.0 / N)

    def feat_spec(c):
        return pl.BlockSpec((1, TN, c), lambda b, n: (b, n, 0))

    def full2(a):
        return pl.BlockSpec(a.shape, lambda b, n: (0, 0))

    args = (f1, f2, f3, f4,
            gp["w1"], gp["w2"], gp["w3"], gp["w4"], gp["shift"],
            cp["w1_max"], cp["w1_avg"], cp["b1"],
            cp["w2"], cp["b2"], cp["w3"], cp["b3"])
    in_specs = ([feat_spec(f.shape[-1]) for f in (f1, f2, f3, f4)]
                + [full2(a) for a in args[4:]])

    # TODO(synk): on v7x (2 TensorCores) split the N axis across cores for B=1
    # inference (per-core partial max/sum scratch + tiny final combine).
    out = pl.pallas_call(
        kernel,
        out_shape=jax.ShapeDtypeStruct((B, 1, nc), jnp.float32),
        grid=(B, N // TN),
        in_specs=in_specs,
        out_specs=pl.BlockSpec((1, 1, nc), lambda b, n: (b, 0, 0)),
        scratch_shapes=[pltpu.VMEM((8, E), jnp.float32),
                        pltpu.VMEM((8, E), jnp.float32)],
        compiler_params=pltpu.CompilerParams(
            dimension_semantics=("parallel", "arbitrary"),
            vmem_limit_bytes=_VMEM_LIMIT),
    )(*args)
    return out.reshape(B, nc)


# ----------------------------------------------------------------------------
# Plain-JAX glue: kNN graph construction (data-dependent gather)
# ----------------------------------------------------------------------------

def knn_idx(feat, k):
    """feat: (B, N, C) bf16 -> (B, N, k) indices of the k nearest neighbors."""
    # TODO(synk): stream distance tiles + a running partial top-k in a Pallas
    # kernel so the (B, N, N) matrix and XLA's sort-based top_k are avoided.
    inner = jnp.einsum("bnc,bmc->bnm", feat, feat,
                       preferred_element_type=jnp.float32)
    sq = jnp.einsum("bnc,bnc->bn", feat, feat,
                    preferred_element_type=jnp.float32)
    neg_dist = 2.0 * inner - sq[:, :, None] - sq[:, None, :]
    return jax.lax.top_k(neg_dist, k)[1]          # k largest == k nearest


def get_graph_feature_split(feat, k):
    """feat: (B, N, C) bf16 -> nbrs (k, B*N, C) bf16, center (B*N, C) bf16."""
    # TODO(synk): fuse this gather into the edge-conv kernel (VMEM-resident
    # feature table + scalar-prefetched indices) so the (k, B*N, C) tensor is
    # never written to HBM.
    B, N, C = feat.shape
    idx = knn_idx(feat, k)                        # (B, N, k)
    idx_t = jnp.transpose(idx, (2, 0, 1))         # (k, B, N) -- tiny
    nbrs = jax.vmap(
        lambda ids_k: jax.vmap(lambda pts, ids: pts[ids])(feat, ids_k))(idx_t)
    nbrs = nbrs.reshape(k, B * N, C)
    center = feat.reshape(B * N, C)
    return nbrs, center


# ----------------------------------------------------------------------------
# Parameter initialization (deterministic, synthetic; BN folded for inference)
# ----------------------------------------------------------------------------

def _bn_fold(c, tag):
    """Inference-mode BN with running_mean=0, running_var=1, synthetic affine."""
    eps = 1e-5
    gamma = 1.0 + 0.05 * jnp.cos(jnp.arange(c, dtype=jnp.float32) + tag)
    beta = 0.02 * jnp.sin(jnp.arange(c, dtype=jnp.float32) + tag)
    return (gamma / jnp.sqrt(1.0 + eps))[None, :], beta[None, :]


def init_params(key, emb_dims, num_classes):
    keys = jax.random.split(key, 8)

    def w(kk, cin, cout):
        return jax.random.normal(kk, (cin, cout), jnp.float32) / jnp.sqrt(cin)

    # Edge convs: (per-branch input channels C, output channels Cout).
    edge_io = [(3, 64), (64, 64), (64, 128), (128, 256)]
    edge_convs = []
    for i, (c, cout) in enumerate(edge_io):
        W = w(keys[i], 2 * c, cout)               # rows ordered [x_j - x_i, x_i]
        scale, shift = _bn_fold(cout, i)
        Wf = W * scale                            # fold BN scale into the weight
        edge_convs.append(dict(
            w_diff=Wf[:c].astype(jnp.bfloat16),
            w_comb=(Wf[c:] - Wf[:c]).astype(jnp.bfloat16),
            shift=shift))

    gW = w(keys[4], 512, emb_dims)
    gs, gb = _bn_fold(emb_dims, 10)
    gWf = (gW * gs).astype(jnp.bfloat16)
    global_conv = dict(w1=gWf[:64], w2=gWf[64:128], w3=gWf[128:256],
                       w4=gWf[256:512], shift=gb)

    s1, b1 = _bn_fold(512, 20)
    W1 = (w(keys[5], emb_dims * 2, 512) * s1).astype(jnp.bfloat16)
    s2, b2 = _bn_fold(256, 21)
    W2 = w(keys[6], 512, 256)
    bias2 = 0.01 * jnp.ones((1, 256), jnp.float32)
    W3 = w(keys[7], 256, num_classes)
    bias3 = 0.01 * jnp.ones((1, num_classes), jnp.float32)
    classifier = dict(
        w1_max=W1[:emb_dims], w1_avg=W1[emb_dims:], b1=b1,
        w2=(W2 * s2).astype(jnp.bfloat16), b2=bias2 * s2 + b2,
        w3=W3.astype(jnp.bfloat16), b3=bias3)
    return dict(edge_convs=edge_convs, global_conv=global_conv,
                classifier=classifier)


# ----------------------------------------------------------------------------
# DGCNN forward
# ----------------------------------------------------------------------------

def dgcnn_forward(x, params, k):
    """x: (B, 3, N) as in PyTorch. Returns logits (B, num_classes) f32."""
    B, _, N = x.shape
    feat = jnp.transpose(x, (0, 2, 1)).astype(jnp.bfloat16)   # (B, N, 3) bf16
    features = []
    for layer in params["edge_convs"]:
        nbrs, center = get_graph_feature_split(feat, k)       # (k, B*N, C), (B*N, C)
        out = edge_conv(nbrs, center,
                        layer["w_diff"], layer["w_comb"], layer["shift"])
        feat = out.reshape(B, N, -1)                           # bf16 feature map
        features.append(feat)
    return global_pool_classifier(features, params["global_conv"],
                                  params["classifier"])


if __name__ == "__main__":
    B, N = 2, 16
    K_NEIGHBORS, EMB_DIMS, NUM_CLASSES = 4, 32, 67

    key = jax.random.PRNGKey(0)
    x = jax.random.normal(key, (B, 3, N), jnp.float32)    # point cloud (B, 3, N)
    params = init_params(jax.random.PRNGKey(1), EMB_DIMS, NUM_CLASSES)

    fwd = jax.jit(functools.partial(dgcnn_forward, k=K_NEIGHBORS))
    logits = jax.block_until_ready(fwd(x, params))

    assert logits.shape == (B, NUM_CLASSES), logits.shape
    assert bool(jnp.all(jnp.isfinite(logits)))
    print("KERNEL_OK")
</pallas_src>

<mosaic_0001>
module attributes {stable_mosaic.version = 11 : i64} {
  func.func @_edge_conv_kernel(%arg0: i32, %arg1: memref<4x32x64xbf16, #tpu.memory_space<vmem>>, %arg2: memref<32x64xbf16, #tpu.memory_space<vmem>>, %arg3: memref<64x64xbf16, #tpu.memory_space<vmem>>, %arg4: memref<64x64xbf16, #tpu.memory_space<vmem>>, %arg5: memref<1x64xf32, #tpu.memory_space<vmem>>, %arg6: memref<32x64xbf16, #tpu.memory_space<vmem>>) attributes {dimension_semantics = [#tpu.dimension_semantics<parallel>], iteration_bounds = array<i64: 1>, scalar_prefetch = 0 : i64, scratch_operands = 0 : i64, tpu.core_type = #tpu.core_type<tc>, window_params = [{transform_indices = @transform_0, window_bounds = array<i64: 4, 32, 64>}, {transform_indices = @transform_1, window_bounds = array<i64: 32, 64>}, {pipeline_mode = #tpu.pipeline_mode<synchronous>, transform_indices = @transform_2, window_bounds = array<i64: 64, 64>}, {pipeline_mode = #tpu.pipeline_mode<synchronous>, transform_indices = @transform_3, window_bounds = array<i64: 64, 64>}, {pipeline_mode = #tpu.pipeline_mode<synchronous>, transform_indices = @transform_4, window_bounds = array<i64: 1, 64>}, {transform_indices = @transform_5, window_bounds = array<i64: 32, 64>}]} {
    %c0 = arith.constant 0 : index
    %c0_0 = arith.constant 0 : index
    %0 = vector.load %arg3[%c0, %c0_0] : memref<64x64xbf16, #tpu.memory_space<vmem>>, vector<64x64xbf16>
    %c0_1 = arith.constant 0 : index
    %c0_2 = arith.constant 0 : index
    %1 = vector.load %arg2[%c0_1, %c0_2] : memref<32x64xbf16, #tpu.memory_space<vmem>>, vector<32x64xbf16>
    %c0_3 = arith.constant 0 : index
    %c0_4 = arith.constant 0 : index
    %2 = vector.load %arg4[%c0_3, %c0_4] : memref<64x64xbf16, #tpu.memory_space<vmem>>, vector<64x64xbf16>
    %cst = arith.constant dense<0.000000e+00> : vector<32x64xf32>
    %3 = tpu.matmul %1, %2, %cst {dimension_numbers = #tpu.dot_dimension_numbers<[1], [0], [0], [1], [0, 0, 1, 1], [], []>} : vector<32x64xbf16>, vector<64x64xbf16>, vector<32x64xf32> -> vector<32x64xf32>
    %c0_5 = arith.constant 0 : index
    %c0_6 = arith.constant 0 : index
    %c0_7 = arith.constant 0 : index
    %4 = vector.load %arg1[%c0_5, %c0_6, %c0_7] : memref<4x32x64xbf16, #tpu.memory_space<vmem>>, vector<4x32x64xbf16>
    %5 = vector.shape_cast %4 : vector<4x32x64xbf16> to vector<128x64xbf16>
    %cst_8 = arith.constant dense<0.000000e+00> : vector<128x64xf32>
    %6 = tpu.matmul %5, %0, %cst_8 {dimension_numbers = #tpu.dot_dimension_numbers<[1], [0], [0], [1], [0, 0, 1, 1], [], []>} : vector<128x64xbf16>, vector<64x64xbf16>, vector<128x64xf32> -> vector<128x64xf32>
    %7 = vector.shape_cast %6 : vector<128x64xf32> to vector<4x32x64xf32>
    %cst_9 = arith.constant dense<0xFF800000> : vector<32x64xf32>
    %8 = vector.multi_reduction <maximumf>, %7, %cst_9 [0] : vector<4x32x64xf32> to vector<32x64xf32>
    %9 = arith.addf %8, %3 : vector<32x64xf32>
    %c0_10 = arith.constant 0 : index
    %c0_11 = arith.constant 0 : index
    %10 = vector.load %arg5[%c0_10, %c0_11] : memref<1x64xf32, #tpu.memory_space<vmem>>, vector<1x64xf32>
    %11 = vector.broadcast %10 : vector<1x64xf32> to vector<32x64xf32>
    %12 = arith.addf %9, %11 : vector<32x64xf32>
    %cst_12 = arith.constant 0.000000e+00 : f32
    %13 = vector.broadcast %cst_12 : f32 to vector<32x64xf32>
    %14 = arith.cmpf ogt, %12, %13 : vector<32x64xf32>
    %cst_13 = arith.constant 2.000000e-01 : f32
    %15 = vector.broadcast %cst_13 : f32 to vector<32x64xf32>
    %16 = arith.mulf %15, %12 : vector<32x64xf32>
    %17 = arith.select %14, %12, %16 : vector<32x64xi1>, vector<32x64xf32>
    %18 = arith.truncf %17 : vector<32x64xf32> to vector<32x64xbf16>
    %c0_14 = arith.constant 0 : index
    %c0_15 = arith.constant 0 : index
    %19 = vector.load %arg6[%c0_14, %c0_15] : memref<32x64xbf16, #tpu.memory_space<vmem>>, vector<32x64xbf16>
    tpu.vector_store %arg6[%c0_14, %c0_15], %18 {strides = array<i32>} : memref<32x64xbf16, #tpu.memory_space<vmem>>, vector<32x64xbf16>,
    return
  }
  func.func @transform_0(%arg0: i32) -> (i32, i32, i32) {
    %c0_i32 = arith.constant 0 : i32
    %c0_i32_0 = arith.constant 0 : i32
    %c0_i32_1 = arith.constant 0 : i32
    return %c0_i32, %arg0, %c0_i32_0 : i32, i32, i32
  }
  func.func @transform_1(%arg0: i32) -> (i32, i32) {
    %c0_i32 = arith.constant 0 : i32
    %c0_i32_0 = arith.constant 0 : i32
    return %arg0, %c0_i32 : i32, i32
  }
  func.func @transform_2(%arg0: i32) -> (i32, i32) {
    %c0_i32 = arith.constant 0 : i32
    %c0_i32_0 = arith.constant 0 : i32
    %c0_i32_1 = arith.constant 0 : i32
    return %c0_i32, %c0_i32_0 : i32, i32
  }
  func.func @transform_3(%arg0: i32) -> (i32, i32) {
    %c0_i32 = arith.constant 0 : i32
    %c0_i32_0 = arith.constant 0 : i32
    %c0_i32_1 = arith.constant 0 : i32
    return %c0_i32, %c0_i32_0 : i32, i32
  }
  func.func @transform_4(%arg0: i32) -> (i32, i32) {
    %c0_i32 = arith.constant 0 : i32
    %c0_i32_0 = arith.constant 0 : i32
    %c0_i32_1 = arith.constant 0 : i32
    return %c0_i32, %c0_i32_0 : i32, i32
  }
  func.func @transform_5(%arg0: i32) -> (i32, i32) {
    %c0_i32 = arith.constant 0 : i32
    %c0_i32_0 = arith.constant 0 : i32
    return %arg0, %c0_i32 : i32, i32
  }
}

module attributes {stable_mosaic.version = 11 : i64} {
  func.func @_edge_conv_kernel(%arg0: i32, %arg1: memref<4x32x64xbf16, #tpu.memory_space<vmem>>, %arg2: memref<32x64xbf16, #tpu.memory_space<vmem>>, %arg3: memref<64x128xbf16, #tpu.memory_space<vmem>>, %arg4: memref<64x128xbf16, #tpu.memory_space<vmem>>, %arg5: memref<1x128xf32, #tpu.memory_space<vmem>>, %arg6: memref<32x128xbf16, #tpu.memory_space<vmem>>) attributes {dimension_semantics = [#tpu.dimension_semantics<parallel>], iteration_bounds = array<i64: 1>, scalar_prefetch = 0 : i64, scratch_operands = 0 : i64, tpu.core_type = #tpu.core_type<tc>, window_params = [{transform_indices = @transform_0, window_bounds = array<i64: 4, 32, 64>}, {transform_indices = @transform_1, window_bounds = array<i64: 32, 64>}, {pipeline_mode = #tpu.pipeline_mode<synchronous>, transform_indices = @transform_2, window_bounds = array<i64: 64, 128>}, {pipeline_mode = #tpu.pipeline_mode<synchronous>, transform_indices = @transform_3, window_bounds = array<i64: 64, 128>}, {pipeline_mode = #tpu.pipeline_mode<synchronous>, transform_indices = @transform_4, window_bounds = array<i64: 1, 128>}, {transform_indices = @transform_5, window_bounds = array<i64: 32, 128>}]} {
    %c0 = arith.constant 0 : index
    %c0_0 = arith.constant 0 : index
    %0 = vector.load %arg3[%c0, %c0_0] : memref<64x128xbf16, #tpu.memory_space<vmem>>, vector<64x128xbf16>
    %c0_1 = arith.constant 0 : index
    %c0_2 = arith.constant 0 : index
    %1 = vector.load %arg2[%c0_1, %c0_2] : memref<32x64xbf16, #tpu.memory_space<vmem>>, vector<32x64xbf16>
    %c0_3 = arith.constant 0 : index
    %c0_4 = arith.constant 0 : index
    %2 = vector.load %arg4[%c0_3, %c0_4] : memref<64x128xbf16, #tpu.memory_space<vmem>>, vector<64x128xbf16>
    %cst = arith.constant dense<0.000000e+00> : vector<32x128xf32>
    %3 = tpu.matmul %1, %2, %cst {dimension_numbers = #tpu.dot_dimension_numbers<[1], [0], [0], [1], [0, 0, 1, 1], [], []>} : vector<32x64xbf16>, vector<64x128xbf16>, vector<32x128xf32> -> vector<32x128xf32>
    %c0_5 = arith.constant 0 : index
    %c0_6 = arith.constant 0 : index
    %c0_7 = arith.constant 0 : index
    %4 = vector.load %arg1[%c0_5, %c0_6, %c0_7] : memref<4x32x64xbf16, #tpu.memory_space<vmem>>, vector<4x32x64xbf16>
    %5 = vector.shape_cast %4 : vector<4x32x64xbf16> to vector<128x64xbf16>
    %cst_8 = arith.constant dense<0.000000e+00> : vector<128x128xf32>
    %6 = tpu.matmul %5, %0, %cst_8 {dimension_numbers = #tpu.dot_dimension_numbers<[1], [0], [0], [1], [0, 0, 1, 1], [], []>} : vector<128x64xbf16>, vector<64x128xbf16>, vector<128x128xf32> -> vector<128x128xf32>
    %7 = vector.shape_cast %6 : vector<128x128xf32> to vector<4x32x128xf32>
    %cst_9 = arith.constant dense<0xFF800000> : vector<32x128xf32>
    %8 = vector.multi_reduction <maximumf>, %7, %cst_9 [0] : vector<4x32x128xf32> to vector<32x128xf32>
    %9 = arith.addf %8, %3 : vector<32x128xf32>
    %c0_10 = arith.constant 0 : index
    %c0_11 = arith.constant 0 : index
    %10 = vector.load %arg5[%c0_10, %c0_11] : memref<1x128xf32, #tpu.memory_space<vmem>>, vector<1x128xf32>
    %11 = vector.broadcast %10 : vector<1x128xf32> to vector<32x128xf32>
    %12 = arith.addf %9, %11 : vector<32x128xf32>
    %cst_12 = arith.constant 0.000000e+00 : f32
    %13 = vector.broadcast %cst_12 : f32 to vector<32x128xf32>
    %14 = arith.cmpf ogt, %12, %13 : vector<32x128xf32>
    %cst_13 = arith.constant 2.000000e-01 : f32
    %15 = vector.broadcast %cst_13 : f32 to vector<32x128xf32>
    %16 = arith.mulf %15, %12 : vector<32x128xf32>
    %17 = arith.select %14, %12, %16 : vector<32x128xi1>, vector<32x128xf32>
    %18 = arith.truncf %17 : vector<32x128xf32> to vector<32x128xbf16>
    %c0_14 = arith.constant 0 : index
    %c0_15 = arith.constant 0 : index
    %19 = vector.load %arg6[%c0_14, %c0_15] : memref<32x128xbf16, #tpu.memory_space<vmem>>, vector<32x128xbf16>
    tpu.vector_store %arg6[%c0_14, %c0_15], %18 {strides = array<i32>} : memref<32x128xbf16, #tpu.memory_space<vmem>>, vector<32x128xbf16>,
    return
  }
  func.func @transform_0(%arg0: i32) -> (i32, i32, i32) {
    %c0_i32 = arith.constant 0 : i32
    %c0_i32_0 = arith.constant 0 : i32
    %c0_i32_1 = arith.constant 0 : i32
    return %c0_i32, %arg0, %c0_i32_0 : i32, i32, i32
  }
  func.func @transform_1(%arg0: i32) -> (i32, i32) {
    %c0_i32 = arith.constant 0 : i32
    %c0_i32_0 = arith.constant 0 : i32
    return %arg0, %c0_i32 : i32, i32
  }
  func.func @transform_2(%arg0: i32) -> (i32, i32) {
    %c0_i32 = arith.constant 0 : i32
    %c0_i32_0 = arith.constant 0 : i32
    %c0_i32_1 = arith.constant 0 : i32
    return %c0_i32, %c0_i32_0 : i32, i32
  }
  func.func @transform_3(%arg0: i32) -> (i32, i32) {
    %c0_i32 = arith.constant 0 : i32
    %c0_i32_0 = arith.constant 0 : i32
    %c0_i32_1 = arith.constant 0 : i32
    return %c0_i32, %c0_i32_0 : i32, i32
  }
  func.func @transform_4(%arg0: i32) -> (i32, i32) {
    %c0_i32 = arith.constant 0 : i32
    %c0_i32_0 = arith.constant 0 : i32
    %c0_i32_1 = arith.constant 0 : i32
    return %c0_i32, %c0_i32_0 : i32, i32
  }
  func.func @transform_5(%arg0: i32) -> (i32, i32) {
    %c0_i32 = arith.constant 0 : i32
    %c0_i32_0 = arith.constant 0 : i32
    return %arg0, %c0_i32 : i32, i32
  }
}

module attributes {stable_mosaic.version = 11 : i64} {
  func.func @_edge_conv_kernel(%arg0: i32, %arg1: memref<4x32x128xbf16, #tpu.memory_space<vmem>>, %arg2: memref<32x128xbf16, #tpu.memory_space<vmem>>, %arg3: memref<128x256xbf16, #tpu.memory_space<vmem>>, %arg4: memref<128x256xbf16, #tpu.memory_space<vmem>>, %arg5: memref<1x256xf32, #tpu.memory_space<vmem>>, %arg6: memref<32x256xbf16, #tpu.memory_space<vmem>>) attributes {dimension_semantics = [#tpu.dimension_semantics<parallel>], iteration_bounds = array<i64: 1>, scalar_prefetch = 0 : i64, scratch_operands = 0 : i64, tpu.core_type = #tpu.core_type<tc>, window_params = [{transform_indices = @transform_0, window_bounds = array<i64: 4, 32, 128>}, {transform_indices = @transform_1, window_bounds = array<i64: 32, 128>}, {pipeline_mode = #tpu.pipeline_mode<synchronous>, transform_indices = @transform_2, window_bounds = array<i64: 128, 256>}, {pipeline_mode = #tpu.pipeline_mode<synchronous>, transform_indices = @transform_3, window_bounds = array<i64: 128, 256>}, {pipeline_mode = #tpu.pipeline_mode<synchronous>, transform_indices = @transform_4, window_bounds = array<i64: 1, 256>}, {transform_indices = @transform_5, window_bounds = array<i64: 32, 256>}]} {
    %c0 = arith.constant 0 : index
    %c0_0 = arith.constant 0 : index
    %0 = vector.load %arg3[%c0, %c0_0] : memref<128x256xbf16, #tpu.memory_space<vmem>>, vector<128x256xbf16>
    %c0_1 = arith.constant 0 : index
    %c0_2 = arith.constant 0 : index
    %1 = vector.load %arg2[%c0_1, %c0_2] : memref<32x128xbf16, #tpu.memory_space<vmem>>, vector<32x128xbf16>
    %c0_3 = arith.constant 0 : index
    %c0_4 = arith.constant 0 : index
    %2 = vector.load %arg4[%c0_3, %c0_4] : memref<128x256xbf16, #tpu.memory_space<vmem>>, vector<128x256xbf16>
    %cst = arith.constant dense<0.000000e+00> : vector<32x256xf32>
    %3 = tpu.matmul %1, %2, %cst {dimension_numbers = #tpu.dot_dimension_numbers<[1], [0], [0], [1], [0, 0, 1, 1], [], []>} : vector<32x128xbf16>, vector<128x256xbf16>, vector<32x256xf32> -> vector<32x256xf32>
    %c0_5 = arith.constant 0 : index
    %c0_6 = arith.constant 0 : index
    %c0_7 = arith.constant 0 : index
    %4 = vector.load %arg1[%c0_5, %c0_6, %c0_7] : memref<4x32x128xbf16, #tpu.memory_space<vmem>>, vector<4x32x128xbf16>
    %5 = vector.shape_cast %4 : vector<4x32x128xbf16> to vector<128x128xbf16>
    %cst_8 = arith.constant dense<0.000000e+00> : vector<128x256xf32>
    %6 = tpu.matmul %5, %0, %cst_8 {dimension_numbers = #tpu.dot_dimension_numbers<[1], [0], [0], [1], [0, 0, 1, 1], [], []>} : vector<128x128xbf16>, vector<128x256xbf16>, vector<128x256xf32> -> vector<128x256xf32>
    %7 = vector.shape_cast %6 : vector<128x256xf32> to vector<4x32x256xf32>
    %cst_9 = arith.constant dense<0xFF800000> : vector<32x256xf32>
    %8 = vector.multi_reduction <maximumf>, %7, %cst_9 [0] : vector<4x32x256xf32> to vector<32x256xf32>
    %9 = arith.addf %8, %3 : vector<32x256xf32>
    %c0_10 = arith.constant 0 : index
    %c0_11 = arith.constant 0 : index
    %10 = vector.load %arg5[%c0_10, %c0_11] : memref<1x256xf32, #tpu.memory_space<vmem>>, vector<1x256xf32>
    %11 = vector.broadcast %10 : vector<1x256xf32> to vector<32x256xf32>
    %12 = arith.addf %9, %11 : vector<32x256xf32>
    %cst_12 = arith.constant 0.000000e+00 : f32
    %13 = vector.broadcast %cst_12 : f32 to vector<32x256xf32>
    %14 = arith.cmpf ogt, %12, %13 : vector<32x256xf32>
    %cst_13 = arith.constant 2.000000e-01 : f32
    %15 = vector.broadcast %cst_13 : f32 to vector<32x256xf32>
    %16 = arith.mulf %15, %12 : vector<32x256xf32>
    %17 = arith.select %14, %12, %16 : vector<32x256xi1>, vector<32x256xf32>
    %18 = arith.truncf %17 : vector<32x256xf32> to vector<32x256xbf16>
    %c0_14 = arith.constant 0 : index
    %c0_15 = arith.constant 0 : index
    %19 = vector.load %arg6[%c0_14, %c0_15] : memref<32x256xbf16, #tpu.memory_space<vmem>>, vector<32x256xbf16>
    tpu.vector_store %arg6[%c0_14, %c0_15], %18 {strides = array<i32>} : memref<32x256xbf16, #tpu.memory_space<vmem>>, vector<32x256xbf16>,
    return
  }
  func.func @transform_0(%arg0: i32) -> (i32, i32, i32) {
    %c0_i32 = arith.constant 0 : i32
    %c0_i32_0 = arith.constant 0 : i32
    %c0_i32_1 = arith.constant 0 : i32
    return %c0_i32, %arg0, %c0_i32_0 : i32, i32, i32
  }
  func.func @transform_1(%arg0: i32) -> (i32, i32) {
    %c0_i32 = arith.constant 0 : i32
    %c0_i32_0 = arith.constant 0 : i32
    return %arg0, %c0_i32 : i32, i32
  }
  func.func @transform_2(%arg0: i32) -> (i32, i32) {
    %c0_i32 = arith.constant 0 : i32
    %c0_i32_0 = arith.constant 0 : i32
    %c0_i32_1 = arith.constant 0 : i32
    return %c0_i32, %c0_i32_0 : i32, i32
  }
  func.func @transform_3(%arg0: i32) -> (i32, i32) {
    %c0_i32 = arith.constant 0 : i32
    %c0_i32_0 = arith.constant 0 : i32
    %c0_i32_1 = arith.constant 0 : i32
    return %c0_i32, %c0_i32_0 : i32, i32
  }
  func.func @transform_4(%arg0: i32) -> (i32, i32) {
    %c0_i32 = arith.constant 0 : i32
    %c0_i32_0 = arith.constant 0 : i32
    %c0_i32_1 = arith.constant 0 : i32
    return %c0_i32, %c0_i32_0 : i32, i32
  }
  func.func @transform_5(%arg0: i32) -> (i32, i32) {
    %c0_i32 = arith.constant 0 : i32
    %c0_i32_0 = arith.constant 0 : i32
    return %arg0, %c0_i32 : i32, i32
  }
}

module attributes {stable_mosaic.version = 11 : i64} {
  func.func @_global_pool_clf_kernel(%arg0: i32, %arg1: i32, %arg2: memref<1x16x64xbf16, #tpu.memory_space<vmem>>, %arg3: memref<1x16x64xbf16, #tpu.memory_space<vmem>>, %arg4: memref<1x16x128xbf16, #tpu.memory_space<vmem>>, %arg5: memref<1x16x256xbf16, #tpu.memory_space<vmem>>, %arg6: memref<64x32xbf16, #tpu.memory_space<vmem>>, %arg7: memref<64x32xbf16, #tpu.memory_space<vmem>>, %arg8: memref<128x32xbf16, #tpu.memory_space<vmem>>, %arg9: memref<256x32xbf16, #tpu.memory_space<vmem>>, %arg10: memref<1x32xf32, #tpu.memory_space<vmem>>, %arg11: memref<32x512xbf16, #tpu.memory_space<vmem>>, %arg12: memref<32x512xbf16, #tpu.memory_space<vmem>>, %arg13: memref<1x512xf32, #tpu.memory_space<vmem>>, %arg14: memref<512x256xbf16, #tpu.memory_space<vmem>>, %arg15: memref<1x256xf32, #tpu.memory_space<vmem>>, %arg16: memref<256x67xbf16, #tpu.memory_space<vmem>>, %arg17: memref<1x67xf32, #tpu.memory_space<vmem>>, %arg18: memref<1x1x67xf32, #tpu.memory_space<vmem>>, %arg19: memref<8x32xf32, #tpu.memory_space<vmem>>, %arg20: memref<8x32xf32, #tpu.memory_space<vmem>>) attributes {dimension_semantics = [#tpu.dimension_semantics<parallel>, #tpu.dimension_semantics<arbitrary>], iteration_bounds = array<i64: 2, 1>, scalar_prefetch = 0 : i64, scratch_operands = 2 : i64, tpu.core_type = #tpu.core_type<tc>, window_params = [{transform_indices = @transform_0, window_bounds = array<i64: 1, 16, 64>}, {transform_indices = @transform_1, window_bounds = array<i64: 1, 16, 64>}, {transform_indices = @transform_2, window_bounds = array<i64: 1, 16, 128>}, {transform_indices = @transform_3, window_bounds = array<i64: 1, 16, 256>}, {pipeline_mode = #tpu.pipeline_mode<synchronous>, transform_indices = @transform_4, window_bounds = array<i64: 64, 32>}, {pipeline_mode = #tpu.pipeline_mode<synchronous>, transform_indices = @transform_5, window_bounds = array<i64: 64, 32>}, {pipeline_mode = #tpu.pipeline_mode<synchronous>, transform_indices = @transform_6, window_bounds = array<i64: 128, 32>}, {pipeline_mode = #tpu.pipeline_mode<synchronous>, transform_indices = @transform_7, window_bounds = array<i64: 256, 32>}, {pipeline_mode = #tpu.pipeline_mode<synchronous>, transform_indices = @transform_8, window_bounds = array<i64: 1, 32>}, {pipeline_mode = #tpu.pipeline_mode<synchronous>, transform_indices = @transform_9, window_bounds = array<i64: 32, 512>}, {pipeline_mode = #tpu.pipeline_mode<synchronous>, transform_indices = @transform_10, window_bounds = array<i64: 32, 512>}, {pipeline_mode = #tpu.pipeline_mode<synchronous>, transform_indices = @transform_11, window_bounds = array<i64: 1, 512>}, {pipeline_mode = #tpu.pipeline_mode<synchronous>, transform_indices = @transform_12, window_bounds = array<i64: 512, 256>}, {pipeline_mode = #tpu.pipeline_mode<synchronous>, transform_indices = @transform_13, window_bounds = array<i64: 1, 256>}, {pipeline_mode = #tpu.pipeline_mode<synchronous>, transform_indices = @transform_14, window_bounds = array<i64: 256, 67>}, {pipeline_mode = #tpu.pipeline_mode<synchronous>, transform_indices = @transform_15, window_bounds = array<i64: 1, 67>}, {transform_indices = @transform_16, window_bounds = array<i64: 1, 1, 67>}]} {
    %c0 = arith.constant 0 : index
    %c0_0 = arith.constant 0 : index
    %c0_1 = arith.constant 0 : index
    %0 = vector.load %arg2[%c0, %c0_0, %c0_1] : memref<1x16x64xbf16, #tpu.memory_space<vmem>>, vector<1x16x64xbf16>
    %1 = vector.shape_cast %0 : vector<1x16x64xbf16> to vector<16x64xbf16>
    %c0_2 = arith.constant 0 : index
    %c0_3 = arith.constant 0 : index
    %2 = vector.load %arg6[%c0_2, %c0_3] : memref<64x32xbf16, #tpu.memory_space<vmem>>, vector<64x32xbf16>
    %cst = arith.constant dense<0.000000e+00> : vector<16x32xf32>
    %3 = tpu.matmul %1, %2, %cst {dimension_numbers = #tpu.dot_dimension_numbers<[1], [0], [0], [1], [0, 0, 1, 1], [], []>} : vector<16x64xbf16>, vector<64x32xbf16>, vector<16x32xf32> -> vector<16x32xf32>
    %c0_4 = arith.constant 0 : index
    %c0_5 = arith.constant 0 : index
    %c0_6 = arith.constant 0 : index
    %4 = vector.load %arg3[%c0_4, %c0_5, %c0_6] : memref<1x16x64xbf16, #tpu.memory_space<vmem>>, vector<1x16x64xbf16>
    %5 = vector.shape_cast %4 : vector<1x16x64xbf16> to vector<16x64xbf16>
    %c0_7 = arith.constant 0 : index
    %c0_8 = arith.constant 0 : index
    %6 = vector.load %arg7[%c0_7, %c0_8] : memref<64x32xbf16, #tpu.memory_space<vmem>>, vector<64x32xbf16>
    %cst_9 = arith.constant dense<0.000000e+00> : vector<16x32xf32>
    %7 = tpu.matmul %5, %6, %cst_9 {dimension_numbers = #tpu.dot_dimension_numbers<[1], [0], [0], [1], [0, 0, 1, 1], [], []>} : vector<16x64xbf16>, vector<64x32xbf16>, vector<16x32xf32> -> vector<16x32xf32>
    %8 = arith.addf %3, %7 : vector<16x32xf32>
    %c0_10 = arith.constant 0 : index
    %c0_11 = arith.constant 0 : index
    %c0_12 = arith.constant 0 : index
    %9 = vector.load %arg4[%c0_10, %c0_11, %c0_12] : memref<1x16x128xbf16, #tpu.memory_space<vmem>>, vector<1x16x128xbf16>
    %10 = vector.shape_cast %9 : vector<1x16x128xbf16> to vector<16x128xbf16>
    %c0_13 = arith.constant 0 : index
    %c0_14 = arith.constant 0 : index
    %11 = vector.load %arg8[%c0_13, %c0_14] : memref<128x32xbf16, #tpu.memory_space<vmem>>, vector<128x32xbf16>
    %cst_15 = arith.constant dense<0.000000e+00> : vector<16x32xf32>
    %12 = tpu.matmul %10, %11, %cst_15 {dimension_numbers = #tpu.dot_dimension_numbers<[1], [0], [0], [1], [0, 0, 1, 1], [], []>} : vector<16x128xbf16>, vector<128x32xbf16>, vector<16x32xf32> -> vector<16x32xf32>
    %13 = arith.addf %8, %12 : vector<16x32xf32>
    %c0_16 = arith.constant 0 : index
    %c0_17 = arith.constant 0 : index
    %c0_18 = arith.constant 0 : index
    %14 = vector.load %arg5[%c0_16, %c0_17, %c0_18] : memref<1x16x256xbf16, #tpu.memory_space<vmem>>, vector<1x16x256xbf16>
    %15 = vector.shape_cast %14 : vector<1x16x256xbf16> to vector<16x256xbf16>
    %c0_19 = arith.constant 0 : index
    %c0_20 = arith.constant 0 : index
    %16 = vector.load %arg9[%c0_19, %c0_20] : memref<256x32xbf16, #tpu.memory_space<vmem>>, vector<256x32xbf16>
    %cst_21 = arith.constant dense<0.000000e+00> : vector<16x32xf32>
    %17 = tpu.matmul %15, %16, %cst_21 {dimension_numbers = #tpu.dot_dimension_numbers<[1], [0], [0], [1], [0, 0, 1, 1], [], []>} : vector<16x256xbf16>, vector<256x32xbf16>, vector<16x32xf32> -> vector<16x32xf32>
    %18 = arith.addf %13, %17 : vector<16x32xf32>
    %c0_22 = arith.constant 0 : index
    %c0_23 = arith.constant 0 : index
    %19 = vector.load %arg10[%c0_22, %c0_23] : memref<1x32xf32, #tpu.memory_space<vmem>>, vector<1x32xf32>
    %20 = vector.broadcast %19 : vector<1x32xf32> to vector<16x32xf32>
    %21 = arith.addf %18, %20 : vector<16x32xf32>
    %cst_24 = arith.constant 0.000000e+00 : f32
    %22 = vector.broadcast %cst_24 : f32 to vector<16x32xf32>
    %23 = arith.cmpf ogt, %21, %22 : vector<16x32xf32>
    %cst_25 = arith.constant 2.000000e-01 : f32
    %24 = vector.broadcast %cst_25 : f32 to vector<16x32xf32>
    %25 = arith.mulf %24, %21 : vector<16x32xf32>
    %26 = arith.select %23, %21, %25 : vector<16x32xi1>, vector<16x32xf32>
    %27 = vector.shape_cast %26 : vector<16x32xf32> to vector<2x8x32xf32>
    %cst_26 = arith.constant dense<0xFF800000> : vector<8x32xf32>
    %28 = vector.multi_reduction <maximumf>, %27, %cst_26 [0] : vector<2x8x32xf32> to vector<8x32xf32>
    %cst_27 = arith.constant dense<0.000000e+00> : vector<8x32xf32>
    %29 = vector.multi_reduction <add>, %27, %cst_27 [0] : vector<2x8x32xf32> to vector<8x32xf32>
    %c0_i32 = arith.constant 0 : i32
    %30 = arith.cmpi eq, %arg1, %c0_i32 : i32
    %31 = arith.extui %30 : i1 to i32
    %c0_i32_28 = arith.constant 0 : i32
    %32 = arith.cmpi ne, %31, %c0_i32_28 : i32
    scf.if %32 {
      %c0_33 = arith.constant 0 : index
      %c0_34 = arith.constant 0 : index
      %39 = vector.load %arg19[%c0_33, %c0_34] : memref<8x32xf32, #tpu.memory_space<vmem>>, vector<8x32xf32>
      tpu.vector_store %arg19[%c0_33, %c0_34], %28 {strides = array<i32>} : memref<8x32xf32, #tpu.memory_space<vmem>>, vector<8x32xf32>,
      %c0_35 = arith.constant 0 : index
      %c0_36 = arith.constant 0 : index
      %40 = vector.load %arg20[%c0_35, %c0_36] : memref<8x32xf32, #tpu.memory_space<vmem>>, vector<8x32xf32>
      tpu.vector_store %arg20[%c0_35, %c0_36], %29 {strides = array<i32>} : memref<8x32xf32, #tpu.memory_space<vmem>>, vector<8x32xf32>,
    } else {
    }
    %c0_i32_29 = arith.constant 0 : i32
    %33 = arith.cmpi sgt, %arg1, %c0_i32_29 : i32
    %34 = arith.extui %33 : i1 to i32
    %c0_i32_30 = arith.constant 0 : i32
    %35 = arith.cmpi ne, %34, %c0_i32_30 : i32
    scf.if %35 {
      %c0_33 = arith.constant 0 : index
      %c0_34 = arith.constant 0 : index
      %39 = vector.load %arg19[%c0_33, %c0_34] : memref<8x32xf32, #tpu.memory_space<vmem>>, vector<8x32xf32>
      %40 = arith.maximumf %39, %28 : vector<8x32xf32>
      %c0_35 = arith.constant 0 : index
      %c0_36 = arith.constant 0 : index
      %41 = vector.load %arg19[%c0_35, %c0_36] : memref<8x32xf32, #tpu.memory_space<vmem>>, vector<8x32xf32>
      tpu.vector_store %arg19[%c0_35, %c0_36], %40 {strides = array<i32>} : memref<8x32xf32, #tpu.memory_space<vmem>>, vector<8x32xf32>,
      %c0_37 = arith.constant 0 : index
      %c0_38 = arith.constant 0 : index
      %42 = vector.load %arg20[%c0_37, %c0_38] : memref<8x32xf32, #tpu.memory_space<vmem>>, vector<8x32xf32>
      %43 = arith.addf %42, %29 : vector<8x32xf32>
      %c0_39 = arith.constant 0 : index
      %c0_40 = arith.constant 0 : index
      %44 = vector.load %arg20[%c0_39, %c0_40] : memref<8x32xf32, #tpu.memory_space<vmem>>, vector<8x32xf32>
      tpu.vector_store %arg20[%c0_39, %c0_40], %43 {strides = array<i32>} : memref<8x32xf32, #tpu.memory_space<vmem>>, vector<8x32xf32>,
    } else {
    }
    %c0_i32_31 = arith.constant 0 : i32
    %36 = arith.cmpi eq, %arg1, %c0_i32_31 : i32
    %37 = arith.extui %36 : i1 to i32
    %c0_i32_32 = arith.constant 0 : i32
    %38 = arith.cmpi ne, %37, %c0_i32_32 : i32
    scf.if %38 {
      %c0_33 = arith.constant 0 : index
      %c0_34 = arith.constant 0 : index
      %39 = vector.load %arg19[%c0_33, %c0_34] : memref<8x32xf32, #tpu.memory_space<vmem>>, vector<8x32xf32>
      %cst_35 = arith.constant dense<0xFF800000> : vector<32xf32>
      %40 = vector.multi_reduction <maximumf>, %39, %cst_35 [0] : vector<8x32xf32> to vector<32xf32>
      %41 = vector.shape_cast %40 : vector<32xf32> to vector<1x32xf32>
      %c0_36 = arith.constant 0 : index
      %c0_37 = arith.constant 0 : index
      %42 = vector.load %arg20[%c0_36, %c0_37] : memref<8x32xf32, #tpu.memory_space<vmem>>, vector<8x32xf32>
      %cst_38 = arith.constant dense<0.000000e+00> : vector<32xf32>
      %43 = vector.multi_reduction <add>, %42, %cst_38 [0] : vector<8x32xf32> to vector<32xf32>
      %44 = vector.shape_cast %43 : vector<32xf32> to vector<1x32xf32>
      %cst_39 = arith.constant 6.250000e-02 : f32
      %45 = vector.broadcast %cst_39 : f32 to vector<1x32xf32>
      %46 = arith.mulf %44, %45 : vector<1x32xf32>
      %47 = arith.truncf %41 : vector<1x32xf32> to vector<1x32xbf16>
      %c0_40 = arith.constant 0 : index
      %c0_41 = arith.constant 0 : index
      %48 = vector.load %arg11[%c0_40, %c0_41] : memref<32x512xbf16, #tpu.memory_space<vmem>>, vector<32x512xbf16>
      %cst_42 = arith.constant dense<0.000000e+00> : vector<1x512xf32>
      %49 = tpu.matmul %47, %48, %cst_42 {dimension_numbers = #tpu.dot_dimension_numbers<[1], [0], [0], [1], [0, 0, 1, 1], [], []>} : vector<1x32xbf16>, vector<32x512xbf16>, vector<1x512xf32> -> vector<1x512xf32>
      %50 = arith.truncf %46 : vector<1x32xf32> to vector<1x32xbf16>
      %c0_43 = arith.constant 0 : index
      %c0_44 = arith.constant 0 : index
      %51 = vector.load %arg12[%c0_43, %c0_44] : memref<32x512xbf16, #tpu.memory_space<vmem>>, vector<32x512xbf16>
      %cst_45 = arith.constant dense<0.000000e+00> : vector<1x512xf32>
      %52 = tpu.matmul %50, %51, %cst_45 {dimension_numbers = #tpu.dot_dimension_numbers<[1], [0], [0], [1], [0, 0, 1, 1], [], []>} : vector<1x32xbf16>, vector<32x512xbf16>, vector<1x512xf32> -> vector<1x512xf32>
      %53 = arith.addf %49, %52 : vector<1x512xf32>
      %c0_46 = arith.constant 0 : index
      %c0_47 = arith.constant 0 : index
      %54 = vector.load %arg13[%c0_46, %c0_47] : memref<1x512xf32, #tpu.memory_space<vmem>>, vector<1x512xf32>
      %55 = arith.addf %53, %54 : vector<1x512xf32>
      %cst_48 = arith.constant 0.000000e+00 : f32
      %56 = vector.broadcast %cst_48 : f32 to vector<1x512xf32>
      %57 = arith.cmpf ogt, %55, %56 : vector<1x512xf32>
      %cst_49 = arith.constant 2.000000e-01 : f32
      %58 = vector.broadcast %cst_49 : f32 to vector<1x512xf32>
      %59 = arith.mulf %58, %55 : vector<1x512xf32>
      %60 = arith.select %57, %55, %59 : vector<1x512xi1>, vector<1x512xf32>
      %61 = arith.truncf %60 : vector<1x512xf32> to vector<1x512xbf16>
      %c0_50 = arith.constant 0 : index
      %c0_51 = arith.constant 0 : index
      %62 = vector.load %arg14[%c0_50, %c0_51] : memref<512x256xbf16, #tpu.memory_space<vmem>>, vector<512x256xbf16>
      %cst_52 = arith.constant dense<0.000000e+00> : vector<1x256xf32>
      %63 = tpu.matmul %61, %62, %cst_52 {dimension_numbers = #tpu.dot_dimension_numbers<[1], [0], [0], [1], [0, 0, 1, 1], [], []>} : vector<1x512xbf16>, vector<512x256xbf16>, vector<1x256xf32> -> vector<1x256xf32>
      %c0_53 = arith.constant 0 : index
      %c0_54 = arith.constant 0 : index
      %64 = vector.load %arg15[%c0_53, %c0_54] : memref<1x256xf32, #tpu.memory_space<vmem>>, vector<1x256xf32>
      %65 = arith.addf %63, %64 : vector<1x256xf32>
      %cst_55 = arith.constant 0.000000e+00 : f32
      %66 = vector.broadcast %cst_55 : f32 to vector<1x256xf32>
      %67 = arith.cmpf ogt, %65, %66 : vector<1x256xf32>
      %cst_56 = arith.constant 2.000000e-01 : f32
      %68 = vector.broadcast %cst_56 : f32 to vector<1x256xf32>
      %69 = arith.mulf %68, %65 : vector<1x256xf32>
      %70 = arith.select %67, %65, %69 : vector<1x256xi1>, vector<1x256xf32>
      %71 = arith.truncf %70 : vector<1x256xf32> to vector<1x256xbf16>
      %c0_57 = arith.constant 0 : index
      %c0_58 = arith.constant 0 : index
      %72 = vector.load %arg16[%c0_57, %c0_58] : memref<256x67xbf16, #tpu.memory_space<vmem>>, vector<256x67xbf16>
      %cst_59 = arith.constant dense<0.000000e+00> : vector<1x67xf32>
      %73 = tpu.matmul %71, %72, %cst_59 {dimension_numbers = #tpu.dot_dimension_numbers<[1], [0], [0], [1], [0, 0, 1, 1], [], []>} : vector<1x256xbf16>, vector<256x67xbf16>, vector<1x67xf32> -> vector<1x67xf32>
      %c0_60 = arith.constant 0 : index
      %c0_61 = arith.constant 0 : index
      %74 = vector.load %arg17[%c0_60, %c0_61] : memref<1x67xf32, #tpu.memory_space<vmem>>, vector<1x67xf32>
      %75 = arith.addf %73, %74 : vector<1x67xf32>
      %c0_62 = arith.constant 0 : index
      %c0_63 = arith.constant 0 : index
      %c0_64 = arith.constant 0 : index
      %76 = vector.load %arg18[%c0_62, %c0_63, %c0_64] : memref<1x1x67xf32, #tpu.memory_space<vmem>>, vector<1x1x67xf32>
      %77 = vector.shape_cast %76 : vector<1x1x67xf32> to vector<1x67xf32>
      %78 = vector.shape_cast %75 : vector<1x67xf32> to vector<1x1x67xf32>
      tpu.vector_store %arg18[%c0_62, %c0_63, %c0_64], %78 {strides = array<i32>} : memref<1x1x67xf32, #tpu.memory_space<vmem>>, vector<1x1x67xf32>,
    } else {
    }
    return
  }
  func.func @transform_0(%arg0: i32, %arg1: i32) -> (i32, i32, i32) {
    %c0_i32 = arith.constant 0 : i32
    %c0_i32_0 = arith.constant 0 : i32
    return %arg0, %arg1, %c0_i32 : i32, i32, i32
  }
  func.func @transform_1(%arg0: i32, %arg1: i32) -> (i32, i32, i32) {
    %c0_i32 = arith.constant 0 : i32
    %c0_i32_0 = arith.constant 0 : i32
    return %arg0, %arg1, %c0_i32 : i32, i32, i32
  }
  func.func @transform_2(%arg0: i32, %arg1: i32) -> (i32, i32, i32) {
    %c0_i32 = arith.constant 0 : i32
    %c0_i32_0 = arith.constant 0 : i32
    return %arg0, %arg1, %c0_i32 : i32, i32, i32
  }
  func.func @transform_3(%arg0: i32, %arg1: i32) -> (i32, i32, i32) {
    %c0_i32 = arith.constant 0 : i32
    %c0_i32_0 = arith.constant 0 : i32
    return %arg0, %arg1, %c0_i32 : i32, i32, i32
  }
  func.func @transform_4(%arg0: i32, %arg1: i32) -> (i32, i32) {
    %c0_i32 = arith.constant 0 : i32
    %c0_i32_0 = arith.constant 0 : i32
    %c0_i32_1 = arith.constant 0 : i32
    return %c0_i32, %c0_i32_0 : i32, i32
  }
  func.func @transform_5(%arg0: i32, %arg1: i32) -> (i32, i32) {
    %c0_i32 = arith.constant 0 : i32
    %c0_i32_0 = arith.constant 0 : i32
    %c0_i32_1 = arith.constant 0 : i32
    return %c0_i32, %c0_i32_0 : i32, i32
  }
  func.func @transform_6(%arg0: i32, %arg1: i32) -> (i32, i32) {
    %c0_i32 = arith.constant 0 : i32
    %c0_i32_0 = arith.constant 0 : i32
    %c0_i32_1 = arith.constant 0 : i32
    return %c0_i32, %c0_i32_0 : i32, i32
  }
  func.func @transform_7(%arg0: i32, %arg1: i32) -> (i32, i32) {
    %c0_i32 = arith.constant 0 : i32
    %c0_i32_0 = arith.constant 0 : i32
    %c0_i32_1 = arith.constant 0 : i32
    return %c0_i32, %c0_i32_0 : i32, i32
  }
  func.func @transform_8(%arg0: i32, %arg1: i32) -> (i32, i32) {
    %c0_i32 = arith.constant 0 : i32
    %c0_i32_0 = arith.constant 0 : i32
    %c0_i32_1 = arith.constant 0 : i32
    return %c0_i32, %c0_i32_0 : i32, i32
  }
  func.func @transform_9(%arg0: i32, %arg1: i32) -> (i32, i32) {
    %c0_i32 = arith.constant 0 : i32
    %c0_i32_0 = arith.constant 0 : i32
    %c0_i32_1 = arith.constant 0 : i32
    return %c0_i32, %c0_i32_0 : i32, i32
  }
  func.func @transform_10(%arg0: i32, %arg1: i32) -> (i32, i32) {
    %c0_i32 = arith.constant 0 : i32
    %c0_i32_0 = arith.constant 0 : i32
    %c0_i32_1 = arith.constant 0 : i32
    return %c0_i32, %c0_i32_0 : i32, i32
  }
  func.func @transform_11(%arg0: i32, %arg1: i32) -> (i32, i32) {
    %c0_i32 = arith.constant 0 : i32
    %c0_i32_0 = arith.constant 0 : i32
    %c0_i32_1 = arith.constant 0 : i32
    return %c0_i32, %c0_i32_0 : i32, i32
  }
  func.func @transform_12(%arg0: i32, %arg1: i32) -> (i32, i32) {
    %c0_i32 = arith.constant 0 : i32
    %c0_i32_0 = arith.constant 0 : i32
    %c0_i32_1 = arith.constant 0 : i32
    return %c0_i32, %c0_i32_0 : i32, i32
  }
  func.func @transform_13(%arg0: i32, %arg1: i32) -> (i32, i32) {
    %c0_i32 = arith.constant 0 : i32
    %c0_i32_0 = arith.constant 0 : i32
    %c0_i32_1 = arith.constant 0 : i32
    return %c0_i32, %c0_i32_0 : i32, i32
  }
  func.func @transform_14(%arg0: i32, %arg1: i32) -> (i32, i32) {
    %c0_i32 = arith.constant 0 : i32
    %c0_i32_0 = arith.constant 0 : i32
    %c0_i32_1 = arith.constant 0 : i32
    return %c0_i32, %c0_i32_0 : i32, i32
  }
  func.func @transform_15(%arg0: i32, %arg1: i32) -> (i32, i32) {
    %c0_i32 = arith.constant 0 : i32
    %c0_i32_0 = arith.constant 0 : i32
    %c0_i32_1 = arith.constant 0 : i32
    return %c0_i32, %c0_i32_0 : i32, i32
  }
  func.func @transform_16(%arg0: i32, %arg1: i32) -> (i32, i32, i32) {
    %c0_i32 = arith.constant 0 : i32
    %c0_i32_0 = arith.constant 0 : i32
    %c0_i32_1 = arith.constant 0 : i32
    return %arg0, %c0_i32, %c0_i32_0 : i32, i32, i32
  }
}

</mosaic_0001>

<llo_original>
// kernel: sub.41
$region0: #{sub.41}
  %s0 = inlined_call_operand.vmem [shape: f32[32], index: 0, kind: input, shape index: {}]
  %s1 = inlined_call_operand.vmem [shape: f32[2,16], index: 1, kind: output, shape index: {}]
  $region1: #{sub.41} parent=0
    #allocation0 [shape = 'u8[4096]{0}', space=vmem, size = 0x1000, scoped, tag = 'scoped mem for output reshape']
    #allocation1 [shape = 'u8[4096]{0}', space=vmem, size = 0x1000, scoped, tag = 'scoped mem for input reshape']
    %s3 = ssub.s32 2, 1
    %v4 = vld [vmem:[%s0] sm:%s3]
    %5 = vst [vmem:[#allocation1] sm:%s3] %v4
    %v6 = vld [vmem:[#allocation1] sm:$0x1]
    %vm7 = vcmask 130048
    %8 = vst.msk [vmem:[#allocation0] sm:$0x1] %vm7, %v6
    %v9 = vld [vmem:[#allocation1] sm:$0x1]
    %10 = vrot.lane.b32.xlu0 %v9, 112
    %v11 = vpop.permute.xlu0 %10
    %vm12 = vcmask 130048
    %s13 = scalar_lea.vmem [#allocation0], 1
    %14 = vst.msk [vmem:[%s13] sm:$0x1] %vm12, %v11
    %s16 = ssub.s32 4, 1
    %v17 = vld [vmem:[#allocation0] sm:%s16]
    %s19 = ssub.s32 4, 1
    %20 = vst [vmem:[%s1] sm:%s19] %v17

// kernel: dgcnn_forward.4
$region0: #{dgcnn_forward.4}
  #allocation0 [shape = 'u32[]', space=smem, size = 0x4, offset = 0x4, fixed_abs, tag = 'smem constant byte address 0x4 - core index']
  #allocation1 [shape = 'u32[72,128]{1,0:T(1,128)}', space=vmem, size = 0x9000, scoped, tag = 'internal scratch']
  %s0 = inlined_call_operand.vmem [shape: bf16[4,32,64], index: 0, kind: input, shape index: {}]
  %s1 = inlined_call_operand.vmem [shape: bf16[32,64], index: 1, kind: input, shape index: {}]
  %s2 = inlined_call_operand.vmem [shape: bf16[64,64], index: 2, kind: input, shape index: {}]
  %s3 = inlined_call_operand.vmem [shape: bf16[64,64], index: 3, kind: input, shape index: {}]
  %s4 = inlined_call_operand.vmem [shape: f32[1,64], index: 4, kind: input, shape index: {}]
  %s5 = inlined_call_operand.vmem [shape: bf16[32,64], index: 5, kind: output, shape index: {}]
  %s6 = sld [smem:[#allocation0]]
  $region30: #{dgcnn_forward.4} parent=0
    _
  %s8 = ssub.s32 1, %s6
  %s9 = scalar_select 0, %s8, %s6
  // Predicated region
  $region2: #{dgcnn_forward.4} parent=0 // pred_check
    _
  $region3: #{dgcnn_forward.4} parent=0 // pred_check_branch
    %11 = sbr.rel (0) target = $region5
  $region4: #{dgcnn_forward.4} parent=0 // pred_region
    _
  $region5: #{dgcnn_forward.4} parent=0 // pred_fallthru
    _
  // Predicated region
  $region6: #{dgcnn_forward.4} parent=0 // pred_check
    _
  $region7: #{dgcnn_forward.4} parent=0 // pred_check_branch
    %13 = sbr.rel (0) target = $region9
  $region8: #{dgcnn_forward.4} parent=0 // pred_region
    _
  $region9: #{dgcnn_forward.4} parent=0 // pred_fallthru
    _
  // Predicated region
  $region10: #{dgcnn_forward.4} parent=0 // pred_check
    _
  $region11: #{dgcnn_forward.4} parent=0 // pred_check_branch
    %15 = sbr.rel (0) target = $region13
  $region12: #{dgcnn_forward.4} parent=0 // pred_region
    _
  $region13: #{dgcnn_forward.4} parent=0 // pred_fallthru
    _
  // Predicated region
  $region14: #{dgcnn_forward.4} parent=0 // pred_check
    _
  $region15: #{dgcnn_forward.4} parent=0 // pred_check_branch
    %17 = sbr.rel (0) target = $region17
  $region16: #{dgcnn_forward.4} parent=0 // pred_region
    _
  $region17: #{dgcnn_forward.4} parent=0 // pred_fallthru
    _
  // Predicated region
  $region18: #{dgcnn_forward.4} parent=0 // pred_check
    _
  $region19: #{dgcnn_forward.4} parent=0 // pred_check_branch
    %19 = sbr.rel (0) target = $region21
  $region20: #{dgcnn_forward.4} parent=0 // pred_region
    _
  $region21: #{dgcnn_forward.4} parent=0 // pred_fallthru
    _
  %v21 = vld [vmem:[%s2] sm:$0xf]
  %v22 = vld [vmem:[%s2 + $0x4] sm:$0xf]
  %v23 = vld [vmem:[%s2 + $0x8] sm:$0xf]
  %v24 = vld [vmem:[%s2 + $0xc] sm:$0xf]
  %v25 = vld [vmem:[%s2 + $0x10] sm:$0xf]
  %v26 = vld [vmem:[%s2 + $0x14] sm:$0xf]
  %v27 = vld [vmem:[%s2 + $0x18] sm:$0xf]
  %v28 = vld [vmem:[%s2 + $0x1c] sm:$0xf]
  %v29 = vld [vmem:[%s1] sm:$0xf]
  %v30 = vld [vmem:[%s1 + $0x4] sm:$0xf]
  %v31 = vld [vmem:[%s1 + $0x8] sm:$0xf]
  %v32 = vld [vmem:[%s1 + $0xc] sm:$0xf]
  %v33 = vld [vmem:[%s3] sm:$0xf]
  %v34 = vld [vmem:[%s3 + $0x4] sm:$0xf]
  %v35 = vld [vmem:[%s3 + $0x8] sm:$0xf]
  %v36 = vld [vmem:[%s3 + $0xc] sm:$0xf]
  %v37 = vld [vmem:[%s3 + $0x10] sm:$0xf]
  %v38 = vld [vmem:[%s3 + $0x14] sm:$0xf]
  %v39 = vld [vmem:[%s3 + $0x18] sm:$0xf]
  %v40 = vld [vmem:[%s3 + $0x1c] sm:$0xf]
  %v45 = vunpack.c.l.b16 %v29
  %v46 = vunpack.c.l.b16 %v30
  %v47 = vunpack.c.l.b16 %v31
  %v48 = vunpack.c.l.b16 %v32
  %v49 = vpack.c.b16 %v46, %v45
  %v50 = vpack.c.b16 %v48, %v47
  %v59 = vunpack.c.l.b16 %v33
  %v60 = vunpack.c.l.b16 %v34
  %v61 = vunpack.c.l.b16 %v35
  %v62 = vunpack.c.l.b16 %v36
  %v63 = vunpack.c.l.b16 %v37
  %v64 = vunpack.c.l.b16 %v38
  %v65 = vunpack.c.l.b16 %v39
  %v66 = vunpack.c.l.b16 %v40
  %v67 = vpack.c.b16 %v60, %v59
  %v68 = vpack.c.b16 %v62, %v61
  %v69 = vpack.c.b16 %v64, %v63
  %v70 = vpack.c.b16 %v66, %v65
  %vm75 = vcmask 523264
  %v77 = vsel %vm75, %v49, 0
  %v80 = vsel %vm75, %v50, 0
  %82 = vmatpush.bf16.msra.mxu0 0
  %83 = vmatpush.bf16.msra.mxu0 0
  %84 = vmatpush.bf16.msra.mxu0 0
  %85 = vmatpush.bf16.msra.mxu0 0
  %86 = vmatpush.bf16.msra.mxu0 %v70
  %87 = vmatpush.bf16.msra.mxu0 %v69
  %88 = vmatpush.bf16.msra.mxu0 %v68
  %89 = vmatpush.bf16.msra.mxu0 %v67
  %90 = vmatmul.bf16.gmra.mxu0 %v77
  %v91 = vpop.f32.mrf.mxu0
  %v92 = vadd.f32 0.0, %v91
  %v93 = vpop.f32.mrf.mxu0
  %v94 = vadd.f32 0.0, %v93
  %95 = vmatmul.bf16.gmra.mxu0 %v80
  %v96 = vpop.f32.mrf.mxu0
  %v97 = vadd.f32 0.0, %v96
  %v98 = vpop.f32.mrf.mxu0
  %v99 = vadd.f32 0.0, %v98
  %100 = vdwg.mxu0
  %v101 = vld [vmem:[%s0] sm:$0xf]
  %v102 = vld [vmem:[%s0 + $0x4] sm:$0xf]
  %v103 = vld [vmem:[%s0 + $0x8] sm:$0xf]
  %v104 = vld [vmem:[%s0 + $0xc] sm:$0xf]
  %v105 = vld [vmem:[%s0 + $0x10] sm:$0xf]
  %v106 = vld [vmem:[%s0 + $0x14] sm:$0xf]
  %v107 = vld [vmem:[%s0 + $0x18] sm:$0xf]
  %v108 = vld [vmem:[%s0 + $0x1c] sm:$0xf]
  %v109 = vld [vmem:[%s0 + $0x20] sm:$0xf]
  %v110 = vld [vmem:[%s0 + $0x24] sm:$0xf]
  %v111 = vld [vmem:[%s0 + $0x28] sm:$0xf]
  %v112 = vld [vmem:[%s0 + $0x2c] sm:$0xf]
  %v113 = vld [vmem:[%s0 + $0x30] sm:$0xf]
  %v114 = vld [vmem:[%s0 + $0x34] sm:$0xf]
  %v115 = vld [vmem:[%s0 + $0x38] sm:$0xf]
  %v116 = vld [vmem:[%s0 + $0x3c] sm:$0xf]
  %v133 = vunpack.c.l.b16 %v101
  %v134 = vunpack.c.l.b16 %v102
  %v135 = vunpack.c.l.b16 %v103
  %v136 = vunpack.c.l.b16 %v104
  %v137 = vunpack.c.l.b16 %v105
  %v138 = vunpack.c.l.b16 %v106
  %v139 = vunpack.c.l.b16 %v107
  %v140 = vunpack.c.l.b16 %v108
  %v141 = vunpack.c.l.b16 %v109
  %v142 = vunpack.c.l.b16 %v110
  %v143 = vunpack.c.l.b16 %v111
  %v144 = vunpack.c.l.b16 %v112
  %v145 = vunpack.c.l.b16 %v113
  %v146 = vunpack.c.l.b16 %v114
  %v147 = vunpack.c.l.b16 %v115
  %v148 = vunpack.c.l.b16 %v116
  %v149 = vpack.c.b16 %v134, %v133
  %v150 = vpack.c.b16 %v136, %v135
  %v151 = vpack.c.b16 %v138, %v137
  %v152 = vpack.c.b16 %v140, %v139
  %v153 = vpack.c.b16 %v142, %v141
  %v154 = vpack.c.b16 %v144, %v143
  %v155 = vpack.c.b16 %v146, %v145
  %v156 = vpack.c.b16 %v148, %v147
  %v165 = vunpack.c.l.b16 %v21
  %v166 = vunpack.c.l.b16 %v22
  %v167 = vunpack.c.l.b16 %v23
  %v168 = vunpack.c.l.b16 %v24
  %v169 = vunpack.c.l.b16 %v25
  %v170 = vunpack.c.l.b16 %v26
  %v171 = vunpack.c.l.b16 %v27
  %v172 = vunpack.c.l.b16 %v28
  %v173 = vpack.c.b16 %v166, %v165
  %v174 = vpack.c.b16 %v168, %v167
  %v175 = vpack.c.b16 %v170, %v169
  %v176 = vpack.c.b16 %v172, %v171
  %v182 = vsel %vm75, %v149, 0
  %v185 = vsel %vm75, %v150, 0
  %v188 = vsel %vm75, %v151, 0
  %v191 = vsel %vm75, %v152, 0
  %v194 = vsel %vm75, %v153, 0
  %v197 = vsel %vm75, %v154, 0
  %v200 = vsel %vm75, %v155, 0
  %v203 = vsel %vm75, %v156, 0
  %205 = vmatpush.bf16.msra.mxu0 0
  %206 = vmatpush.bf16.msra.mxu0 0
  %207 = vmatpush.bf16.msra.mxu0 0
  %208 = vmatpush.bf16.msra.mxu0 0
  %209 = vmatpush.bf16.msra.mxu0 %v176
  %210 = vmatpush.bf16.msra.mxu0 %v175
  %211 = vmatpush.bf16.msra.mxu0 %v174
  %212 = vmatpush.bf16.msra.mxu0 %v173
  %213 = vmatmul.bf16.gmra.mxu0 %v182
  %v214 = vpop.f32.mrf.mxu0
  %v215 = vadd.f32 0.0, %v214
  %v216 = vpop.f32.mrf.mxu0
  %v217 = vadd.f32 0.0, %v216
  %218 = vmatmul.bf16.gmra.mxu0 %v185
  %v219 = vpop.f32.mrf.mxu0
  %v220 = vadd.f32 0.0, %v219
  %v221 = vpop.f32.mrf.mxu0
  %v222 = vadd.f32 0.0, %v221
  %223 = vmatmul.bf16.gmra.mxu0 %v188
  %v224 = vpop.f32.mrf.mxu0
  %v225 = vadd.f32 0.0, %v224
  %v226 = vpop.f32.mrf.mxu0
  %v227 = vadd.f32 0.0, %v226
  %228 = vmatmul.bf16.gmra.mxu0 %v191
  %v229 = vpop.f32.mrf.mxu0
  %v230 = vadd.f32 0.0, %v229
  %v231 = vpop.f32.mrf.mxu0
  %v232 = vadd.f32 0.0, %v231
  %233 = vmatmul.bf16.gmra.mxu0 %v194
  %v234 = vpop.f32.mrf.mxu0
  %v235 = vadd.f32 0.0, %v234
  %v236 = vpop.f32.mrf.mxu0
  %v237 = vadd.f32 0.0, %v236
  %238 = vmatmul.bf16.gmra.mxu0 %v197
  %v239 = vpop.f32.mrf.mxu0
  %v240 = vadd.f32 0.0, %v239
  %v241 = vpop.f32.mrf.mxu0
  %v242 = vadd.f32 0.0, %v241
  %243 = vmatmul.bf16.gmra.mxu0 %v200
  %v244 = vpop.f32.mrf.mxu0
  %v245 = vadd.f32 0.0, %v244
  %v246 = vpop.f32.mrf.mxu0
  %v247 = vadd.f32 0.0, %v246
  %248 = vmatmul.bf16.gmra.mxu0 %v203
  %v249 = vpop.f32.mrf.mxu0
  %v250 = vadd.f32 0.0, %v249
  %v251 = vpop.f32.mrf.mxu0
  %v252 = vadd.f32 0.0, %v251
  %253 = vdwg.mxu0
  %v254 = vsel %vm75, %v215, -inf
  %v255 = vsel %vm75, %v225, -inf
  %v256 = vmax.f32 %v254, %v255
  %v257 = vsel %vm75, %v235, -inf
  %v258 = vmax.f32 %v256, %v257
  %v259 = vsel %vm75, %v245, -inf
  %v260 = vmax.f32 %v258, %v259
  %v261 = vsel %vm75, %v217, -inf
  %v262 = vsel %vm75, %v227, -inf
  %v263 = vmax.f32 %v261, %v262
  %v264 = vsel %vm75, %v237, -inf
  %v265 = vmax.f32 %v263, %v264
  %v266 = vsel %vm75, %v247, -inf
  %v267 = vmax.f32 %v265, %v266
  %v268 = vsel %vm75, %v220, -inf
  %v269 = vsel %vm75, %v230, -inf
  %v270 = vmax.f32 %v268, %v269
  %v271 = vsel %vm75, %v240, -inf
  %v272 = vmax.f32 %v270, %v271
  %v273 = vsel %vm75, %v250, -inf
  %v274 = vmax.f32 %v272, %v273
  %v275 = vsel %vm75, %v222, -inf
  %v276 = vsel %vm75, %v232, -inf
  %v277 = vmax.f32 %v275, %v276
  %v278 = vsel %vm75, %v242, -inf
  %v279 = vmax.f32 %v277, %v278
  %v280 = vsel %vm75, %v252, -inf
  %v281 = vmax.f32 %v279, %v280
  %v282 = vadd.f32 %v260, %v92
  %v283 = vadd.f32 %v267, %v94
  %v284 = vadd.f32 %v274, %v97
  %v285 = vadd.f32 %v281, %v99
  %v286 = vld [vmem:[%s4] sm:$0x1]
  %v288 = vperm.slane %v286, 0
  %v290 = vadd.f32 %v282, %v288
  %v291 = vadd.f32 %v283, %v288
  %v292 = vadd.f32 %v284, %v288
  %v293 = vadd.f32 %v285, %v288
  %vm294 = vcmp.gt.f32.partialorder %v290, 0.0
  %vm295 = vcmp.gt.f32.partialorder %v291, 0.0
  %vm296 = vcmp.gt.f32.partialorder %v292, 0.0
  %vm297 = vcmp.gt.f32.partialorder %v293, 0.0
  %v298 = vmul.f32 %v290, 0.2
  %v299 = vmul.f32 %v291, 0.2
  %v300 = vmul.f32 %v292, 0.2
  %v301 = vmul.f32 %v293, 0.2
  %v302 = vsel %vm294, %v290, %v298
  %v303 = vsel %vm295, %v291, %v299
  %v304 = vsel %vm296, %v292, %v300
  %v305 = vsel %vm297, %v293, %v301
  %v306 = vpack.c.bf16 %v302, %v302
  %v307 = vpack.c.bf16 %v303, %v303
  %v308 = vpack.c.bf16 %v304, %v304
  %v309 = vpack.c.bf16 %v305, %v305
  %vm310 = vcmask 519168
  %311 = vst.msk [vmem:[%s5] sm:$0xf] %vm310, %v306
  %312 = vst.msk [vmem:[%s5 + $0x4] sm:$0xf] %vm310, %v307
  %313 = vst.msk [vmem:[%s5 + $0x8] sm:$0xf] %vm310, %v308
  %314 = vst.msk [vmem:[%s5 + $0xc] sm:$0xf] %vm310, %v309
  // Predicated region
  $region22: #{dgcnn_forward.4} parent=0 // pred_check
    _
  $region23: #{dgcnn_forward.4} parent=0 // pred_check_branch
    %316 = sbr.rel (0) target = $region25
  $region24: #{dgcnn_forward.4} parent=0 // pred_region
    _
  $region25: #{dgcnn_forward.4} parent=0 // pred_fallthru
    _
  // Predicated region
  $region26: #{dgcnn_forward.4} parent=0 // pred_check
    _
  $region27: #{dgcnn_forward.4} parent=0 // pred_check_branch
    %318 = sbr.rel (0) target = $region29
  $region28: #{dgcnn_forward.4} parent=0 // pred_region
    _
  $region29: #{dgcnn_forward.4} parent=0 // pred_fallthru
    _

// kernel: dgcnn_forward.5
$region0: #{dgcnn_forward.5}
  #allocation0 [shape = 'u32[]', space=smem, size = 0x4, offset = 0x4, fixed_abs, tag = 'smem constant byte address 0x4 - core index']
  #allocation1 [shape = 'u32[72,128]{1,0:T(1,128)}', space=vmem, size = 0x9000, scoped, tag = 'internal scratch']
  %s0 = inlined_call_operand.vmem [shape: bf16[4,32,64], index: 0, kind: input, shape index: {}]
  %s1 = inlined_call_operand.vmem [shape: bf16[32,64], index: 1, kind: input, shape index: {}]
  %s2 = inlined_call_operand.vmem [shape: bf16[64,128], index: 2, kind: input, shape index: {}]
  %s3 = inlined_call_operand.vmem [shape: bf16[64,128], index: 3, kind: input, shape index: {}]
  %s4 = inlined_call_operand.vmem [shape: f32[1,128], index: 4, kind: input, shape index: {}]
  %s5 = inlined_call_operand.vmem [shape: bf16[32,128], index: 5, kind: output, shape index: {}]
  %s6 = sld [smem:[#allocation0]]
  $region30: #{dgcnn_forward.5} parent=0
    _
  %s8 = ssub.s32 1, %s6
  %s9 = scalar_select 0, %s8, %s6
  // Predicated region
  $region2: #{dgcnn_forward.5} parent=0 // pred_check
    _
  $region3: #{dgcnn_forward.5} parent=0 // pred_check_branch
    %11 = sbr.rel (0) target = $region5
  $region4: #{dgcnn_forward.5} parent=0 // pred_region
    _
  $region5: #{dgcnn_forward.5} parent=0 // pred_fallthru
    _
  // Predicated region
  $region6: #{dgcnn_forward.5} parent=0 // pred_check
    _
  $region7: #{dgcnn_forward.5} parent=0 // pred_check_branch
    %13 = sbr.rel (0) target = $region9
  $region8: #{dgcnn_forward.5} parent=0 // pred_region
    _
  $region9: #{dgcnn_forward.5} parent=0 // pred_fallthru
    _
  // Predicated region
  $region10: #{dgcnn_forward.5} parent=0 // pred_check
    _
  $region11: #{dgcnn_forward.5} parent=0 // pred_check_branch
    %15 = sbr.rel (0) target = $region13
  $region12: #{dgcnn_forward.5} parent=0 // pred_region
    _
  $region13: #{dgcnn_forward.5} parent=0 // pred_fallthru
    _
  // Predicated region
  $region14: #{dgcnn_forward.5} parent=0 // pred_check
    _
  $region15: #{dgcnn_forward.5} parent=0 // pred_check_branch
    %17 = sbr.rel (0) target = $region17
  $region16: #{dgcnn_forward.5} parent=0 // pred_region
    _
  $region17: #{dgcnn_forward.5} parent=0 // pred_fallthru
    _
  // Predicated region
  $region18: #{dgcnn_forward.5} parent=0 // pred_check
    _
  $region19: #{dgcnn_forward.5} parent=0 // pred_check_branch
    %19 = sbr.rel (0) target = $region21
  $region20: #{dgcnn_forward.5} parent=0 // pred_region
    _
  $region21: #{dgcnn_forward.5} parent=0 // pred_fallthru
    _
  %v21 = vld [vmem:[%s2] sm:$0xf]
  %v22 = vld [vmem:[%s2 + $0x4] sm:$0xf]
  %v23 = vld [vmem:[%s2 + $0x8] sm:$0xf]
  %v24 = vld [vmem:[%s2 + $0xc] sm:$0xf]
  %v25 = vld [vmem:[%s2 + $0x10] sm:$0xf]
  %v26 = vld [vmem:[%s2 + $0x14] sm:$0xf]
  %v27 = vld [vmem:[%s2 + $0x18] sm:$0xf]
  %v28 = vld [vmem:[%s2 + $0x1c] sm:$0xf]
  %v29 = vld [vmem:[%s1] sm:$0xf]
  %v30 = vld [vmem:[%s1 + $0x4] sm:$0xf]
  %v31 = vld [vmem:[%s1 + $0x8] sm:$0xf]
  %v32 = vld [vmem:[%s1 + $0xc] sm:$0xf]
  %v33 = vld [vmem:[%s3] sm:$0xf]
  %v34 = vld [vmem:[%s3 + $0x4] sm:$0xf]
  %v35 = vld [vmem:[%s3 + $0x8] sm:$0xf]
  %v36 = vld [vmem:[%s3 + $0xc] sm:$0xf]
  %v37 = vld [vmem:[%s3 + $0x10] sm:$0xf]
  %v38 = vld [vmem:[%s3 + $0x14] sm:$0xf]
  %v39 = vld [vmem:[%s3 + $0x18] sm:$0xf]
  %v40 = vld [vmem:[%s3 + $0x1c] sm:$0xf]
  %v45 = vunpack.c.l.b16 %v29
  %v46 = vunpack.c.l.b16 %v30
  %v47 = vunpack.c.l.b16 %v31
  %v48 = vunpack.c.l.b16 %v32
  %v49 = vpack.c.b16 %v46, %v45
  %v50 = vpack.c.b16 %v48, %v47
  %v59 = vunpack.c.l.b16 %v33
  %v60 = vunpack.c.l.b16 %v34
  %v61 = vunpack.c.l.b16 %v35
  %v62 = vunpack.c.l.b16 %v36
  %v63 = vunpack.c.l.b16 %v37
  %v64 = vunpack.c.l.b16 %v38
  %v65 = vunpack.c.l.b16 %v39
  %v66 = vunpack.c.l.b16 %v40
  %v67 = vpack.c.b16 %v60, %v59
  %v68 = vpack.c.b16 %v62, %v61
  %v69 = vpack.c.b16 %v64, %v63
  %v70 = vpack.c.b16 %v66, %v65
  %vm75 = vcmask 523264
  %v77 = vsel %vm75, %v49, 0
  %v80 = vsel %vm75, %v50, 0
  %82 = vmatpush.bf16.msra.mxu0 0
  %83 = vmatpush.bf16.msra.mxu0 0
  %84 = vmatpush.bf16.msra.mxu0 0
  %85 = vmatpush.bf16.msra.mxu0 0
  %86 = vmatpush.bf16.msra.mxu0 %v70
  %87 = vmatpush.bf16.msra.mxu0 %v69
  %88 = vmatpush.bf16.msra.mxu0 %v68
  %89 = vmatpush.bf16.msra.mxu0 %v67
  %90 = vmatmul.bf16.gmra.mxu0 %v77
  %v91 = vpop.f32.mrf.mxu0
  %v92 = vadd.f32 0.0, %v91
  %v93 = vpop.f32.mrf.mxu0
  %v94 = vadd.f32 0.0, %v93
  %95 = vmatmul.bf16.gmra.mxu0 %v80
  %v96 = vpop.f32.mrf.mxu0
  %v97 = vadd.f32 0.0, %v96
  %v98 = vpop.f32.mrf.mxu0
  %v99 = vadd.f32 0.0, %v98
  %100 = vdwg.mxu0
  %v101 = vld [vmem:[%s0] sm:$0xf]
  %v102 = vld [vmem:[%s0 + $0x4] sm:$0xf]
  %v103 = vld [vmem:[%s0 + $0x8] sm:$0xf]
  %v104 = vld [vmem:[%s0 + $0xc] sm:$0xf]
  %v105 = vld [vmem:[%s0 + $0x10] sm:$0xf]
  %v106 = vld [vmem:[%s0 + $0x14] sm:$0xf]
  %v107 = vld [vmem:[%s0 + $0x18] sm:$0xf]
  %v108 = vld [vmem:[%s0 + $0x1c] sm:$0xf]
  %v109 = vld [vmem:[%s0 + $0x20] sm:$0xf]
  %v110 = vld [vmem:[%s0 + $0x24] sm:$0xf]
  %v111 = vld [vmem:[%s0 + $0x28] sm:$0xf]
  %v112 = vld [vmem:[%s0 + $0x2c] sm:$0xf]
  %v113 = vld [vmem:[%s0 + $0x30] sm:$0xf]
  %v114 = vld [vmem:[%s0 + $0x34] sm:$0xf]
  %v115 = vld [vmem:[%s0 + $0x38] sm:$0xf]
  %v116 = vld [vmem:[%s0 + $0x3c] sm:$0xf]
  %v133 = vunpack.c.l.b16 %v101
  %v134 = vunpack.c.l.b16 %v102
  %v135 = vunpack.c.l.b16 %v103
  %v136 = vunpack.c.l.b16 %v104
  %v137 = vunpack.c.l.b16 %v105
  %v138 = vunpack.c.l.b16 %v106
  %v139 = vunpack.c.l.b16 %v107
  %v140 = vunpack.c.l.b16 %v108
  %v141 = vunpack.c.l.b16 %v109
  %v142 = vunpack.c.l.b16 %v110
  %v143 = vunpack.c.l.b16 %v111
  %v144 = vunpack.c.l.b16 %v112
  %v145 = vunpack.c.l.b16 %v113
  %v146 = vunpack.c.l.b16 %v114
  %v147 = vunpack.c.l.b16 %v115
  %v148 = vunpack.c.l.b16 %v116
  %v149 = vpack.c.b16 %v134, %v133
  %v150 = vpack.c.b16 %v136, %v135
  %v151 = vpack.c.b16 %v138, %v137
  %v152 = vpack.c.b16 %v140, %v139
  %v153 = vpack.c.b16 %v142, %v141
  %v154 = vpack.c.b16 %v144, %v143
  %v155 = vpack.c.b16 %v146, %v145
  %v156 = vpack.c.b16 %v148, %v147
  %v165 = vunpack.c.l.b16 %v21
  %v166 = vunpack.c.l.b16 %v22
  %v167 = vunpack.c.l.b16 %v23
  %v168 = vunpack.c.l.b16 %v24
  %v169 = vunpack.c.l.b16 %v25
  %v170 = vunpack.c.l.b16 %v26
  %v171 = vunpack.c.l.b16 %v27
  %v172 = vunpack.c.l.b16 %v28
  %v173 = vpack.c.b16 %v166, %v165
  %v174 = vpack.c.b16 %v168, %v167
  %v175 = vpack.c.b16 %v170, %v169
  %v176 = vpack.c.b16 %v172, %v171
  %v182 = vsel %vm75, %v149, 0
  %v185 = vsel %vm75, %v150, 0
  %v188 = vsel %vm75, %v151, 0
  %v191 = vsel %vm75, %v152, 0
  %v194 = vsel %vm75, %v153, 0
  %v197 = vsel %vm75, %v154, 0
  %v200 = vsel %vm75, %v155, 0
  %v203 = vsel %vm75, %v156, 0
  %205 = vmatpush.bf16.msra.mxu0 0
  %206 = vmatpush.bf16.msra.mxu0 0
  %207 = vmatpush.bf16.msra.mxu0 0
  %208 = vmatpush.bf16.msra.mxu0 0
  %209 = vmatpush.bf16.msra.mxu0 %v176
  %210 = vmatpush.bf16.msra.mxu0 %v175
  %211 = vmatpush.bf16.msra.mxu0 %v174
  %212 = vmatpush.bf16.msra.mxu0 %v173
  %213 = vmatmul.bf16.gmra.mxu0 %v182
  %v214 = vpop.f32.mrf.mxu0
  %v215 = vadd.f32 0.0, %v214
  %v216 = vpop.f32.mrf.mxu0
  %v217 = vadd.f32 0.0, %v216
  %218 = vmatmul.bf16.gmra.mxu0 %v185
  %v219 = vpop.f32.mrf.mxu0
  %v220 = vadd.f32 0.0, %v219
  %v221 = vpop.f32.mrf.mxu0
  %v222 = vadd.f32 0.0, %v221
  %223 = vmatmul.bf16.gmra.mxu0 %v188
  %v224 = vpop.f32.mrf.mxu0
  %v225 = vadd.f32 0.0, %v224
  %v226 = vpop.f32.mrf.mxu0
  %v227 = vadd.f32 0.0, %v226
  %228 = vmatmul.bf16.gmra.mxu0 %v191
  %v229 = vpop.f32.mrf.mxu0
  %v230 = vadd.f32 0.0, %v229
  %v231 = vpop.f32.mrf.mxu0
  %v232 = vadd.f32 0.0, %v231
  %233 = vmatmul.bf16.gmra.mxu0 %v194
  %v234 = vpop.f32.mrf.mxu0
  %v235 = vadd.f32 0.0, %v234
  %v236 = vpop.f32.mrf.mxu0
  %v237 = vadd.f32 0.0, %v236
  %238 = vmatmul.bf16.gmra.mxu0 %v197
  %v239 = vpop.f32.mrf.mxu0
  %v240 = vadd.f32 0.0, %v239
  %v241 = vpop.f32.mrf.mxu0
  %v242 = vadd.f32 0.0, %v241
  %243 = vmatmul.bf16.gmra.mxu0 %v200
  %v244 = vpop.f32.mrf.mxu0
  %v245 = vadd.f32 0.0, %v244
  %v246 = vpop.f32.mrf.mxu0
  %v247 = vadd.f32 0.0, %v246
  %248 = vmatmul.bf16.gmra.mxu0 %v203
  %v249 = vpop.f32.mrf.mxu0
  %v250 = vadd.f32 0.0, %v249
  %v251 = vpop.f32.mrf.mxu0
  %v252 = vadd.f32 0.0, %v251
  %253 = vdwg.mxu0
  %v254 = vmax.f32 %v215, %v225
  %v255 = vmax.f32 %v254, %v235
  %v256 = vmax.f32 %v255, %v245
  %v257 = vmax.f32 %v217, %v227
  %v258 = vmax.f32 %v257, %v237
  %v259 = vmax.f32 %v258, %v247
  %v260 = vmax.f32 %v220, %v230
  %v261 = vmax.f32 %v260, %v240
  %v262 = vmax.f32 %v261, %v250
  %v263 = vmax.f32 %v222, %v232
  %v264 = vmax.f32 %v263, %v242
  %v265 = vmax.f32 %v264, %v252
  %v266 = vadd.f32 %v256, %v92
  %v267 = vadd.f32 %v259, %v94
  %v268 = vadd.f32 %v262, %v97
  %v269 = vadd.f32 %v265, %v99
  %v270 = vld [vmem:[%s4] sm:$0x1]
  %v272 = vperm.slane %v270, 0
  %v274 = vadd.f32 %v266, %v272
  %v275 = vadd.f32 %v267, %v272
  %v276 = vadd.f32 %v268, %v272
  %v277 = vadd.f32 %v269, %v272
  %vm278 = vcmp.gt.f32.partialorder %v274, 0.0
  %vm279 = vcmp.gt.f32.partialorder %v275, 0.0
  %vm280 = vcmp.gt.f32.partialorder %v276, 0.0
  %vm281 = vcmp.gt.f32.partialorder %v277, 0.0
  %v282 = vmul.f32 %v274, 0.2
  %v283 = vmul.f32 %v275, 0.2
  %v284 = vmul.f32 %v276, 0.2
  %v285 = vmul.f32 %v277, 0.2
  %v286 = vsel %vm278, %v274, %v282
  %v287 = vsel %vm279, %v275, %v283
  %v288 = vsel %vm280, %v276, %v284
  %v289 = vsel %vm281, %v277, %v285
  %v290 = vpack.c.bf16 %v286, %v286
  %v291 = vpack.c.bf16 %v287, %v287
  %v292 = vpack.c.bf16 %v288, %v288
  %v293 = vpack.c.bf16 %v289, %v289
  %294 = vst [vmem:[%s5] sm:$0xf] %v290
  %295 = vst [vmem:[%s5 + $0x4] sm:$0xf] %v291
  %296 = vst [vmem:[%s5 + $0x8] sm:$0xf] %v292
  %297 = vst [vmem:[%s5 + $0xc] sm:$0xf] %v293
  // Predicated region
  $region22: #{dgcnn_forward.5} parent=0 // pred_check
    _
  $region23: #{dgcnn_forward.5} parent=0 // pred_check_branch
    %299 = sbr.rel (0) target = $region25
  $region24: #{dgcnn_forward.5} parent=0 // pred_region
    _
  $region25: #{dgcnn_forward.5} parent=0 // pred_fallthru
    _
  // Predicated region
  $region26: #{dgcnn_forward.5} parent=0 // pred_check
    _
  $region27: #{dgcnn_forward.5} parent=0 // pred_check_branch
    %301 = sbr.rel (0) target = $region29
  $region28: #{dgcnn_forward.5} parent=0 // pred_region
    _
  $region29: #{dgcnn_forward.5} parent=0 // pred_fallthru
    _

// kernel: dgcnn_forward.6
$region0: #{dgcnn_forward.6}
  #allocation0 [shape = 'u32[]', space=smem, size = 0x4, offset = 0x4, fixed_abs, tag = 'smem constant byte address 0x4 - core index']
  #allocation1 [shape = 'u32[72,128]{1,0:T(1,128)}', space=vmem, size = 0x9000, scoped, tag = 'internal scratch']
  %s0 = inlined_call_operand.vmem [shape: bf16[4,32,128], index: 0, kind: input, shape index: {}]
  %s1 = inlined_call_operand.vmem [shape: bf16[32,128], index: 1, kind: input, shape index: {}]
  %s2 = inlined_call_operand.vmem [shape: bf16[128,256], index: 2, kind: input, shape index: {}]
  %s3 = inlined_call_operand.vmem [shape: bf16[128,256], index: 3, kind: input, shape index: {}]
  %s4 = inlined_call_operand.vmem [shape: f32[1,256], index: 4, kind: input, shape index: {}]
  %s5 = inlined_call_operand.vmem [shape: bf16[32,256], index: 5, kind: output, shape index: {}]
  %s6 = sld [smem:[#allocation0]]
  $region30: #{dgcnn_forward.6} parent=0
    _
  %s8 = ssub.s32 1, %s6
  %s9 = scalar_select 0, %s8, %s6
  // Predicated region
  $region2: #{dgcnn_forward.6} parent=0 // pred_check
    _
  $region3: #{dgcnn_forward.6} parent=0 // pred_check_branch
    %11 = sbr.rel (0) target = $region5
  $region4: #{dgcnn_forward.6} parent=0 // pred_region
    _
  $region5: #{dgcnn_forward.6} parent=0 // pred_fallthru
    _
  // Predicated region
  $region6: #{dgcnn_forward.6} parent=0 // pred_check
    _
  $region7: #{dgcnn_forward.6} parent=0 // pred_check_branch
    %13 = sbr.rel (0) target = $region9
  $region8: #{dgcnn_forward.6} parent=0 // pred_region
    _
  $region9: #{dgcnn_forward.6} parent=0 // pred_fallthru
    _
  // Predicated region
  $region10: #{dgcnn_forward.6} parent=0 // pred_check
    _
  $region11: #{dgcnn_forward.6} parent=0 // pred_check_branch
    %15 = sbr.rel (0) target = $region13
  $region12: #{dgcnn_forward.6} parent=0 // pred_region
    _
  $region13: #{dgcnn_forward.6} parent=0 // pred_fallthru
    _
  // Predicated region
  $region14: #{dgcnn_forward.6} parent=0 // pred_check
    _
  $region15: #{dgcnn_forward.6} parent=0 // pred_check_branch
    %17 = sbr.rel (0) target = $region17
  $region16: #{dgcnn_forward.6} parent=0 // pred_region
    _
  $region17: #{dgcnn_forward.6} parent=0 // pred_fallthru
    _
  // Predicated region
  $region18: #{dgcnn_forward.6} parent=0 // pred_check
    _
  $region19: #{dgcnn_forward.6} parent=0 // pred_check_branch
    %19 = sbr.rel (0) target = $region21
  $region20: #{dgcnn_forward.6} parent=0 // pred_region
    _
  $region21: #{dgcnn_forward.6} parent=0 // pred_fallthru
    _
  %v20 = vld [vmem:[%s2] sm:$0xff]
  %v21 = vld [vmem:[%s2 + $0x8] sm:$0xff]
  %v22 = vld [vmem:[%s2 + $0x10] sm:$0xff]
  %v23 = vld [vmem:[%s2 + $0x18] sm:$0xff]
  %v24 = vld [vmem:[%s2 + $0x20] sm:$0xff]
  %v25 = vld [vmem:[%s2 + $0x28] sm:$0xff]
  %v26 = vld [vmem:[%s2 + $0x30] sm:$0xff]
  %v27 = vld [vmem:[%s2 + $0x38] sm:$0xff]
  %v28 = vld [vmem:[%s2 + $0x40] sm:$0xff]
  %v29 = vld [vmem:[%s2 + $0x48] sm:$0xff]
  %v30 = vld [vmem:[%s2 + $0x50] sm:$0xff]
  %v31 = vld [vmem:[%s2 + $0x58] sm:$0xff]
  %v32 = vld [vmem:[%s2 + $0x60] sm:$0xff]
  %v33 = vld [vmem:[%s2 + $0x68] sm:$0xff]
  %v34 = vld [vmem:[%s2 + $0x70] sm:$0xff]
  %v35 = vld [vmem:[%s2 + $0x78] sm:$0xff]
  %v36 = vld [vmem:[%s1] sm:$0xf]
  %v37 = vld [vmem:[%s1 + $0x4] sm:$0xf]
  %v38 = vld [vmem:[%s1 + $0x8] sm:$0xf]
  %v39 = vld [vmem:[%s1 + $0xc] sm:$0xf]
  %v40 = vld [vmem:[%s3] sm:$0xff]
  %v41 = vld [vmem:[%s3 + $0x8] sm:$0xff]
  %v42 = vld [vmem:[%s3 + $0x10] sm:$0xff]
  %v43 = vld [vmem:[%s3 + $0x18] sm:$0xff]
  %v44 = vld [vmem:[%s3 + $0x20] sm:$0xff]
  %v45 = vld [vmem:[%s3 + $0x28] sm:$0xff]
  %v46 = vld [vmem:[%s3 + $0x30] sm:$0xff]
  %v47 = vld [vmem:[%s3 + $0x38] sm:$0xff]
  %v48 = vld [vmem:[%s3 + $0x40] sm:$0xff]
  %v49 = vld [vmem:[%s3 + $0x48] sm:$0xff]
  %v50 = vld [vmem:[%s3 + $0x50] sm:$0xff]
  %v51 = vld [vmem:[%s3 + $0x58] sm:$0xff]
  %v52 = vld [vmem:[%s3 + $0x60] sm:$0xff]
  %v53 = vld [vmem:[%s3 + $0x68] sm:$0xff]
  %v54 = vld [vmem:[%s3 + $0x70] sm:$0xff]
  %v55 = vld [vmem:[%s3 + $0x78] sm:$0xff]
  %v60 = vunpack.c.l.b16 %v36
  %v61 = vunpack.c.l.b16 %v37
  %v62 = vunpack.c.l.b16 %v38
  %v63 = vunpack.c.l.b16 %v39
  %v64 = vpack.c.b16 %v61, %v60
  %v65 = vpack.c.b16 %v63, %v62
  %v84 = vunpack.c.l.b16 %v40
  %v85 = vunpack.c.h.b16 %v40
  %v86 = vunpack.c.l.b16 %v41
  %v87 = vunpack.c.h.b16 %v41
  %v88 = vunpack.c.l.b16 %v42
  %v89 = vunpack.c.h.b16 %v42
  %v90 = vunpack.c.l.b16 %v43
  %v91 = vunpack.c.h.b16 %v43
  %v92 = vunpack.c.l.b16 %v44
  %v93 = vunpack.c.h.b16 %v44
  %v94 = vunpack.c.l.b16 %v45
  %v95 = vunpack.c.h.b16 %v45
  %v96 = vunpack.c.l.b16 %v46
  %v97 = vunpack.c.h.b16 %v46
  %v98 = vunpack.c.l.b16 %v47
  %v99 = vunpack.c.h.b16 %v47
  %v100 = vunpack.c.l.b16 %v48
  %v101 = vunpack.c.h.b16 %v48
  %v102 = vunpack.c.l.b16 %v49
  %v103 = vunpack.c.h.b16 %v49
  %v104 = vunpack.c.l.b16 %v50
  %v105 = vunpack.c.h.b16 %v50
  %v106 = vunpack.c.l.b16 %v51
  %v107 = vunpack.c.h.b16 %v51
  %v108 = vunpack.c.l.b16 %v52
  %v109 = vunpack.c.h.b16 %v52
  %v110 = vunpack.c.l.b16 %v53
  %v111 = vunpack.c.h.b16 %v53
  %v112 = vunpack.c.l.b16 %v54
  %v113 = vunpack.c.h.b16 %v54
  %v114 = vunpack.c.l.b16 %v55
  %v115 = vunpack.c.h.b16 %v55
  %v116 = vpack.c.b16 %v86, %v84
  %v117 = vpack.c.b16 %v87, %v85
  %v118 = vpack.c.b16 %v90, %v88
  %v119 = vpack.c.b16 %v91, %v89
  %v120 = vpack.c.b16 %v94, %v92
  %v121 = vpack.c.b16 %v95, %v93
  %v122 = vpack.c.b16 %v98, %v96
  %v123 = vpack.c.b16 %v99, %v97
  %v124 = vpack.c.b16 %v102, %v100
  %v125 = vpack.c.b16 %v103, %v101
  %v126 = vpack.c.b16 %v106, %v104
  %v127 = vpack.c.b16 %v107, %v105
  %v128 = vpack.c.b16 %v110, %v108
  %v129 = vpack.c.b16 %v111, %v109
  %v130 = vpack.c.b16 %v114, %v112
  %v131 = vpack.c.b16 %v115, %v113
  %148 = vmatpush.bf16.msra.mxu0 %v130
  %149 = vmatpush.bf16.msra.mxu0 %v128
  %150 = vmatpush.bf16.msra.mxu0 %v126
  %151 = vmatpush.bf16.msra.mxu0 %v124
  %152 = vmatpush.bf16.msra.mxu0 %v122
  %153 = vmatpush.bf16.msra.mxu0 %v120
  %154 = vmatpush.bf16.msra.mxu0 %v118
  %155 = vmatpush.bf16.msra.mxu0 %v116
  %156 = vmatmul.bf16.gmra.mxu0 %v64
  %v157 = vpop.f32.mrf.mxu0
  %v158 = vadd.f32 0.0, %v157
  %v159 = vpop.f32.mrf.mxu0
  %v160 = vadd.f32 0.0, %v159
  %161 = vmatmul.bf16.gmra.mxu0 %v65
  %v162 = vpop.f32.mrf.mxu0
  %v163 = vadd.f32 0.0, %v162
  %v164 = vpop.f32.mrf.mxu0
  %v165 = vadd.f32 0.0, %v164
  %166 = vdwg.mxu0
  %167 = vmatpush.bf16.msra.mxu0 %v131
  %168 = vmatpush.bf16.msra.mxu0 %v129
  %169 = vmatpush.bf16.msra.mxu0 %v127
  %170 = vmatpush.bf16.msra.mxu0 %v125
  %171 = vmatpush.bf16.msra.mxu0 %v123
  %172 = vmatpush.bf16.msra.mxu0 %v121
  %173 = vmatpush.bf16.msra.mxu0 %v119
  %174 = vmatpush.bf16.msra.mxu0 %v117
  %175 = vmatmul.bf16.gmra.mxu0 %v64
  %v176 = vpop.f32.mrf.mxu0
  %v177 = vadd.f32 0.0, %v176
  %v178 = vpop.f32.mrf.mxu0
  %v179 = vadd.f32 0.0, %v178
  %180 = vmatmul.bf16.gmra.mxu0 %v65
  %v181 = vpop.f32.mrf.mxu0
  %v182 = vadd.f32 0.0, %v181
  %v183 = vpop.f32.mrf.mxu0
  %v184 = vadd.f32 0.0, %v183
  %185 = vdwg.mxu0
  %v186 = vld [vmem:[%s0] sm:$0xf]
  %v187 = vld [vmem:[%s0 + $0x4] sm:$0xf]
  %v188 = vld [vmem:[%s0 + $0x8] sm:$0xf]
  %v189 = vld [vmem:[%s0 + $0xc] sm:$0xf]
  %v190 = vld [vmem:[%s0 + $0x10] sm:$0xf]
  %v191 = vld [vmem:[%s0 + $0x14] sm:$0xf]
  %v192 = vld [vmem:[%s0 + $0x18] sm:$0xf]
  %v193 = vld [vmem:[%s0 + $0x1c] sm:$0xf]
  %v194 = vld [vmem:[%s0 + $0x20] sm:$0xf]
  %v195 = vld [vmem:[%s0 + $0x24] sm:$0xf]
  %v196 = vld [vmem:[%s0 + $0x28] sm:$0xf]
  %v197 = vld [vmem:[%s0 + $0x2c] sm:$0xf]
  %v198 = vld [vmem:[%s0 + $0x30] sm:$0xf]
  %v199 = vld [vmem:[%s0 + $0x34] sm:$0xf]
  %v200 = vld [vmem:[%s0 + $0x38] sm:$0xf]
  %v201 = vld [vmem:[%s0 + $0x3c] sm:$0xf]
  %v218 = vunpack.c.l.b16 %v186
  %v219 = vunpack.c.l.b16 %v187
  %v220 = vunpack.c.l.b16 %v188
  %v221 = vunpack.c.l.b16 %v189
  %v222 = vunpack.c.l.b16 %v190
  %v223 = vunpack.c.l.b16 %v191
  %v224 = vunpack.c.l.b16 %v192
  %v225 = vunpack.c.l.b16 %v193
  %v226 = vunpack.c.l.b16 %v194
  %v227 = vunpack.c.l.b16 %v195
  %v228 = vunpack.c.l.b16 %v196
  %v229 = vunpack.c.l.b16 %v197
  %v230 = vunpack.c.l.b16 %v198
  %v231 = vunpack.c.l.b16 %v199
  %v232 = vunpack.c.l.b16 %v200
  %v233 = vunpack.c.l.b16 %v201
  %v234 = vpack.c.b16 %v219, %v218
  %v235 = vpack.c.b16 %v221, %v220
  %v236 = vpack.c.b16 %v223, %v222
  %v237 = vpack.c.b16 %v225, %v224
  %v238 = vpack.c.b16 %v227, %v226
  %v239 = vpack.c.b16 %v229, %v228
  %v240 = vpack.c.b16 %v231, %v230
  %v241 = vpack.c.b16 %v233, %v232
  %v266 = vunpack.c.l.b16 %v20
  %v267 = vunpack.c.h.b16 %v20
  %v268 = vunpack.c.l.b16 %v21
  %v269 = vunpack.c.h.b16 %v21
  %v270 = vunpack.c.l.b16 %v22
  %v271 = vunpack.c.h.b16 %v22
  %v272 = vunpack.c.l.b16 %v23
  %v273 = vunpack.c.h.b16 %v23
  %v274 = vunpack.c.l.b16 %v24
  %v275 = vunpack.c.h.b16 %v24
  %v276 = vunpack.c.l.b16 %v25
  %v277 = vunpack.c.h.b16 %v25
  %v278 = vunpack.c.l.b16 %v26
  %v279 = vunpack.c.h.b16 %v26
  %v280 = vunpack.c.l.b16 %v27
  %v281 = vunpack.c.h.b16 %v27
  %v282 = vunpack.c.l.b16 %v28
  %v283 = vunpack.c.h.b16 %v28
  %v284 = vunpack.c.l.b16 %v29
  %v285 = vunpack.c.h.b16 %v29
  %v286 = vunpack.c.l.b16 %v30
  %v287 = vunpack.c.h.b16 %v30
  %v288 = vunpack.c.l.b16 %v31
  %v289 = vunpack.c.h.b16 %v31
  %v290 = vunpack.c.l.b16 %v32
  %v291 = vunpack.c.h.b16 %v32
  %v292 = vunpack.c.l.b16 %v33
  %v293 = vunpack.c.h.b16 %v33
  %v294 = vunpack.c.l.b16 %v34
  %v295 = vunpack.c.h.b16 %v34
  %v296 = vunpack.c.l.b16 %v35
  %v297 = vunpack.c.h.b16 %v35
  %v298 = vpack.c.b16 %v268, %v266
  %v299 = vpack.c.b16 %v269, %v267
  %v300 = vpack.c.b16 %v272, %v270
  %v301 = vpack.c.b16 %v273, %v271
  %v302 = vpack.c.b16 %v276, %v274
  %v303 = vpack.c.b16 %v277, %v275
  %v304 = vpack.c.b16 %v280, %v278
  %v305 = vpack.c.b16 %v281, %v279
  %v306 = vpack.c.b16 %v284, %v282
  %v307 = vpack.c.b16 %v285, %v283
  %v308 = vpack.c.b16 %v288, %v286
  %v309 = vpack.c.b16 %v289, %v287
  %v310 = vpack.c.b16 %v292, %v290
  %v311 = vpack.c.b16 %v293, %v291
  %v312 = vpack.c.b16 %v296, %v294
  %v313 = vpack.c.b16 %v297, %v295
  %330 = vmatpush.bf16.msra.mxu0 %v312
  %331 = vmatpush.bf16.msra.mxu0 %v310
  %332 = vmatpush.bf16.msra.mxu0 %v308
  %333 = vmatpush.bf16.msra.mxu0 %v306
  %334 = vmatpush.bf16.msra.mxu0 %v304
  %335 = vmatpush.bf16.msra.mxu0 %v302
  %336 = vmatpush.bf16.msra.mxu0 %v300
  %337 = vmatpush.bf16.msra.mxu0 %v298
  %338 = vmatmul.bf16.gmra.mxu0 %v234
  %v339 = vpop.f32.mrf.mxu0
  %v340 = vadd.f32 0.0, %v339
  %v341 = vpop.f32.mrf.mxu0
  %v342 = vadd.f32 0.0, %v341
  %343 = vmatmul.bf16.gmra.mxu0 %v235
  %v344 = vpop.f32.mrf.mxu0
  %v345 = vadd.f32 0.0, %v344
  %v346 = vpop.f32.mrf.mxu0
  %v347 = vadd.f32 0.0, %v346
  %348 = vmatmul.bf16.gmra.mxu0 %v236
  %v349 = vpop.f32.mrf.mxu0
  %v350 = vadd.f32 0.0, %v349
  %v351 = vpop.f32.mrf.mxu0
  %v352 = vadd.f32 0.0, %v351
  %353 = vmatmul.bf16.gmra.mxu0 %v237
  %v354 = vpop.f32.mrf.mxu0
  %v355 = vadd.f32 0.0, %v354
  %v356 = vpop.f32.mrf.mxu0
  %v357 = vadd.f32 0.0, %v356
  %358 = vmatmul.bf16.gmra.mxu0 %v238
  %v359 = vpop.f32.mrf.mxu0
  %v360 = vadd.f32 0.0, %v359
  %v361 = vpop.f32.mrf.mxu0
  %v362 = vadd.f32 0.0, %v361
  %363 = vmatmul.bf16.gmra.mxu0 %v239
  %v364 = vpop.f32.mrf.mxu0
  %v365 = vadd.f32 0.0, %v364
  %v366 = vpop.f32.mrf.mxu0
  %v367 = vadd.f32 0.0, %v366
  %368 = vmatmul.bf16.gmra.mxu0 %v240
  %v369 = vpop.f32.mrf.mxu0
  %v370 = vadd.f32 0.0, %v369
  %v371 = vpop.f32.mrf.mxu0
  %v372 = vadd.f32 0.0, %v371
  %373 = vmatmul.bf16.gmra.mxu0 %v241
  %v374 = vpop.f32.mrf.mxu0
  %v375 = vadd.f32 0.0, %v374
  %v376 = vpop.f32.mrf.mxu0
  %v377 = vadd.f32 0.0, %v376
  %378 = vdwg.mxu0
  %379 = vmatpush.bf16.msra.mxu0 %v313
  %380 = vmatpush.bf16.msra.mxu0 %v311
  %381 = vmatpush.bf16.msra.mxu0 %v309
  %382 = vmatpush.bf16.msra.mxu0 %v307
  %383 = vmatpush.bf16.msra.mxu0 %v305
  %384 = vmatpush.bf16.msra.mxu0 %v303
  %385 = vmatpush.bf16.msra.mxu0 %v301
  %386 = vmatpush.bf16.msra.mxu0 %v299
  %387 = vmatmul.bf16.gmra.mxu0 %v234
  %v388 = vpop.f32.mrf.mxu0
  %v389 = vadd.f32 0.0, %v388
  %v390 = vpop.f32.mrf.mxu0
  %v391 = vadd.f32 0.0, %v390
  %392 = vmatmul.bf16.gmra.mxu0 %v235
  %v393 = vpop.f32.mrf.mxu0
  %v394 = vadd.f32 0.0, %v393
  %v395 = vpop.f32.mrf.mxu0
  %v396 = vadd.f32 0.0, %v395
  %397 = vmatmul.bf16.gmra.mxu0 %v236
  %v398 = vpop.f32.mrf.mxu0
  %v399 = vadd.f32 0.0, %v398
  %v400 = vpop.f32.mrf.mxu0
  %v401 = vadd.f32 0.0, %v400
  %402 = vmatmul.bf16.gmra.mxu0 %v237
  %v403 = vpop.f32.mrf.mxu0
  %v404 = vadd.f32 0.0, %v403
  %v405 = vpop.f32.mrf.mxu0
  %v406 = vadd.f32 0.0, %v405
  %407 = vmatmul.bf16.gmra.mxu0 %v238
  %v408 = vpop.f32.mrf.mxu0
  %v409 = vadd.f32 0.0, %v408
  %v410 = vpop.f32.mrf.mxu0
  %v411 = vadd.f32 0.0, %v410
  %412 = vmatmul.bf16.gmra.mxu0 %v239
  %v413 = vpop.f32.mrf.mxu0
  %v414 = vadd.f32 0.0, %v413
  %v415 = vpop.f32.mrf.mxu0
  %v416 = vadd.f32 0.0, %v415
  %417 = vmatmul.bf16.gmra.mxu0 %v240
  %v418 = vpop.f32.mrf.mxu0
  %v419 = vadd.f32 0.0, %v418
  %v420 = vpop.f32.mrf.mxu0
  %v421 = vadd.f32 0.0, %v420
  %422 = vmatmul.bf16.gmra.mxu0 %v241
  %v423 = vpop.f32.mrf.mxu0
  %v424 = vadd.f32 0.0, %v423
  %v425 = vpop.f32.mrf.mxu0
  %v426 = vadd.f32 0.0, %v425
  %427 = vdwg.mxu0
  %v428 = vmax.f32 %v340, %v350
  %v429 = vmax.f32 %v428, %v360
  %v430 = vmax.f32 %v429, %v370
  %v431 = vmax.f32 %v389, %v399
  %v432 = vmax.f32 %v431, %v409
  %v433 = vmax.f32 %v432, %v419
  %v434 = vmax.f32 %v342, %v352
  %v435 = vmax.f32 %v434, %v362
  %v436 = vmax.f32 %v435, %v372
  %v437 = vmax.f32 %v391, %v401
  %v438 = vmax.f32 %v437, %v411
  %v439 = vmax.f32 %v438, %v421
  %v440 = vmax.f32 %v345, %v355
  %v441 = vmax.f32 %v440, %v365
  %v442 = vmax.f32 %v441, %v375
  %v443 = vmax.f32 %v394, %v404
  %v444 = vmax.f32 %v443, %v414
  %v445 = vmax.f32 %v444, %v424
  %v446 = vmax.f32 %v347, %v357
  %v447 = vmax.f32 %v446, %v367
  %v448 = vmax.f32 %v447, %v377
  %v449 = vmax.f32 %v396, %v406
  %v450 = vmax.f32 %v449, %v416
  %v451 = vmax.f32 %v450, %v426
  %v452 = vadd.f32 %v430, %v158
  %v453 = vadd.f32 %v433, %v177
  %v454 = vadd.f32 %v436, %v160
  %v455 = vadd.f32 %v439, %v179
  %v456 = vadd.f32 %v442, %v163
  %v457 = vadd.f32 %v445, %v182
  %v458 = vadd.f32 %v448, %v165
  %v459 = vadd.f32 %v451, %v184
  %v460 = vld [vmem:[%s4] sm:$0x3]
  %v462 = vperm.slane %v460, 0
  %v463 = vperm.slane %v460, 1
  %v466 = vadd.f32 %v452, %v462
  %v467 = vadd.f32 %v453, %v463
  %v468 = vadd.f32 %v454, %v462
  %v469 = vadd.f32 %v455, %v463
  %v470 = vadd.f32 %v456, %v462
  %v471 = vadd.f32 %v457, %v463
  %v472 = vadd.f32 %v458, %v462
  %v473 = vadd.f32 %v459, %v463
  %vm474 = vcmp.gt.f32.partialorder %v466, 0.0
  %vm475 = vcmp.gt.f32.partialorder %v467, 0.0
  %vm476 = vcmp.gt.f32.partialorder %v468, 0.0
  %vm477 = vcmp.gt.f32.partialorder %v469, 0.0
  %vm478 = vcmp.gt.f32.partialorder %v470, 0.0
  %vm479 = vcmp.gt.f32.partialorder %v471, 0.0
  %vm480 = vcmp.gt.f32.partialorder %v472, 0.0
  %vm481 = vcmp.gt.f32.partialorder %v473, 0.0
  %v482 = vmul.f32 %v466, 0.2
  %v483 = vmul.f32 %v467, 0.2
  %v484 = vmul.f32 %v468, 0.2
  %v485 = vmul.f32 %v469, 0.2
  %v486 = vmul.f32 %v470, 0.2
  %v487 = vmul.f32 %v471, 0.2
  %v488 = vmul.f32 %v472, 0.2
  %v489 = vmul.f32 %v473, 0.2
  %v490 = vsel %vm474, %v466, %v482
  %v491 = vsel %vm475, %v467, %v483
  %v492 = vsel %vm476, %v468, %v484
  %v493 = vsel %vm477, %v469, %v485
  %v494 = vsel %vm478, %v470, %v486
  %v495 = vsel %vm479, %v471, %v487
  %v496 = vsel %vm480, %v472, %v488
  %v497 = vsel %vm481, %v473, %v489
  %v498 = vpack.c.bf16 %v491, %v490
  %v499 = vpack.c.bf16 %v493, %v492
  %v500 = vpack.c.bf16 %v495, %v494
  %v501 = vpack.c.bf16 %v497, %v496
  %502 = vst [vmem:[%s5] sm:$0xff] %v498
  %503 = vst [vmem:[%s5 + $0x8] sm:$0xff] %v499
  %504 = vst [vmem:[%s5 + $0x10] sm:$0xff] %v500
  %505 = vst [vmem:[%s5 + $0x18] sm:$0xff] %v501
  // Predicated region
  $region22: #{dgcnn_forward.6} parent=0 // pred_check
    _
  $region23: #{dgcnn_forward.6} parent=0 // pred_check_branch
    %507 = sbr.rel (0) target = $region25
  $region24: #{dgcnn_forward.6} parent=0 // pred_region
    _
  $region25: #{dgcnn_forward.6} parent=0 // pred_fallthru
    _
  // Predicated region
  $region26: #{dgcnn_forward.6} parent=0 // pred_check
    _
  $region27: #{dgcnn_forward.6} parent=0 // pred_check_branch
    %509 = sbr.rel (0) target = $region29
  $region28: #{dgcnn_forward.6} parent=0 // pred_region
    _
  $region29: #{dgcnn_forward.6} parent=0 // pred_fallthru
    _

// kernel: dgcnn_forward.7
$region0: #{dgcnn_forward.7}
  #allocation0 [shape = 'u32[]', space=smem, size = 0x4, offset = 0x4, fixed_abs, tag = 'smem constant byte address 0x4 - core index']
  #allocation1 [shape = 'u32[72,128]{1,0:T(1,128)}', space=vmem, size = 0x9000, scoped, tag = 'internal scratch']
  #allocation2 [shape = 'f32[8,32]{1,0:T(8,128)}', space=vmem, size = 0x1000, scoped, tag = 'scratch operand']
  #allocation3 [shape = 'f32[8,32]{1,0:T(8,128)}', space=vmem, size = 0x1000, scoped, tag = 'scratch operand']
  %s0 = inlined_call_operand.vmem [shape: bf16[2,16,64], index: 0, kind: input, shape index: {}]
  %s1 = inlined_call_operand.vmem [shape: bf16[2,16,64], index: 1, kind: input, shape index: {}]
  %s2 = inlined_call_operand.vmem [shape: bf16[2,16,128], index: 2, kind: input, shape index: {}]
  %s3 = inlined_call_operand.vmem [shape: bf16[2,16,256], index: 3, kind: input, shape index: {}]
  %s4 = inlined_call_operand.vmem [shape: bf16[64,32], index: 4, kind: input, shape index: {}]
  %s5 = inlined_call_operand.vmem [shape: bf16[64,32], index: 5, kind: input, shape index: {}]
  %s6 = inlined_call_operand.vmem [shape: bf16[128,32], index: 6, kind: input, shape index: {}]
  %s7 = inlined_call_operand.vmem [shape: bf16[256,32], index: 7, kind: input, shape index: {}]
  %s8 = inlined_call_operand.vmem [shape: f32[1,32], index: 8, kind: input, shape index: {}]
  %s9 = inlined_call_operand.vmem [shape: bf16[32,512], index: 9, kind: input, shape index: {}]
  %s10 = inlined_call_operand.vmem [shape: bf16[32,512], index: 10, kind: input, shape index: {}]
  %s11 = inlined_call_operand.vmem [shape: f32[1,512], index: 11, kind: input, shape index: {}]
  %s12 = inlined_call_operand.vmem [shape: bf16[512,256], index: 12, kind: input, shape index: {}]
  %s13 = inlined_call_operand.vmem [shape: f32[1,256], index: 13, kind: input, shape index: {}]
  %s14 = inlined_call_operand.vmem [shape: bf16[256,67], index: 14, kind: input, shape index: {}]
  %s15 = inlined_call_operand.vmem [shape: f32[1,67], index: 15, kind: input, shape index: {}]
  %s16 = inlined_call_operand.hbm [shape: f32[2,1,67], index: 16, kind: output, shape index: {}]
  %s17 = sld [smem:[#allocation0]]
  $region109: #{dgcnn_forward.7} parent=0
    _
  %s19 = ssub.s32 1, %s17
  %s20 = scalar_select 0, %s19, %s17
  $region1: #{dgcnn_forward.7} parent=0
    #allocation4 [shape = 'u8[1024]{0}', space=vmem, size = 0x400, scoped, tag = 'output window, operand 0']
    #allocation5 [shape = 's32[2]{0}', space=sflag, size = 0x8, scoped, tag = 'scoped memory for dgcnn_forward.7']
    %21 = vsyncpa [#allocation5], 0
    %s22 = scalar_lea.sflag [#allocation5], 1
    %23 = vsyncpa %s22, 0
    loop: start=0, step=1, limit=4
    $region2: #{dgcnn_forward.7} parent=1 // loop_pre_header
      _
    $region3: #{dgcnn_forward.7} parent=1 // loop_header
      %s25 = sphi 0, %s29
      %p26 = scmp.ge.s32.totalorder %s25, 4
      %s32 = sphi 0, %s44
      %s33 = sphi 0, %s40
      %s34 = sphi 0, %s32
      %s35 = sphi 0, %s33
      %s36 = sphi 0, %s34
      %s37 = sphi 0, %s35
      %s49 = sphi 0, %s51
      %s52 = sphi 0, %s49
      %s53 = sphi 0, %s52
      %s69 = sphi 0, %s53
      %s77 = sphi 0, %s79
      %s80 = sphi 0, %s77
      %s81 = sphi 0, %s80
      %s97 = sphi 0, %s81
      %s105 = sphi 0, %s107
      %s108 = sphi 0, %s105
      %s109 = sphi 0, %s108
      %s125 = sphi 0, %s109
      %s133 = sphi 0, %s135
      %s136 = sphi 0, %s133
      %s137 = sphi 0, %s136
      %s153 = sphi 0, %s137
      %s157 = sphi 0, %s157
      %s159 = sphi 0, %s157
      %s160 = sphi 0, %s159
      %s174 = sphi 0, %s160
      %s178 = sphi 0, %s178
      %s180 = sphi 0, %s178
      %s181 = sphi 0, %s180
      %s195 = sphi 0, %s181
      %s199 = sphi 0, %s199
      %s201 = sphi 0, %s199
      %s202 = sphi 0, %s201
      %s216 = sphi 0, %s202
      %s220 = sphi 0, %s220
      %s222 = sphi 0, %s220
      %s223 = sphi 0, %s222
      %s237 = sphi 0, %s223
      %s241 = sphi 0, %s241
      %s243 = sphi 0, %s241
      %s244 = sphi 0, %s243
      %s258 = sphi 0, %s244
      %s262 = sphi 0, %s262
      %s264 = sphi 0, %s262
      %s265 = sphi 0, %s264
      %s279 = sphi 0, %s265
      %s283 = sphi 0, %s283
      %s285 = sphi 0, %s283
      %s286 = sphi 0, %s285
      %s300 = sphi 0, %s286
      %s304 = sphi 0, %s304
      %s306 = sphi 0, %s304
      %s307 = sphi 0, %s306
      %s321 = sphi 0, %s307
      %s325 = sphi 0, %s325
      %s327 = sphi 0, %s325
      %s328 = sphi 0, %s327
      %s342 = sphi 0, %s328
      %s346 = sphi 0, %s346
      %s348 = sphi 0, %s346
      %s349 = sphi 0, %s348
      %s363 = sphi 0, %s349
      %s367 = sphi 0, %s367
      %s369 = sphi 0, %s367
      %s370 = sphi 0, %s369
      %s384 = sphi 0, %s370
      %s388 = sphi 0, %s388
      %s390 = sphi 0, %s388
      %s391 = sphi 0, %s390
      %s405 = sphi 0, %s391
      %s411 = sphi 0, %s413
      %s414 = sphi 0, %s411
      %s415 = sphi 0, %s414
      %s431 = sphi 0, %s415
    $region4: #{dgcnn_forward.7} parent=1 // loop_header_branch
      %28 = sbr.rel (%p26) target = $region8
    $region5: #{dgcnn_forward.7} parent=1 // loop_body
      %s30 = ssub.s32 %s25, 1
      %s31 = ssub.s32 %s25, 2
      %s38 = sadd.s32 1, %s33
      %p39 = scmp.ge.s32.totalorder %s38, 1
      %s40 = scalar_select %p39, 0, %s38
      %s41 = sadd.s32 1, %s32
      %s42 = scalar_select %p39, %s41, %s32
      %p43 = scmp.ge.s32.totalorder %s42, 2
      %s44 = scalar_select %p43, 0, %s42
      %s45 = ssub.s32 %s32, %s44
      %s46 = ssub.s32 %s33, %s40
      %s47 = sor.u32 %s45, %s46
      %p48 = scmp.eq.s32.totalorder %s47, 0
      %s50 = sadd.s32 %s49, 1
      %s51 = scalar_select %p48, %s49, %s50
      %p54 = pneg %p48
      %p55 = scmp.eq.s32.totalorder %s25, 1
      %p56 = por %p54, %p55
      %p57 = scmp.ne.s32.totalorder %s49, %s52
      %p58 = scmp.eq.s32.totalorder %s25, 0
      %p59 = por %p57, %p58
      %p60 = scmp.ne.s32.totalorder %s49, %s52
      %p61 = scmp.eq.s32.totalorder %s30, 1
      %p62 = por %p60, %p61
      %p63 = scmp.ne.s32.totalorder %s52, %s53
      %p64 = scmp.eq.s32.totalorder %s30, 0
      %p65 = por %p63, %p64
      %p66 = scmp.ne.s32.totalorder %s52, %s53
      %p67 = scmp.eq.s32.totalorder %s31, 1
      %p68 = por %p66, %p67
      %p70 = scmp.ne.s32.totalorder %s53, %s69
      %p71 = scmp.eq.s32.totalorder %s31, 0
      %p72 = por %p70, %p71
      %s73 = ssub.s32 %s32, %s44
      %s74 = ssub.s32 %s33, %s40
      %s75 = sor.u32 %s73, %s74
      %p76 = scmp.eq.s32.totalorder %s75, 0
      %s78 = sadd.s32 %s77, 1
      %s79 = scalar_select %p76, %s77, %s78
      %p82 = pneg %p76
      %p83 = scmp.eq.s32.totalorder %s25, 1
      %p84 = por %p82, %p83
      %p85 = scmp.ne.s32.totalorder %s77, %s80
      %p86 = scmp.eq.s32.totalorder %s25, 0
      %p87 = por %p85, %p86
      %p88 = scmp.ne.s32.totalorder %s77, %s80
      %p89 = scmp.eq.s32.totalorder %s30, 1
      %p90 = por %p88, %p89
      %p91 = scmp.ne.s32.totalorder %s80, %s81
      %p92 = scmp.eq.s32.totalorder %s30, 0
      %p93 = por %p91, %p92
      %p94 = scmp.ne.s32.totalorder %s80, %s81
      %p95 = scmp.eq.s32.totalorder %s31, 1
      %p96 = por %p94, %p95
      %p98 = scmp.ne.s32.totalorder %s81, %s97
      %p99 = scmp.eq.s32.totalorder %s31, 0
      %p100 = por %p98, %p99
      %s101 = ssub.s32 %s32, %s44
      %s102 = ssub.s32 %s33, %s40
      %s103 = sor.u32 %s101, %s102
      %p104 = scmp.eq.s32.totalorder %s103, 0
      %s106 = sadd.s32 %s105, 1
      %s107 = scalar_select %p104, %s105, %s106
      %p110 = pneg %p104
      %p111 = scmp.eq.s32.totalorder %s25, 1
      %p112 = por %p110, %p111
      %p113 = scmp.ne.s32.totalorder %s105, %s108
      %p114 = scmp.eq.s32.totalorder %s25, 0
      %p115 = por %p113, %p114
      %p116 = scmp.ne.s32.totalorder %s105, %s108
      %p117 = scmp.eq.s32.totalorder %s30, 1
      %p118 = por %p116, %p117
      %p119 = scmp.ne.s32.totalorder %s108, %s109
      %p120 = scmp.eq.s32.totalorder %s30, 0
      %p121 = por %p119, %p120
      %p122 = scmp.ne.s32.totalorder %s108, %s109
      %p123 = scmp.eq.s32.totalorder %s31, 1
      %p124 = por %p122, %p123
      %p126 = scmp.ne.s32.totalorder %s109, %s125
      %p127 = scmp.eq.s32.totalorder %s31, 0
      %p128 = por %p126, %p127
      %s129 = ssub.s32 %s32, %s44
      %s130 = ssub.s32 %s33, %s40
      %s131 = sor.u32 %s129, %s130
      %p132 = scmp.eq.s32.totalorder %s131, 0
      %s134 = sadd.s32 %s133, 1
      %s135 = scalar_select %p132, %s133, %s134
      %p138 = pneg %p132
      %p139 = scmp.eq.s32.totalorder %s25, 1
      %p140 = por %p138, %p139
      %p141 = scmp.ne.s32.totalorder %s133, %s136
      %p142 = scmp.eq.s32.totalorder %s25, 0
      %p143 = por %p141, %p142
      %p144 = scmp.ne.s32.totalorder %s133, %s136
      %p145 = scmp.eq.s32.totalorder %s30, 1
      %p146 = por %p144, %p145
      %p147 = scmp.ne.s32.totalorder %s136, %s137
      %p148 = scmp.eq.s32.totalorder %s30, 0
      %p149 = por %p147, %p148
      %p150 = scmp.ne.s32.totalorder %s136, %s137
      %p151 = scmp.eq.s32.totalorder %s31, 1
      %p152 = por %p150, %p151
      %p154 = scmp.ne.s32.totalorder %s137, %s153
      %p155 = scmp.eq.s32.totalorder %s31, 0
      %p156 = por %p154, %p155
      %s158 = sadd.s32 %s157, 1
      %p161 = scmp.eq.s32.totalorder %s25, 1
      %p162 = scmp.ne.s32.totalorder %s157, %s159
      %p163 = scmp.eq.s32.totalorder %s25, 0
      %p164 = por %p162, %p163
      %p165 = scmp.ne.s32.totalorder %s157, %s159
      %p166 = scmp.eq.s32.totalorder %s30, 1
      %p167 = por %p165, %p166
      %p168 = scmp.ne.s32.totalorder %s159, %s160
      %p169 = scmp.eq.s32.totalorder %s30, 0
      %p170 = por %p168, %p169
      %p171 = scmp.ne.s32.totalorder %s159, %s160
      %p172 = scmp.eq.s32.totalorder %s31, 1
      %p173 = por %p171, %p172
      %p175 = scmp.ne.s32.totalorder %s160, %s174
      %p176 = scmp.eq.s32.totalorder %s31, 0
      %p177 = por %p175, %p176
      %s179 = sadd.s32 %s178, 1
      %p182 = scmp.eq.s32.totalorder %s25, 1
      %p183 = scmp.ne.s32.totalorder %s178, %s180
      %p184 = scmp.eq.s32.totalorder %s25, 0
      %p185 = por %p183, %p184
      %p186 = scmp.ne.s32.totalorder %s178, %s180
      %p187 = scmp.eq.s32.totalorder %s30, 1
      %p188 = por %p186, %p187
      %p189 = scmp.ne.s32.totalorder %s180, %s181
      %p190 = scmp.eq.s32.totalorder %s30, 0
      %p191 = por %p189, %p190
      %p192 = scmp.ne.s32.totalorder %s180, %s181
      %p193 = scmp.eq.s32.totalorder %s31, 1
      %p194 = por %p192, %p193
      %p196 = scmp.ne.s32.totalorder %s181, %s195
      %p197 = scmp.eq.s32.totalorder %s31, 0
      %p198 = por %p196, %p197
      %s200 = sadd.s32 %s199, 1
      %p203 = scmp.eq.s32.totalorder %s25, 1
      %p204 = scmp.ne.s32.totalorder %s199, %s201
      %p205 = scmp.eq.s32.totalorder %s25, 0
      %p206 = por %p204, %p205
      %p207 = scmp.ne.s32.totalorder %s199, %s201
      %p208 = scmp.eq.s32.totalorder %s30, 1
      %p209 = por %p207, %p208
      %p210 = scmp.ne.s32.totalorder %s201, %s202
      %p211 = scmp.eq.s32.totalorder %s30, 0
      %p212 = por %p210, %p211
      %p213 = scmp.ne.s32.totalorder %s201, %s202
      %p214 = scmp.eq.s32.totalorder %s31, 1
      %p215 = por %p213, %p214
      %p217 = scmp.ne.s32.totalorder %s202, %s216
      %p218 = scmp.eq.s32.totalorder %s31, 0
      %p219 = por %p217, %p218
      %s221 = sadd.s32 %s220, 1
      %p224 = scmp.eq.s32.totalorder %s25, 1
      %p225 = scmp.ne.s32.totalorder %s220, %s222
      %p226 = scmp.eq.s32.totalorder %s25, 0
      %p227 = por %p225, %p226
      %p228 = scmp.ne.s32.totalorder %s220, %s222
      %p229 = scmp.eq.s32.totalorder %s30, 1
      %p230 = por %p228, %p229
      %p231 = scmp.ne.s32.totalorder %s222, %s223
      %p232 = scmp.eq.s32.totalorder %s30, 0
      %p233 = por %p231, %p232
      %p234 = scmp.ne.s32.totalorder %s222, %s223
      %p235 = scmp.eq.s32.totalorder %s31, 1
      %p236 = por %p234, %p235
      %p238 = scmp.ne.s32.totalorder %s223, %s237
      %p239 = scmp.eq.s32.totalorder %s31, 0
      %p240 = por %p238, %p239
      %s242 = sadd.s32 %s241, 1
      %p245 = scmp.eq.s32.totalorder %s25, 1
      %p246 = scmp.ne.s32.totalorder %s241, %s243
      %p247 = scmp.eq.s32.totalorder %s25, 0
      %p248 = por %p246, %p247
      %p249 = scmp.ne.s32.totalorder %s241, %s243
      %p250 = scmp.eq.s32.totalorder %s30, 1
      %p251 = por %p249, %p250
      %p252 = scmp.ne.s32.totalorder %s243, %s244
      %p253 = scmp.eq.s32.totalorder %s30, 0
      %p254 = por %p252, %p253
      %p255 = scmp.ne.s32.totalorder %s243, %s244
      %p256 = scmp.eq.s32.totalorder %s31, 1
      %p257 = por %p255, %p256
      %p259 = scmp.ne.s32.totalorder %s244, %s258
      %p260 = scmp.eq.s32.totalorder %s31, 0
      %p261 = por %p259, %p260
      %s263 = sadd.s32 %s262, 1
      %p266 = scmp.eq.s32.totalorder %s25, 1
      %p267 = scmp.ne.s32.totalorder %s262, %s264
      %p268 = scmp.eq.s32.totalorder %s25, 0
      %p269 = por %p267, %p268
      %p270 = scmp.ne.s32.totalorder %s262, %s264
      %p271 = scmp.eq.s32.totalorder %s30, 1
      %p272 = por %p270, %p271
      %p273 = scmp.ne.s32.totalorder %s264, %s265
      %p274 = scmp.eq.s32.totalorder %s30, 0
      %p275 = por %p273, %p274
      %p276 = scmp.ne.s32.totalorder %s264, %s265
      %p277 = scmp.eq.s32.totalorder %s31, 1
      %p278 = por %p276, %p277
      %p280 = scmp.ne.s32.totalorder %s265, %s279
      %p281 = scmp.eq.s32.totalorder %s31, 0
      %p282 = por %p280, %p281
      %s284 = sadd.s32 %s283, 1
      %p287 = scmp.eq.s32.totalorder %s25, 1
      %p288 = scmp.ne.s32.totalorder %s283, %s285
      %p289 = scmp.eq.s32.totalorder %s25, 0
      %p290 = por %p288, %p289
      %p291 = scmp.ne.s32.totalorder %s283, %s285
      %p292 = scmp.eq.s32.totalorder %s30, 1
      %p293 = por %p291, %p292
      %p294 = scmp.ne.s32.totalorder %s285, %s286
      %p295 = scmp.eq.s32.totalorder %s30, 0
      %p296 = por %p294, %p295
      %p297 = scmp.ne.s32.totalorder %s285, %s286
      %p298 = scmp.eq.s32.totalorder %s31, 1
      %p299 = por %p297, %p298
      %p301 = scmp.ne.s32.totalorder %s286, %s300
      %p302 = scmp.eq.s32.totalorder %s31, 0
      %p303 = por %p301, %p302
      %s305 = sadd.s32 %s304, 1
      %p308 = scmp.eq.s32.totalorder %s25, 1
      %p309 = scmp.ne.s32.totalorder %s304, %s306
      %p310 = scmp.eq.s32.totalorder %s25, 0
      %p311 = por %p309, %p310
      %p312 = scmp.ne.s32.totalorder %s304, %s306
      %p313 = scmp.eq.s32.totalorder %s30, 1
      %p314 = por %p312, %p313
      %p315 = scmp.ne.s32.totalorder %s306, %s307
      %p316 = scmp.eq.s32.totalorder %s30, 0
      %p317 = por %p315, %p316
      %p318 = scmp.ne.s32.totalorder %s306, %s307
      %p319 = scmp.eq.s32.totalorder %s31, 1
      %p320 = por %p318, %p319
      %p322 = scmp.ne.s32.totalorder %s307, %s321
      %p323 = scmp.eq.s32.totalorder %s31, 0
      %p324 = por %p322, %p323
      %s326 = sadd.s32 %s325, 1
      %p329 = scmp.eq.s32.totalorder %s25, 1
      %p330 = scmp.ne.s32.totalorder %s325, %s327
      %p331 = scmp.eq.s32.totalorder %s25, 0
      %p332 = por %p330, %p331
      %p333 = scmp.ne.s32.totalorder %s325, %s327
      %p334 = scmp.eq.s32.totalorder %s30, 1
      %p335 = por %p333, %p334
      %p336 = scmp.ne.s32.totalorder %s327, %s328
      %p337 = scmp.eq.s32.totalorder %s30, 0
      %p338 = por %p336, %p337
      %p339 = scmp.ne.s32.totalorder %s327, %s328
      %p340 = scmp.eq.s32.totalorder %s31, 1
      %p341 = por %p339, %p340
      %p343 = scmp.ne.s32.totalorder %s328, %s342
      %p344 = scmp.eq.s32.totalorder %s31, 0
      %p345 = por %p343, %p344
      %s347 = sadd.s32 %s346, 1
      %p350 = scmp.eq.s32.totalorder %s25, 1
      %p351 = scmp.ne.s32.totalorder %s346, %s348
      %p352 = scmp.eq.s32.totalorder %s25, 0
      %p353 = por %p351, %p352
      %p354 = scmp.ne.s32.totalorder %s346, %s348
      %p355 = scmp.eq.s32.totalorder %s30, 1
      %p356 = por %p354, %p355
      %p357 = scmp.ne.s32.totalorder %s348, %s349
      %p358 = scmp.eq.s32.totalorder %s30, 0
      %p359 = por %p357, %p358
      %p360 = scmp.ne.s32.totalorder %s348, %s349
      %p361 = scmp.eq.s32.totalorder %s31, 1
      %p362 = por %p360, %p361
      %p364 = scmp.ne.s32.totalorder %s349, %s363
      %p365 = scmp.eq.s32.totalorder %s31, 0
      %p366 = por %p364, %p365
      %s368 = sadd.s32 %s367, 1
      %p371 = scmp.eq.s32.totalorder %s25, 1
      %p372 = scmp.ne.s32.totalorder %s367, %s369
      %p373 = scmp.eq.s32.totalorder %s25, 0
      %p374 = por %p372, %p373
      %p375 = scmp.ne.s32.totalorder %s367, %s369
      %p376 = scmp.eq.s32.totalorder %s30, 1
      %p377 = por %p375, %p376
      %p378 = scmp.ne.s32.totalorder %s369, %s370
      %p379 = scmp.eq.s32.totalorder %s30, 0
      %p380 = por %p378, %p379
      %p381 = scmp.ne.s32.totalorder %s369, %s370
      %p382 = scmp.eq.s32.totalorder %s31, 1
      %p383 = por %p381, %p382
      %p385 = scmp.ne.s32.totalorder %s370, %s384
      %p386 = scmp.eq.s32.totalorder %s31, 0
      %p387 = por %p385, %p386
      %s389 = sadd.s32 %s388, 1
      %p392 = scmp.eq.s32.totalorder %s25, 1
      %p393 = scmp.ne.s32.totalorder %s388, %s390
      %p394 = scmp.eq.s32.totalorder %s25, 0
      %p395 = por %p393, %p394
      %p396 = scmp.ne.s32.totalorder %s388, %s390
      %p397 = scmp.eq.s32.totalorder %s30, 1
      %p398 = por %p396, %p397
      %p399 = scmp.ne.s32.totalorder %s390, %s391
      %p400 = scmp.eq.s32.totalorder %s30, 0
      %p401 = por %p399, %p400
      %p402 = scmp.ne.s32.totalorder %s390, %s391
      %p403 = scmp.eq.s32.totalorder %s31, 1
      %p404 = por %p402, %p403
      %p406 = scmp.ne.s32.totalorder %s391, %s405
      %p407 = scmp.eq.s32.totalorder %s31, 0
      %p408 = por %p406, %p407
      %s409 = ssub.s32 %s32, %s44
      %p410 = scmp.eq.s32.totalorder %s409, 0
      %s412 = sadd.s32 %s411, 1
      %s413 = scalar_select %p410, %s411, %s412
      %p416 = pneg %p410
      %p417 = scmp.eq.s32.totalorder %s25, 1
      %p418 = por %p416, %p417
      %p419 = scmp.ne.s32.totalorder %s411, %s414
      %p420 = scmp.eq.s32.totalorder %s25, 0
      %p421 = por %p419, %p420
      %p422 = scmp.ne.s32.totalorder %s411, %s414
      %p423 = scmp.eq.s32.totalorder %s30, 1
      %p424 = por %p422, %p423
      %p425 = scmp.ne.s32.totalorder %s414, %s415
      %p426 = scmp.eq.s32.totalorder %s30, 0
      %p427 = por %p425, %p426
      %p428 = scmp.ne.s32.totalorder %s414, %s415
      %p429 = scmp.eq.s32.totalorder %s31, 1
      %p430 = por %p428, %p429
      %p432 = scmp.ne.s32.totalorder %s415, %s431
      %p433 = scmp.eq.s32.totalorder %s31, 0
      %p434 = por %p432, %p433
      %p435 = scmp.le.s32.totalorder 1, %s25
      %p436 = scmp.lt.s32.totalorder %s25, 3
      %p437 = pnand %p435, %p436
      %p438 = pneg %p437
      // Predicated region
      $region9: #{dgcnn_forward.7} parent=5 // pred_check
        _
      $region10: #{dgcnn_forward.7} parent=5 // pred_check_branch
        %440 = sbr.rel (%p437) target = $region12
      $region11: #{dgcnn_forward.7} parent=5 // pred_region
        %s441 = ssub.s32 %s25, 1
        // Predicated region
        $region13: #{dgcnn_forward.7} parent=11 // pred_check
          %p442 = pneg %p170
        $region14: #{dgcnn_forward.7} parent=11 // pred_check_branch
          %444 = sbr.rel (%p442) target = $region16
        $region15: #{dgcnn_forward.7} parent=11 // pred_region
          _
        $region16: #{dgcnn_forward.7} parent=11 // pred_fallthru
          _
        // Predicated region
        $region17: #{dgcnn_forward.7} parent=11 // pred_check
          %p445 = pneg %p191
        $region18: #{dgcnn_forward.7} parent=11 // pred_check_branch
          %447 = sbr.rel (%p445) target = $region20
        $region19: #{dgcnn_forward.7} parent=11 // pred_region
          _
        $region20: #{dgcnn_forward.7} parent=11 // pred_fallthru
          _
        // Predicated region
        $region21: #{dgcnn_forward.7} parent=11 // pred_check
          %p448 = pneg %p212
        $region22: #{dgcnn_forward.7} parent=11 // pred_check_branch
          %450 = sbr.rel (%p448) target = $region24
        $region23: #{dgcnn_forward.7} parent=11 // pred_region
          _
        $region24: #{dgcnn_forward.7} parent=11 // pred_fallthru
          _
        // Predicated region
        $region25: #{dgcnn_forward.7} parent=11 // pred_check
          %p451 = pneg %p233
        $region26: #{dgcnn_forward.7} parent=11 // pred_check_branch
          %453 = sbr.rel (%p451) target = $region28
        $region27: #{dgcnn_forward.7} parent=11 // pred_region
          _
        $region28: #{dgcnn_forward.7} parent=11 // pred_fallthru
          _
        // Predicated region
        $region29: #{dgcnn_forward.7} parent=11 // pred_check
          %p454 = pneg %p254
        $region30: #{dgcnn_forward.7} parent=11 // pred_check_branch
          %456 = sbr.rel (%p454) target = $region32
        $region31: #{dgcnn_forward.7} parent=11 // pred_region
          _
        $region32: #{dgcnn_forward.7} parent=11 // pred_fallthru
          _
        // Predicated region
        $region33: #{dgcnn_forward.7} parent=11 // pred_check
          %p457 = pneg %p275
        $region34: #{dgcnn_forward.7} parent=11 // pred_check_branch
          %459 = sbr.rel (%p457) target = $region36
        $region35: #{dgcnn_forward.7} parent=11 // pred_region
          _
        $region36: #{dgcnn_forward.7} parent=11 // pred_fallthru
          _
        // Predicated region
        $region37: #{dgcnn_forward.7} parent=11 // pred_check
          %p460 = pneg %p296
        $region38: #{dgcnn_forward.7} parent=11 // pred_check_branch
          %462 = sbr.rel (%p460) target = $region40
        $region39: #{dgcnn_forward.7} parent=11 // pred_region
          _
        $region40: #{dgcnn_forward.7} parent=11 // pred_fallthru
          _
        // Predicated region
        $region41: #{dgcnn_forward.7} parent=11 // pred_check
          %p463 = pneg %p317
        $region42: #{dgcnn_forward.7} parent=11 // pred_check_branch
          %465 = sbr.rel (%p463) target = $region44
        $region43: #{dgcnn_forward.7} parent=11 // pred_region
          _
        $region44: #{dgcnn_forward.7} parent=11 // pred_fallthru
          _
        // Predicated region
        $region45: #{dgcnn_forward.7} parent=11 // pred_check
          %p466 = pneg %p338
        $region46: #{dgcnn_forward.7} parent=11 // pred_check_branch
          %468 = sbr.rel (%p466) target = $region48
        $region47: #{dgcnn_forward.7} parent=11 // pred_region
          _
        $region48: #{dgcnn_forward.7} parent=11 // pred_fallthru
          _
        // Predicated region
        $region49: #{dgcnn_forward.7} parent=11 // pred_check
          %p469 = pneg %p359
        $region50: #{dgcnn_forward.7} parent=11 // pred_check_branch
          %471 = sbr.rel (%p469) target = $region52
        $region51: #{dgcnn_forward.7} parent=11 // pred_region
          _
        $region52: #{dgcnn_forward.7} parent=11 // pred_fallthru
          _
        // Predicated region
        $region53: #{dgcnn_forward.7} parent=11 // pred_check
          %p472 = pneg %p380
        $region54: #{dgcnn_forward.7} parent=11 // pred_check_branch
          %474 = sbr.rel (%p472) target = $region56
        $region55: #{dgcnn_forward.7} parent=11 // pred_region
          _
        $region56: #{dgcnn_forward.7} parent=11 // pred_fallthru
          _
        // Predicated region
        $region57: #{dgcnn_forward.7} parent=11 // pred_check
          %p475 = pneg %p401
        $region58: #{dgcnn_forward.7} parent=11 // pred_check_branch
          %477 = sbr.rel (%p475) target = $region60
        $region59: #{dgcnn_forward.7} parent=11 // pred_region
          _
        $region60: #{dgcnn_forward.7} parent=11 // pred_fallthru
          _
      $region12: #{dgcnn_forward.7} parent=5 // pred_fallthru
        _
      %p478 = scmp.lt.s32.totalorder %s25, 2
      // Predicated region
      $region61: #{dgcnn_forward.7} parent=5 // pred_check
        %p479 = pneg %p478
      $region62: #{dgcnn_forward.7} parent=5 // pred_check_branch
        %481 = sbr.rel (%p479) target = $region64
      $region63: #{dgcnn_forward.7} parent=5 // pred_region
        // Predicated region
        $region65: #{dgcnn_forward.7} parent=63 // pred_check
          %p482 = pneg %p59
        $region66: #{dgcnn_forward.7} parent=63 // pred_check_branch
          %484 = sbr.rel (%p482) target = $region68
        $region67: #{dgcnn_forward.7} parent=63 // pred_region
          %s485 = smul.u32 2, %s33
          %p486 = scmp.lt.s32.totalorder %s32, 1
          %s487 = scalar_select %p486, %s32, 1
          %p488 = scmp.lt.s32.totalorder %s485, 1
          %s489 = scalar_select %p488, %s485, 1
          %s490 = smul.addr %s487, 2
          %s491 = sadd.s32 %s489, %s490
          %s492 = smul.addr %s491, 4
          %s493 = scalar_lea.vmem %s0, %s492
          %s494 = smul.u32 2, %s33
        $region68: #{dgcnn_forward.7} parent=63 // pred_fallthru
          _
        // Predicated region
        $region69: #{dgcnn_forward.7} parent=63 // pred_check
          %p495 = pneg %p87
        $region70: #{dgcnn_forward.7} parent=63 // pred_check_branch
          %497 = sbr.rel (%p495) target = $region72
        $region71: #{dgcnn_forward.7} parent=63 // pred_region
          %s498 = smul.u32 2, %s33
          %p499 = scmp.lt.s32.totalorder %s32, 1
          %s500 = scalar_select %p499, %s32, 1
          %p501 = scmp.lt.s32.totalorder %s498, 1
          %s502 = scalar_select %p501, %s498, 1
          %s503 = smul.addr %s500, 2
          %s504 = sadd.s32 %s502, %s503
          %s505 = smul.addr %s504, 4
          %s506 = scalar_lea.vmem %s1, %s505
          %s507 = smul.u32 2, %s33
        $region72: #{dgcnn_forward.7} parent=63 // pred_fallthru
          _
        // Predicated region
        $region73: #{dgcnn_forward.7} parent=63 // pred_check
          %p508 = pneg %p115
        $region74: #{dgcnn_forward.7} parent=63 // pred_check_branch
          %510 = sbr.rel (%p508) target = $region76
        $region75: #{dgcnn_forward.7} parent=63 // pred_region
          %s511 = smul.u32 2, %s33
          %p512 = scmp.lt.s32.totalorder %s32, 1
          %s513 = scalar_select %p512, %s32, 1
          %p514 = scmp.lt.s32.totalorder %s511, 1
          %s515 = scalar_select %p514, %s511, 1
          %s516 = smul.addr %s513, 2
          %s517 = sadd.s32 %s515, %s516
          %s518 = smul.addr %s517, 4
          %s519 = scalar_lea.vmem %s2, %s518
          %s520 = smul.u32 2, %s33
        $region76: #{dgcnn_forward.7} parent=63 // pred_fallthru
          _
        // Predicated region
        $region77: #{dgcnn_forward.7} parent=63 // pred_check
          %p521 = pneg %p143
        $region78: #{dgcnn_forward.7} parent=63 // pred_check_branch
          %523 = sbr.rel (%p521) target = $region80
        $region79: #{dgcnn_forward.7} parent=63 // pred_region
          %s524 = smul.u32 2, %s33
          %p525 = scmp.lt.s32.totalorder %s32, 1
          %s526 = scalar_select %p525, %s32, 1
          %p527 = scmp.lt.s32.totalorder %s524, 1
          %s528 = scalar_select %p527, %s524, 1
          %s529 = smul.addr %s528, 2
          %s530 = smul.addr %s526, 4
          %s531 = sadd.s32 %s529, %s530
          %s532 = smul.addr %s531, 4
          %s533 = scalar_lea.vmem %s3, %s532
          %s534 = smul.u32 2, %s33
        $region80: #{dgcnn_forward.7} parent=63 // pred_fallthru
          _
      $region64: #{dgcnn_forward.7} parent=5 // pred_fallthru
        _
      %p535 = scmp.le.s32.totalorder 1, %s25
      %p536 = scmp.lt.s32.totalorder %s25, 3
      %p537 = pnand %p535, %p536
      %p538 = pneg %p537
      // Predicated region
      $region81: #{dgcnn_forward.7} parent=5 // pred_check
        _
      $region82: #{dgcnn_forward.7} parent=5 // pred_check_branch
        %540 = sbr.rel (%p537) target = $region84
      $region83: #{dgcnn_forward.7} parent=5 // pred_region
        %s541 = ssub.s32 %s25, 1
        %s542 = smul.u32 2, %s35
        %p543 = scmp.lt.s32.totalorder %s34, 1
        %s544 = scalar_select %p543, %s34, 1
        %p545 = scmp.lt.s32.totalorder %s542, 1
        %s546 = scalar_select %p545, %s542, 1
        %s547 = smul.addr %s544, 2
        %s548 = sadd.s32 %s546, %s547
        %s549 = smul.addr %s548, 4
        %s550 = scalar_lea.vmem %s0, %s549
        %p551 = pneg %p65
        %p552 = pneg %p62
        %s553 = smul.u32 2, %s35
        %p554 = scmp.lt.s32.totalorder %s34, 1
        %s555 = scalar_select %p554, %s34, 1
        %p556 = scmp.lt.s32.totalorder %s553, 1
        %s557 = scalar_select %p556, %s553, 1
        %s558 = smul.addr %s555, 2
        %s559 = sadd.s32 %s557, %s558
        %s560 = smul.addr %s559, 4
        %s561 = scalar_lea.vmem %s1, %s560
        %p562 = pneg %p93
        %p563 = pneg %p90
        %s564 = smul.u32 2, %s35
        %p565 = scmp.lt.s32.totalorder %s34, 1
        %s566 = scalar_select %p565, %s34, 1
        %p567 = scmp.lt.s32.totalorder %s564, 1
        %s568 = scalar_select %p567, %s564, 1
        %s569 = smul.addr %s566, 2
        %s570 = sadd.s32 %s568, %s569
        %s571 = smul.addr %s570, 4
        %s572 = scalar_lea.vmem %s2, %s571
        %p573 = pneg %p121
        %p574 = pneg %p118
        %s575 = smul.u32 2, %s35
        %p576 = scmp.lt.s32.totalorder %s34, 1
        %s577 = scalar_select %p576, %s34, 1
        %p578 = scmp.lt.s32.totalorder %s575, 1
        %s579 = scalar_select %p578, %s575, 1
        %s580 = smul.addr %s579, 2
        %s581 = smul.addr %s577, 4
        %s582 = sadd.s32 %s580, %s581
        %s583 = smul.addr %s582, 4
        %s584 = scalar_lea.vmem %s3, %s583
        %p585 = pneg %p149
        %p586 = pneg %p146
        %p587 = pneg %p170
        %p588 = pneg %p167
        %p589 = pneg %p191
        %p590 = pneg %p188
        %p591 = pneg %p212
        %p592 = pneg %p209
        %p593 = pneg %p233
        %p594 = pneg %p230
        %p595 = pneg %p254
        %p596 = pneg %p251
        %p597 = pneg %p275
        %p598 = pneg %p272
        %p599 = pneg %p296
        %p600 = pneg %p293
        %p601 = pneg %p317
        %p602 = pneg %p314
        %p603 = pneg %p338
        %p604 = pneg %p335
        %p605 = pneg %p359
        %p606 = pneg %p356
        %p607 = pneg %p380
        %p608 = pneg %p377
        %p609 = pneg %p401
        %p610 = pneg %p398
        %p611 = pneg %p427
        %p612 = pneg %p424
        %s613 = sand.u32 %s414, 1
        %s614 = scalar_lea.sflag [#allocation5], %s613
        %s615 = sand.u32 %s414, 1
        %s616 = scalar_lea.vmem [#allocation4], %s615
        %s617 = smul.u32 2, %s35
        %p618 = scmp.lt.s32.totalorder %s34, 1
        %s619 = scalar_select %p618, %s34, 1
        %p620 = scmp.lt.s32.totalorder %s617, 1
        %s621 = scalar_select %p620, %s617, 1
        %s622 = smul.addr %s619, 2
        %s623 = sadd.s32 %s621, %s622
        %s624 = smul.addr %s623, 4
        %s625 = scalar_lea.vmem %s0, %s624
        %s626 = smul.u32 2, %s35
        %s627 = smul.u32 2, %s35
        %p628 = scmp.lt.s32.totalorder %s34, 1
        %s629 = scalar_select %p628, %s34, 1
        %p630 = scmp.lt.s32.totalorder %s627, 1
        %s631 = scalar_select %p630, %s627, 1
        %s632 = smul.addr %s629, 2
        %s633 = sadd.s32 %s631, %s632
        %s634 = smul.addr %s633, 4
        %s635 = scalar_lea.vmem %s1, %s634
        %s636 = smul.u32 2, %s35
        %s637 = smul.u32 2, %s35
        %p638 = scmp.lt.s32.totalorder %s34, 1
        %s639 = scalar_select %p638, %s34, 1
        %p640 = scmp.lt.s32.totalorder %s637, 1
        %s641 = scalar_select %p640, %s637, 1
        %s642 = smul.addr %s639, 2
        %s643 = sadd.s32 %s641, %s642
        %s644 = smul.addr %s643, 4
        %s645 = scalar_lea.vmem %s2, %s644
        %s646 = smul.u32 2, %s35
        %s647 = smul.u32 2, %s35
        %p648 = scmp.lt.s32.totalorder %s34, 1
        %s649 = scalar_select %p648, %s34, 1
        %p650 = scmp.lt.s32.totalorder %s647, 1
        %s651 = scalar_select %p650, %s647, 1
        %s652 = smul.addr %s651, 2
        %s653 = smul.addr %s649, 4
        %s654 = sadd.s32 %s652, %s653
        %s655 = smul.addr %s654, 4
        %s656 = scalar_lea.vmem %s3, %s655
        %s657 = smul.u32 2, %s35
        %v659 = vld [vmem:[%s625] sm:$0xf]
        %v660 = vld [vmem:[%s625 + $0x4] sm:$0xf]
        %v661 = vld [vmem:[%s4] sm:$0xf]
        %v662 = vld [vmem:[%s4 + $0x4] sm:$0xf]
        %v663 = vld [vmem:[%s4 + $0x8] sm:$0xf]
        %v664 = vld [vmem:[%s4 + $0xc] sm:$0xf]
        %v665 = vld [vmem:[%s4 + $0x10] sm:$0xf]
        %v666 = vld [vmem:[%s4 + $0x14] sm:$0xf]
        %v667 = vld [vmem:[%s4 + $0x18] sm:$0xf]
        %v668 = vld [vmem:[%s4 + $0x1c] sm:$0xf]
        %v669 = vld [vmem:[%s635] sm:$0xf]
        %v670 = vld [vmem:[%s635 + $0x4] sm:$0xf]
        %v671 = vld [vmem:[%s5] sm:$0xf]
        %v672 = vld [vmem:[%s5 + $0x4] sm:$0xf]
        %v673 = vld [vmem:[%s5 + $0x8] sm:$0xf]
        %v674 = vld [vmem:[%s5 + $0xc] sm:$0xf]
        %v675 = vld [vmem:[%s5 + $0x10] sm:$0xf]
        %v676 = vld [vmem:[%s5 + $0x14] sm:$0xf]
        %v677 = vld [vmem:[%s5 + $0x18] sm:$0xf]
        %v678 = vld [vmem:[%s5 + $0x1c] sm:$0xf]
        %v681 = vunpack.c.l.b16 %v669
        %v682 = vunpack.c.l.b16 %v670
        %v683 = vpack.c.b16 %v682, %v681
        %v692 = vunpack.c.l.b16 %v671
        %v693 = vunpack.c.l.b16 %v672
        %v694 = vunpack.c.l.b16 %v673
        %v695 = vunpack.c.l.b16 %v674
        %v696 = vunpack.c.l.b16 %v675
        %v697 = vunpack.c.l.b16 %v676
        %v698 = vunpack.c.l.b16 %v677
        %v699 = vunpack.c.l.b16 %v678
        %v700 = vpack.c.b16 %v693, %v692
        %v701 = vpack.c.b16 %v695, %v694
        %v702 = vpack.c.b16 %v697, %v696
        %v703 = vpack.c.b16 %v699, %v698
        %vm708 = vcmask 523264
        %v710 = vsel %vm708, %v683, 0
        %712 = vmatpush.bf16.msra.mxu0 0
        %713 = vmatpush.bf16.msra.mxu0 0
        %714 = vmatpush.bf16.msra.mxu0 0
        %715 = vmatpush.bf16.msra.mxu0 0
        %716 = vmatpush.bf16.msra.mxu0 %v703
        %717 = vmatpush.bf16.msra.mxu0 %v702
        %718 = vmatpush.bf16.msra.mxu0 %v701
        %719 = vmatpush.bf16.msra.mxu0 %v700
        %720 = vmatmul.bf16.gmra.mxu0 %v710
        %v721 = vpop.f32.mrf.mxu0
        %v722 = vadd.f32 0.0, %v721
        %v723 = vpop.f32.mrf.mxu0
        %v724 = vadd.f32 0.0, %v723
        %725 = vdwg.mxu0
        %v728 = vunpack.c.l.b16 %v659
        %v729 = vunpack.c.l.b16 %v660
        %v730 = vpack.c.b16 %v729, %v728
        %v739 = vunpack.c.l.b16 %v661
        %v740 = vunpack.c.l.b16 %v662
        %v741 = vunpack.c.l.b16 %v663
        %v742 = vunpack.c.l.b16 %v664
        %v743 = vunpack.c.l.b16 %v665
        %v744 = vunpack.c.l.b16 %v666
        %v745 = vunpack.c.l.b16 %v667
        %v746 = vunpack.c.l.b16 %v668
        %v747 = vpack.c.b16 %v740, %v739
        %v748 = vpack.c.b16 %v742, %v741
        %v749 = vpack.c.b16 %v744, %v743
        %v750 = vpack.c.b16 %v746, %v745
        %v756 = vsel %vm708, %v730, 0
        %758 = vmatpush.bf16.msra.mxu0 0
        %759 = vmatpush.bf16.msra.mxu0 0
        %760 = vmatpush.bf16.msra.mxu0 0
        %761 = vmatpush.bf16.msra.mxu0 0
        %762 = vmatpush.bf16.msra.mxu0 %v750
        %763 = vmatpush.bf16.msra.mxu0 %v749
        %764 = vmatpush.bf16.msra.mxu0 %v748
        %765 = vmatpush.bf16.msra.mxu0 %v747
        %766 = vmatmul.bf16.gmra.mxu0 %v756
        %v767 = vpop.f32.mrf.mxu0
        %v768 = vadd.f32 %v722, %v767
        %v769 = vpop.f32.mrf.mxu0
        %v770 = vadd.f32 %v724, %v769
        %771 = vdwg.mxu0
        %v772 = vld [vmem:[%s645] sm:$0xf]
        %v773 = vld [vmem:[%s645 + $0x4] sm:$0xf]
        %v774 = vld [vmem:[%s6] sm:$0xf]
        %v775 = vld [vmem:[%s6 + $0x4] sm:$0xf]
        %v776 = vld [vmem:[%s6 + $0x8] sm:$0xf]
        %v777 = vld [vmem:[%s6 + $0xc] sm:$0xf]
        %v778 = vld [vmem:[%s6 + $0x10] sm:$0xf]
        %v779 = vld [vmem:[%s6 + $0x14] sm:$0xf]
        %v780 = vld [vmem:[%s6 + $0x18] sm:$0xf]
        %v781 = vld [vmem:[%s6 + $0x1c] sm:$0xf]
        %v782 = vld [vmem:[%s6 + $0x20] sm:$0xf]
        %v783 = vld [vmem:[%s6 + $0x24] sm:$0xf]
        %v784 = vld [vmem:[%s6 + $0x28] sm:$0xf]
        %v785 = vld [vmem:[%s6 + $0x2c] sm:$0xf]
        %v786 = vld [vmem:[%s6 + $0x30] sm:$0xf]
        %v787 = vld [vmem:[%s6 + $0x34] sm:$0xf]
        %v788 = vld [vmem:[%s6 + $0x38] sm:$0xf]
        %v789 = vld [vmem:[%s6 + $0x3c] sm:$0xf]
        %v792 = vunpack.c.l.b16 %v772
        %v793 = vunpack.c.l.b16 %v773
        %v794 = vpack.c.b16 %v793, %v792
        %v812 = vunpack.c.l.b16 %v774
        %v813 = vunpack.c.l.b16 %v775
        %v814 = vunpack.c.l.b16 %v776
        %v815 = vunpack.c.l.b16 %v777
        %v816 = vunpack.c.l.b16 %v778
        %v817 = vunpack.c.l.b16 %v779
        %v818 = vunpack.c.l.b16 %v780
        %v819 = vunpack.c.l.b16 %v781
        %v820 = vunpack.c.l.b16 %v782
        %v821 = vunpack.c.l.b16 %v783
        %v822 = vunpack.c.l.b16 %v784
        %v823 = vunpack.c.l.b16 %v785
        %v824 = vunpack.c.l.b16 %v786
        %v825 = vunpack.c.l.b16 %v787
        %v826 = vunpack.c.l.b16 %v788
        %v827 = vunpack.c.l.b16 %v789
        %v828 = vpack.c.b16 %v813, %v812
        %v829 = vpack.c.b16 %v815, %v814
        %v830 = vpack.c.b16 %v817, %v816
        %v831 = vpack.c.b16 %v819, %v818
        %v832 = vpack.c.b16 %v821, %v820
        %v833 = vpack.c.b16 %v823, %v822
        %v834 = vpack.c.b16 %v825, %v824
        %v835 = vpack.c.b16 %v827, %v826
        %844 = vmatpush.bf16.msra.mxu0 %v835
        %845 = vmatpush.bf16.msra.mxu0 %v834
        %846 = vmatpush.bf16.msra.mxu0 %v833
        %847 = vmatpush.bf16.msra.mxu0 %v832
        %848 = vmatpush.bf16.msra.mxu0 %v831
        %849 = vmatpush.bf16.msra.mxu0 %v830
        %850 = vmatpush.bf16.msra.mxu0 %v829
        %851 = vmatpush.bf16.msra.mxu0 %v828
        %852 = vmatmul.bf16.gmra.mxu0 %v794
        %v853 = vpop.f32.mrf.mxu0
        %v854 = vadd.f32 0.0, %v853
        %v855 = vpop.f32.mrf.mxu0
        %v856 = vadd.f32 0.0, %v855
        %857 = vdwg.mxu0
        %v858 = vadd.f32 %v768, %v854
        %v859 = vadd.f32 %v770, %v856
        %v860 = vld [vmem:[%s656] sm:$0xff]
        %v861 = vld [vmem:[%s656 + $0x8] sm:$0xff]
        %v862 = vld [vmem:[%s7] sm:$0xf]
        %v863 = vld [vmem:[%s7 + $0x4] sm:$0xf]
        %v864 = vld [vmem:[%s7 + $0x8] sm:$0xf]
        %v865 = vld [vmem:[%s7 + $0xc] sm:$0xf]
        %v866 = vld [vmem:[%s7 + $0x10] sm:$0xf]
        %v867 = vld [vmem:[%s7 + $0x14] sm:$0xf]
        %v868 = vld [vmem:[%s7 + $0x18] sm:$0xf]
        %v869 = vld [vmem:[%s7 + $0x1c] sm:$0xf]
        %v870 = vld [vmem:[%s7 + $0x20] sm:$0xf]
        %v871 = vld [vmem:[%s7 + $0x24] sm:$0xf]
        %v872 = vld [vmem:[%s7 + $0x28] sm:$0xf]
        %v873 = vld [vmem:[%s7 + $0x2c] sm:$0xf]
        %v874 = vld [vmem:[%s7 + $0x30] sm:$0xf]
        %v875 = vld [vmem:[%s7 + $0x34] sm:$0xf]
        %v876 = vld [vmem:[%s7 + $0x38] sm:$0xf]
        %v877 = vld [vmem:[%s7 + $0x3c] sm:$0xf]
        %v878 = vld [vmem:[%s7 + $0x40] sm:$0xf]
        %v879 = vld [vmem:[%s7 + $0x44] sm:$0xf]
        %v880 = vld [vmem:[%s7 + $0x48] sm:$0xf]
        %v881 = vld [vmem:[%s7 + $0x4c] sm:$0xf]
        %v882 = vld [vmem:[%s7 + $0x50] sm:$0xf]
        %v883 = vld [vmem:[%s7 + $0x54] sm:$0xf]
        %v884 = vld [vmem:[%s7 + $0x58] sm:$0xf]
        %v885 = vld [vmem:[%s7 + $0x5c] sm:$0xf]
        %v886 = vld [vmem:[%s7 + $0x60] sm:$0xf]
        %v887 = vld [vmem:[%s7 + $0x64] sm:$0xf]
        %v888 = vld [vmem:[%s7 + $0x68] sm:$0xf]
        %v889 = vld [vmem:[%s7 + $0x6c] sm:$0xf]
        %v890 = vld [vmem:[%s7 + $0x70] sm:$0xf]
        %v891 = vld [vmem:[%s7 + $0x74] sm:$0xf]
        %v892 = vld [vmem:[%s7 + $0x78] sm:$0xf]
        %v893 = vld [vmem:[%s7 + $0x7c] sm:$0xf]
        %v896 = vunpack.c.l.b16 %v860
        %v897 = vunpack.c.h.b16 %v860
        %v898 = vunpack.c.l.b16 %v861
        %v899 = vunpack.c.h.b16 %v861
        %v900 = vpack.c.b16 %v898, %v896
        %v901 = vpack.c.b16 %v899, %v897
        %v936 = vunpack.c.l.b16 %v862
        %v937 = vunpack.c.l.b16 %v863
        %v938 = vunpack.c.l.b16 %v864
        %v939 = vunpack.c.l.b16 %v865
        %v940 = vunpack.c.l.b16 %v866
        %v941 = vunpack.c.l.b16 %v867
        %v942 = vunpack.c.l.b16 %v868
        %v943 = vunpack.c.l.b16 %v869
        %v944 = vunpack.c.l.b16 %v870
        %v945 = vunpack.c.l.b16 %v871
        %v946 = vunpack.c.l.b16 %v872
        %v947 = vunpack.c.l.b16 %v873
        %v948 = vunpack.c.l.b16 %v874
        %v949 = vunpack.c.l.b16 %v875
        %v950 = vunpack.c.l.b16 %v876
        %v951 = vunpack.c.l.b16 %v877
        %v952 = vunpack.c.l.b16 %v878
        %v953 = vunpack.c.l.b16 %v879
        %v954 = vunpack.c.l.b16 %v880
        %v955 = vunpack.c.l.b16 %v881
        %v956 = vunpack.c.l.b16 %v882
        %v957 = vunpack.c.l.b16 %v883
        %v958 = vunpack.c.l.b16 %v884
        %v959 = vunpack.c.l.b16 %v885
        %v960 = vunpack.c.l.b16 %v886
        %v961 = vunpack.c.l.b16 %v887
        %v962 = vunpack.c.l.b16 %v888
        %v963 = vunpack.c.l.b16 %v889
        %v964 = vunpack.c.l.b16 %v890
        %v965 = vunpack.c.l.b16 %v891
        %v966 = vunpack.c.l.b16 %v892
        %v967 = vunpack.c.l.b16 %v893
        %v968 = vpack.c.b16 %v937, %v936
        %v969 = vpack.c.b16 %v939, %v938
        %v970 = vpack.c.b16 %v941, %v940
        %v971 = vpack.c.b16 %v943, %v942
        %v972 = vpack.c.b16 %v945, %v944
        %v973 = vpack.c.b16 %v947, %v946
        %v974 = vpack.c.b16 %v949, %v948
        %v975 = vpack.c.b16 %v951, %v950
        %v976 = vpack.c.b16 %v953, %v952
        %v977 = vpack.c.b16 %v955, %v954
        %v978 = vpack.c.b16 %v957, %v956
        %v979 = vpack.c.b16 %v959, %v958
        %v980 = vpack.c.b16 %v961, %v960
        %v981 = vpack.c.b16 %v963, %v962
        %v982 = vpack.c.b16 %v965, %v964
        %v983 = vpack.c.b16 %v967, %v966
        %1000 = vmatpush.bf16.msra.mxu0 %v975
        %1001 = vmatpush.bf16.msra.mxu0 %v974
        %1002 = vmatpush.bf16.msra.mxu0 %v973
        %1003 = vmatpush.bf16.msra.mxu0 %v972
        %1004 = vmatpush.bf16.msra.mxu0 %v971
        %1005 = vmatpush.bf16.msra.mxu0 %v970
        %1006 = vmatpush.bf16.msra.mxu0 %v969
        %1007 = vmatpush.bf16.msra.mxu0 %v968
        %1008 = vmatmul.bf16.gmra.mxu0 %v900
        %v1009 = vpop.f32.mrf.mxu0
        %v1010 = vadd.f32 0.0, %v1009
        %v1011 = vpop.f32.mrf.mxu0
        %v1012 = vadd.f32 0.0, %v1011
        %1013 = vdwg.mxu0
        %1014 = vmatpush.bf16.msra.mxu0 %v983
        %1015 = vmatpush.bf16.msra.mxu0 %v982
        %1016 = vmatpush.bf16.msra.mxu0 %v981
        %1017 = vmatpush.bf16.msra.mxu0 %v980
        %1018 = vmatpush.bf16.msra.mxu0 %v979
        %1019 = vmatpush.bf16.msra.mxu0 %v978
        %1020 = vmatpush.bf16.msra.mxu0 %v977
        %1021 = vmatpush.bf16.msra.mxu0 %v976
        %1022 = vmatmul.bf16.gmra.mxu0 %v901
        %v1023 = vpop.f32.mrf.mxu0
        %v1024 = vadd.f32 %v1010, %v1023
        %v1025 = vpop.f32.mrf.mxu0
        %v1026 = vadd.f32 %v1012, %v1025
        %1027 = vdwg.mxu0
        %v1028 = vadd.f32 %v858, %v1024
        %v1029 = vadd.f32 %v859, %v1026
        %v1030 = vld [vmem:[%s8] sm:$0x1]
        %v1032 = vperm.slane %v1030, 0
        %v1034 = vadd.f32 %v1028, %v1032
        %v1035 = vadd.f32 %v1029, %v1032
        %vm1036 = vcmp.gt.f32.partialorder %v1034, 0.0
        %vm1037 = vcmp.gt.f32.partialorder %v1035, 0.0
        %v1038 = vmul.f32 %v1034, 0.2
        %v1039 = vmul.f32 %v1035, 0.2
        %v1040 = vsel %vm1036, %v1034, %v1038
        %v1041 = vsel %vm1037, %v1035, %v1039
        %vm1042 = vcmask 261120
        %v1043 = vsel %vm1042, %v1040, -inf
        %v1044 = vsel %vm1042, %v1041, -inf
        %v1045 = vmax.f32 %v1043, %v1044
        %v1046 = vsel %vm1042, %v1040, 0.0
        %v1047 = vsel %vm1042, %v1041, 0.0
        %v1048 = vadd.f32 %v1046, %v1047
        %p1049 = scmp.eq.s32.totalorder %s35, 0
        // Predicated region
        $region85: #{dgcnn_forward.7} parent=83 // pred_check
          %p1050 = pneg %p1049
        $region86: #{dgcnn_forward.7} parent=83 // pred_check_branch
          %1052 = sbr.rel (%p1050) target = $region88
        $region87: #{dgcnn_forward.7} parent=83 // pred_region
          %1053 = vst.msk [vmem:[#allocation2] sm:$0xff] %vm1042, %v1045
          %1054 = vst.msk [vmem:[#allocation3] sm:$0xff] %vm1042, %v1048
        $region88: #{dgcnn_forward.7} parent=83 // pred_fallthru
          _
        %p1055 = scmp.gt.s32.totalorder %s35, 0
        // Predicated region
        $region89: #{dgcnn_forward.7} parent=83 // pred_check
          %p1056 = pneg %p1055
        $region90: #{dgcnn_forward.7} parent=83 // pred_check_branch
          %1058 = sbr.rel (%p1056) target = $region92
        $region91: #{dgcnn_forward.7} parent=83 // pred_region
          %v1059 = vld [vmem:[#allocation2] sm:$0xff]
          %v1060 = vmax.f32 %v1059, %v1045
          %1061 = vst.msk [vmem:[#allocation2] sm:$0xff] %vm1042, %v1060
          %v1062 = vld [vmem:[#allocation3] sm:$0xff]
          %v1063 = vadd.f32 %v1062, %v1048
          %1064 = vst.msk [vmem:[#allocation3] sm:$0xff] %vm1042, %v1063
        $region92: #{dgcnn_forward.7} parent=83 // pred_fallthru
          _
        // Predicated region
        $region93: #{dgcnn_forward.7} parent=83 // pred_check
          %p1065 = pneg %p1049
        $region94: #{dgcnn_forward.7} parent=83 // pred_check_branch
          %1067 = sbr.rel (%p1065) target = $region96
        $region95: #{dgcnn_forward.7} parent=83 // pred_region
          %v1068 = vld [vmem:[#allocation2] sm:$0xff]
          %v1069 = vsel %vm1042, %v1068, -inf
          %v1070 = vrot.slane %v1069, 4
          %v1071 = vmax.f32 %v1069, %v1070
          %v1072 = vrot.slane %v1071, 2
          %v1073 = vmax.f32 %v1071, %v1072
          %v1074 = vrot.slane %v1073, 1
          %v1075 = vmax.f32 %v1073, %v1074
          %v1076 = vld [vmem:[#allocation3] sm:$0xff]
          %v1077 = vsel %vm1042, %v1076, 0.0
          %v1078 = vrot.slane %v1077, 4
          %v1079 = vadd.f32 %v1077, %v1078
          %v1080 = vrot.slane %v1079, 2
          %v1081 = vadd.f32 %v1079, %v1080
          %v1082 = vrot.slane %v1081, 1
          %v1083 = vadd.f32 %v1081, %v1082
          %v1084 = vmul.f32 %v1083, 0.0625
          %v1085 = vpack.c.bf16 %v1075, %v1075
          %v1086 = vld [vmem:[%s9] sm:$0xff]
          %v1087 = vld [vmem:[%s9 + $0x8] sm:$0xff]
          %v1088 = vld [vmem:[%s9 + $0x10] sm:$0xff]
          %v1089 = vld [vmem:[%s9 + $0x18] sm:$0xff]
          %v1090 = vld [vmem:[%s9 + $0x20] sm:$0xff]
          %v1091 = vld [vmem:[%s9 + $0x28] sm:$0xff]
          %v1092 = vld [vmem:[%s9 + $0x30] sm:$0xff]
          %v1093 = vld [vmem:[%s9 + $0x38] sm:$0xff]
          %v1094 = vpack.c.bf16 %v1084, %v1084
          %v1095 = vld [vmem:[%s10] sm:$0xff]
          %v1096 = vld [vmem:[%s10 + $0x8] sm:$0xff]
          %v1097 = vld [vmem:[%s10 + $0x10] sm:$0xff]
          %v1098 = vld [vmem:[%s10 + $0x18] sm:$0xff]
          %v1099 = vld [vmem:[%s10 + $0x20] sm:$0xff]
          %v1100 = vld [vmem:[%s10 + $0x28] sm:$0xff]
          %v1101 = vld [vmem:[%s10 + $0x30] sm:$0xff]
          %v1102 = vld [vmem:[%s10 + $0x38] sm:$0xff]
          %v1111 = vunpack.c.l.b16 %v1095
          %v1112 = vunpack.c.h.b16 %v1095
          %v1113 = vunpack.c.l.b16 %v1096
          %v1114 = vunpack.c.h.b16 %v1096
          %v1115 = vunpack.c.l.b16 %v1097
          %v1116 = vunpack.c.h.b16 %v1097
          %v1117 = vunpack.c.l.b16 %v1098
          %v1118 = vunpack.c.h.b16 %v1098
          %v1119 = vunpack.c.l.b16 %v1099
          %v1120 = vunpack.c.h.b16 %v1099
          %v1121 = vunpack.c.l.b16 %v1100
          %v1122 = vunpack.c.h.b16 %v1100
          %v1123 = vunpack.c.l.b16 %v1101
          %v1124 = vunpack.c.h.b16 %v1101
          %v1125 = vunpack.c.l.b16 %v1102
          %v1126 = vunpack.c.h.b16 %v1102
          %v1127 = vpack.c.b16 %v1115, %v1111
          %v1128 = vpack.c.b16 %v1116, %v1112
          %v1129 = vpack.c.b16 %v1117, %v1113
          %v1130 = vpack.c.b16 %v1118, %v1114
          %v1131 = vpack.c.b16 %v1123, %v1119
          %v1132 = vpack.c.b16 %v1124, %v1120
          %v1133 = vpack.c.b16 %v1125, %v1121
          %v1134 = vpack.c.b16 %v1126, %v1122
          %v1144 = vsel %vm1042, %v1094, 0
          %1146 = vmatpush.bf16.msra.mxu0 0
          %1147 = vmatpush.bf16.msra.mxu0 0
          %1148 = vmatpush.bf16.msra.mxu0 0
          %1149 = vmatpush.bf16.msra.mxu0 0
          %1150 = vmatpush.bf16.msra.mxu0 0
          %1151 = vmatpush.bf16.msra.mxu0 0
          %1152 = vmatpush.bf16.msra.mxu0 %v1131
          %1153 = vmatpush.bf16.msra.mxu0 %v1127
          %1154 = vmatmul.bf16.gmra.mxu0 %v1144
          %v1155 = vpop.f32.mrf.mxu0
          %v1156 = vadd.f32 0.0, %v1155
          %v1157 = vpop.f32.mrf.mxu0
          %1158 = vdwg.mxu0
          %1159 = vmatpush.bf16.msra.mxu0 0
          %1160 = vmatpush.bf16.msra.mxu0 0
          %1161 = vmatpush.bf16.msra.mxu0 0
          %1162 = vmatpush.bf16.msra.mxu0 0
          %1163 = vmatpush.bf16.msra.mxu0 0
          %1164 = vmatpush.bf16.msra.mxu0 0
          %1165 = vmatpush.bf16.msra.mxu0 %v1132
          %1166 = vmatpush.bf16.msra.mxu0 %v1128
          %1167 = vmatmul.bf16.gmra.mxu0 %v1144
          %v1168 = vpop.f32.mrf.mxu0
          %v1169 = vadd.f32 0.0, %v1168
          %v1170 = vpop.f32.mrf.mxu0
          %1171 = vdwg.mxu0
          %1172 = vmatpush.bf16.msra.mxu0 0
          %1173 = vmatpush.bf16.msra.mxu0 0
          %1174 = vmatpush.bf16.msra.mxu0 0
          %1175 = vmatpush.bf16.msra.mxu0 0
          %1176 = vmatpush.bf16.msra.mxu0 0
          %1177 = vmatpush.bf16.msra.mxu0 0
          %1178 = vmatpush.bf16.msra.mxu0 %v1133
          %1179 = vmatpush.bf16.msra.mxu0 %v1129
          %1180 = vmatmul.bf16.gmra.mxu0 %v1144
          %v1181 = vpop.f32.mrf.mxu0
          %v1182 = vadd.f32 0.0, %v1181
          %v1183 = vpop.f32.mrf.mxu0
          %1184 = vdwg.mxu0
          %1185 = vmatpush.bf16.msra.mxu0 0
          %1186 = vmatpush.bf16.msra.mxu0 0
          %1187 = vmatpush.bf16.msra.mxu0 0
          %1188 = vmatpush.bf16.msra.mxu0 0
          %1189 = vmatpush.bf16.msra.mxu0 0
          %1190 = vmatpush.bf16.msra.mxu0 0
          %1191 = vmatpush.bf16.msra.mxu0 %v1134
          %1192 = vmatpush.bf16.msra.mxu0 %v1130
          %1193 = vmatmul.bf16.gmra.mxu0 %v1144
          %v1194 = vpop.f32.mrf.mxu0
          %v1195 = vadd.f32 0.0, %v1194
          %v1196 = vpop.f32.mrf.mxu0
          %1197 = vdwg.mxu0
          %v1206 = vunpack.c.l.b16 %v1086
          %v1207 = vunpack.c.h.b16 %v1086
          %v1208 = vunpack.c.l.b16 %v1087
          %v1209 = vunpack.c.h.b16 %v1087
          %v1210 = vunpack.c.l.b16 %v1088
          %v1211 = vunpack.c.h.b16 %v1088
          %v1212 = vunpack.c.l.b16 %v1089
          %v1213 = vunpack.c.h.b16 %v1089
          %v1214 = vunpack.c.l.b16 %v1090
          %v1215 = vunpack.c.h.b16 %v1090
          %v1216 = vunpack.c.l.b16 %v1091
          %v1217 = vunpack.c.h.b16 %v1091
          %v1218 = vunpack.c.l.b16 %v1092
          %v1219 = vunpack.c.h.b16 %v1092
          %v1220 = vunpack.c.l.b16 %v1093
          %v1221 = vunpack.c.h.b16 %v1093
          %v1222 = vpack.c.b16 %v1210, %v1206
          %v1223 = vpack.c.b16 %v1211, %v1207
          %v1224 = vpack.c.b16 %v1212, %v1208
          %v1225 = vpack.c.b16 %v1213, %v1209
          %v1226 = vpack.c.b16 %v1218, %v1214
          %v1227 = vpack.c.b16 %v1219, %v1215
          %v1228 = vpack.c.b16 %v1220, %v1216
          %v1229 = vpack.c.b16 %v1221, %v1217
          %v1239 = vsel %vm1042, %v1085, 0
          %1241 = vmatpush.bf16.msra.mxu0 0
          %1242 = vmatpush.bf16.msra.mxu0 0
          %1243 = vmatpush.bf16.msra.mxu0 0
          %1244 = vmatpush.bf16.msra.mxu0 0
          %1245 = vmatpush.bf16.msra.mxu0 0
          %1246 = vmatpush.bf16.msra.mxu0 0
          %1247 = vmatpush.bf16.msra.mxu0 %v1226
          %1248 = vmatpush.bf16.msra.mxu0 %v1222
          %1249 = vmatmul.bf16.gmra.mxu0 %v1239
          %v1250 = vpop.f32.mrf.mxu0
          %v1251 = vadd.f32 %v1156, %v1250
          %v1252 = vpop.f32.mrf.mxu0
          %1253 = vdwg.mxu0
          %1254 = vmatpush.bf16.msra.mxu0 0
          %1255 = vmatpush.bf16.msra.mxu0 0
          %1256 = vmatpush.bf16.msra.mxu0 0
          %1257 = vmatpush.bf16.msra.mxu0 0
          %1258 = vmatpush.bf16.msra.mxu0 0
          %1259 = vmatpush.bf16.msra.mxu0 0
          %1260 = vmatpush.bf16.msra.mxu0 %v1227
          %1261 = vmatpush.bf16.msra.mxu0 %v1223
          %1262 = vmatmul.bf16.gmra.mxu0 %v1239
          %v1263 = vpop.f32.mrf.mxu0
          %v1264 = vadd.f32 %v1169, %v1263
          %v1265 = vpop.f32.mrf.mxu0
          %1266 = vdwg.mxu0
          %1267 = vmatpush.bf16.msra.mxu0 0
          %1268 = vmatpush.bf16.msra.mxu0 0
          %1269 = vmatpush.bf16.msra.mxu0 0
          %1270 = vmatpush.bf16.msra.mxu0 0
          %1271 = vmatpush.bf16.msra.mxu0 0
          %1272 = vmatpush.bf16.msra.mxu0 0
          %1273 = vmatpush.bf16.msra.mxu0 %v1228
          %1274 = vmatpush.bf16.msra.mxu0 %v1224
          %1275 = vmatmul.bf16.gmra.mxu0 %v1239
          %v1276 = vpop.f32.mrf.mxu0
          %v1277 = vadd.f32 %v1182, %v1276
          %v1278 = vpop.f32.mrf.mxu0
          %1279 = vdwg.mxu0
          %1280 = vmatpush.bf16.msra.mxu0 0
          %1281 = vmatpush.bf16.msra.mxu0 0
          %1282 = vmatpush.bf16.msra.mxu0 0
          %1283 = vmatpush.bf16.msra.mxu0 0
          %1284 = vmatpush.bf16.msra.mxu0 0
          %1285 = vmatpush.bf16.msra.mxu0 0
          %1286 = vmatpush.bf16.msra.mxu0 %v1229
          %1287 = vmatpush.bf16.msra.mxu0 %v1225
          %1288 = vmatmul.bf16.gmra.mxu0 %v1239
          %v1289 = vpop.f32.mrf.mxu0
          %v1290 = vadd.f32 %v1195, %v1289
          %v1291 = vpop.f32.mrf.mxu0
          %1292 = vdwg.mxu0
          %v1293 = vld [vmem:[%s11] sm:$0xf]
          %v1295 = vperm.slane %v1293, 0
          %v1296 = vperm.slane %v1293, 1
          %v1297 = vperm.slane %v1293, 2
          %v1298 = vperm.slane %v1293, 3
          %v1303 = vadd.f32 %v1251, %v1295
          %v1304 = vadd.f32 %v1264, %v1296
          %v1305 = vadd.f32 %v1277, %v1297
          %v1306 = vadd.f32 %v1290, %v1298
          %vm1307 = vcmp.gt.f32.partialorder %v1303, 0.0
          %vm1308 = vcmp.gt.f32.partialorder %v1304, 0.0
          %vm1309 = vcmp.gt.f32.partialorder %v1305, 0.0
          %vm1310 = vcmp.gt.f32.partialorder %v1306, 0.0
          %v1311 = vmul.f32 %v1303, 0.2
          %v1312 = vmul.f32 %v1304, 0.2
          %v1313 = vmul.f32 %v1305, 0.2
          %v1314 = vmul.f32 %v1306, 0.2
          %v1315 = vsel %vm1307, %v1303, %v1311
          %v1316 = vsel %vm1308, %v1304, %v1312
          %v1317 = vsel %vm1309, %v1305, %v1313
          %v1318 = vsel %vm1310, %v1306, %v1314
          %v1319 = vpack.c.bf16 %v1315, %v1315
          %v1320 = vpack.c.bf16 %v1316, %v1316
          %v1321 = vpack.c.bf16 %v1317, %v1317
          %v1322 = vpack.c.bf16 %v1318, %v1318
          %v1323 = vld [vmem:[%s12] sm:$0xff]
          %v1324 = vld [vmem:[%s12 + $0x8] sm:$0xff]
          %v1325 = vld [vmem:[%s12 + $0x10] sm:$0xff]
          %v1326 = vld [vmem:[%s12 + $0x18] sm:$0xff]
          %v1327 = vld [vmem:[%s12 + $0x20] sm:$0xff]
          %v1328 = vld [vmem:[%s12 + $0x28] sm:$0xff]
          %v1329 = vld [vmem:[%s12 + $0x30] sm:$0xff]
          %v1330 = vld [vmem:[%s12 + $0x38] sm:$0xff]
          %v1331 = vld [vmem:[%s12 + $0x40] sm:$0xff]
          %v1332 = vld [vmem:[%s12 + $0x48] sm:$0xff]
          %v1333 = vld [vmem:[%s12 + $0x50] sm:$0xff]
          %v1334 = vld [vmem:[%s12 + $0x58] sm:$0xff]
          %v1335 = vld [vmem:[%s12 + $0x60] sm:$0xff]
          %v1336 = vld [vmem:[%s12 + $0x68] sm:$0xff]
          %v1337 = vld [vmem:[%s12 + $0x70] sm:$0xff]
          %v1338 = vld [vmem:[%s12 + $0x78] sm:$0xff]
          %v1339 = vld [vmem:[%s12 + $0x80] sm:$0xff]
          %v1340 = vld [vmem:[%s12 + $0x88] sm:$0xff]
          %v1341 = vld [vmem:[%s12 + $0x90] sm:$0xff]
          %v1342 = vld [vmem:[%s12 + $0x98] sm:$0xff]
          %v1343 = vld [vmem:[%s12 + $0xa0] sm:$0xff]
          %v1344 = vld [vmem:[%s12 + $0xa8] sm:$0xff]
          %v1345 = vld [vmem:[%s12 + $0xb0] sm:$0xff]
          %v1346 = vld [vmem:[%s12 + $0xb8] sm:$0xff]
          %v1347 = vld [vmem:[%s12 + $0xc0] sm:$0xff]
          %v1348 = vld [vmem:[%s12 + $0xc8] sm:$0xff]
          %v1349 = vld [vmem:[%s12 + $0xd0] sm:$0xff]
          %v1350 = vld [vmem:[%s12 + $0xd8] sm:$0xff]
          %v1351 = vld [vmem:[%s12 + $0xe0] sm:$0xff]
          %v1352 = vld [vmem:[%s12 + $0xe8] sm:$0xff]
          %v1353 = vld [vmem:[%s12 + $0xf0] sm:$0xff]
          %v1354 = vld [vmem:[%s12 + $0xf8] sm:$0xff]
          %v1355 = vld [vmem:[%s12 + $0x100] sm:$0xff]
          %v1356 = vld [vmem:[%s12 + $0x108] sm:$0xff]
          %v1357 = vld [vmem:[%s12 + $0x110] sm:$0xff]
          %v1358 = vld [vmem:[%s12 + $0x118] sm:$0xff]
          %v1359 = vld [vmem:[%s12 + $0x120] sm:$0xff]
          %v1360 = vld [vmem:[%s12 + $0x128] sm:$0xff]
          %v1361 = vld [vmem:[%s12 + $0x130] sm:$0xff]
          %v1362 = vld [vmem:[%s12 + $0x138] sm:$0xff]
          %v1363 = vld [vmem:[%s12 + $0x140] sm:$0xff]
          %v1364 = vld [vmem:[%s12 + $0x148] sm:$0xff]
          %v1365 = vld [vmem:[%s12 + $0x150] sm:$0xff]
          %v1366 = vld [vmem:[%s12 + $0x158] sm:$0xff]
          %v1367 = vld [vmem:[%s12 + $0x160] sm:$0xff]
          %v1368 = vld [vmem:[%s12 + $0x168] sm:$0xff]
          %v1369 = vld [vmem:[%s12 + $0x170] sm:$0xff]
          %v1370 = vld [vmem:[%s12 + $0x178] sm:$0xff]
          %v1371 = vld [vmem:[%s12 + $0x180] sm:$0xff]
          %v1372 = vld [vmem:[%s12 + $0x188] sm:$0xff]
          %v1373 = vld [vmem:[%s12 + $0x190] sm:$0xff]
          %v1374 = vld [vmem:[%s12 + $0x198] sm:$0xff]
          %v1375 = vld [vmem:[%s12 + $0x1a0] sm:$0xff]
          %v1376 = vld [vmem:[%s12 + $0x1a8] sm:$0xff]
          %v1377 = vld [vmem:[%s12 + $0x1b0] sm:$0xff]
          %v1378 = vld [vmem:[%s12 + $0x1b8] sm:$0xff]
          %v1379 = vld [vmem:[%s12 + $0x1c0] sm:$0xff]
          %v1380 = vld [vmem:[%s12 + $0x1c8] sm:$0xff]
          %v1381 = vld [vmem:[%s12 + $0x1d0] sm:$0xff]
          %v1382 = vld [vmem:[%s12 + $0x1d8] sm:$0xff]
          %v1383 = vld [vmem:[%s12 + $0x1e0] sm:$0xff]
          %v1384 = vld [vmem:[%s12 + $0x1e8] sm:$0xff]
          %v1385 = vld [vmem:[%s12 + $0x1f0] sm:$0xff]
          %v1386 = vld [vmem:[%s12 + $0x1f8] sm:$0xff]
          %v1387 = vld [vmem:[%s13] sm:$0x3]
          %v1452 = vunpack.c.l.b16 %v1323
          %v1453 = vunpack.c.h.b16 %v1323
          %v1454 = vunpack.c.l.b16 %v1324
          %v1455 = vunpack.c.h.b16 %v1324
          %v1456 = vunpack.c.l.b16 %v1325
          %v1457 = vunpack.c.h.b16 %v1325
          %v1458 = vunpack.c.l.b16 %v1326
          %v1459 = vunpack.c.h.b16 %v1326
          %v1460 = vunpack.c.l.b16 %v1327
          %v1461 = vunpack.c.h.b16 %v1327
          %v1462 = vunpack.c.l.b16 %v1328
          %v1463 = vunpack.c.h.b16 %v1328
          %v1464 = vunpack.c.l.b16 %v1329
          %v1465 = vunpack.c.h.b16 %v1329
          %v1466 = vunpack.c.l.b16 %v1330
          %v1467 = vunpack.c.h.b16 %v1330
          %v1468 = vunpack.c.l.b16 %v1331
          %v1469 = vunpack.c.h.b16 %v1331
          %v1470 = vunpack.c.l.b16 %v1332
          %v1471 = vunpack.c.h.b16 %v1332
          %v1472 = vunpack.c.l.b16 %v1333
          %v1473 = vunpack.c.h.b16 %v1333
          %v1474 = vunpack.c.l.b16 %v1334
          %v1475 = vunpack.c.h.b16 %v1334
          %v1476 = vunpack.c.l.b16 %v1335
          %v1477 = vunpack.c.h.b16 %v1335
          %v1478 = vunpack.c.l.b16 %v1336
          %v1479 = vunpack.c.h.b16 %v1336
          %v1480 = vunpack.c.l.b16 %v1337
          %v1481 = vunpack.c.h.b16 %v1337
          %v1482 = vunpack.c.l.b16 %v1338
          %v1483 = vunpack.c.h.b16 %v1338
          %v1484 = vunpack.c.l.b16 %v1339
          %v1485 = vunpack.c.h.b16 %v1339
          %v1486 = vunpack.c.l.b16 %v1340
          %v1487 = vunpack.c.h.b16 %v1340
          %v1488 = vunpack.c.l.b16 %v1341
          %v1489 = vunpack.c.h.b16 %v1341
          %v1490 = vunpack.c.l.b16 %v1342
          %v1491 = vunpack.c.h.b16 %v1342
          %v1492 = vunpack.c.l.b16 %v1343
          %v1493 = vunpack.c.h.b16 %v1343
          %v1494 = vunpack.c.l.b16 %v1344
          %v1495 = vunpack.c.h.b16 %v1344
          %v1496 = vunpack.c.l.b16 %v1345
          %v1497 = vunpack.c.h.b16 %v1345
          %v1498 = vunpack.c.l.b16 %v1346
          %v1499 = vunpack.c.h.b16 %v1346
          %v1500 = vunpack.c.l.b16 %v1347
          %v1501 = vunpack.c.h.b16 %v1347
          %v1502 = vunpack.c.l.b16 %v1348
          %v1503 = vunpack.c.h.b16 %v1348
          %v1504 = vunpack.c.l.b16 %v1349
          %v1505 = vunpack.c.h.b16 %v1349
          %v1506 = vunpack.c.l.b16 %v1350
          %v1507 = vunpack.c.h.b16 %v1350
          %v1508 = vunpack.c.l.b16 %v1351
          %v1509 = vunpack.c.h.b16 %v1351
          %v1510 = vunpack.c.l.b16 %v1352
          %v1511 = vunpack.c.h.b16 %v1352
          %v1512 = vunpack.c.l.b16 %v1353
          %v1513 = vunpack.c.h.b16 %v1353
          %v1514 = vunpack.c.l.b16 %v1354
          %v1515 = vunpack.c.h.b16 %v1354
          %v1516 = vunpack.c.l.b16 %v1355
          %v1517 = vunpack.c.h.b16 %v1355
          %v1518 = vunpack.c.l.b16 %v1356
          %v1519 = vunpack.c.h.b16 %v1356
          %v1520 = vunpack.c.l.b16 %v1357
          %v1521 = vunpack.c.h.b16 %v1357
          %v1522 = vunpack.c.l.b16 %v1358
          %v1523 = vunpack.c.h.b16 %v1358
          %v1524 = vunpack.c.l.b16 %v1359
          %v1525 = vunpack.c.h.b16 %v1359
          %v1526 = vunpack.c.l.b16 %v1360
          %v1527 = vunpack.c.h.b16 %v1360
          %v1528 = vunpack.c.l.b16 %v1361
          %v1529 = vunpack.c.h.b16 %v1361
          %v1530 = vunpack.c.l.b16 %v1362
          %v1531 = vunpack.c.h.b16 %v1362
          %v1532 = vunpack.c.l.b16 %v1363
          %v1533 = vunpack.c.h.b16 %v1363
          %v1534 = vunpack.c.l.b16 %v1364
          %v1535 = vunpack.c.h.b16 %v1364
          %v1536 = vunpack.c.l.b16 %v1365
          %v1537 = vunpack.c.h.b16 %v1365
          %v1538 = vunpack.c.l.b16 %v1366
          %v1539 = vunpack.c.h.b16 %v1366
          %v1540 = vunpack.c.l.b16 %v1367
          %v1541 = vunpack.c.h.b16 %v1367
          %v1542 = vunpack.c.l.b16 %v1368
          %v1543 = vunpack.c.h.b16 %v1368
          %v1544 = vunpack.c.l.b16 %v1369
          %v1545 = vunpack.c.h.b16 %v1369
          %v1546 = vunpack.c.l.b16 %v1370
          %v1547 = vunpack.c.h.b16 %v1370
          %v1548 = vunpack.c.l.b16 %v1371
          %v1549 = vunpack.c.h.b16 %v1371
          %v1550 = vunpack.c.l.b16 %v1372
          %v1551 = vunpack.c.h.b16 %v1372
          %v1552 = vunpack.c.l.b16 %v1373
          %v1553 = vunpack.c.h.b16 %v1373
          %v1554 = vunpack.c.l.b16 %v1374
          %v1555 = vunpack.c.h.b16 %v1374
          %v1556 = vunpack.c.l.b16 %v1375
          %v1557 = vunpack.c.h.b16 %v1375
          %v1558 = vunpack.c.l.b16 %v1376
          %v1559 = vunpack.c.h.b16 %v1376
          %v1560 = vunpack.c.l.b16 %v1377
          %v1561 = vunpack.c.h.b16 %v1377
          %v1562 = vunpack.c.l.b16 %v1378
          %v1563 = vunpack.c.h.b16 %v1378
          %v1564 = vunpack.c.l.b16 %v1379
          %v1565 = vunpack.c.h.b16 %v1379
          %v1566 = vunpack.c.l.b16 %v1380
          %v1567 = vunpack.c.h.b16 %v1380
          %v1568 = vunpack.c.l.b16 %v1381
          %v1569 = vunpack.c.h.b16 %v1381
          %v1570 = vunpack.c.l.b16 %v1382
          %v1571 = vunpack.c.h.b16 %v1382
          %v1572 = vunpack.c.l.b16 %v1383
          %v1573 = vunpack.c.h.b16 %v1383
          %v1574 = vunpack.c.l.b16 %v1384
          %v1575 = vunpack.c.h.b16 %v1384
          %v1576 = vunpack.c.l.b16 %v1385
          %v1577 = vunpack.c.h.b16 %v1385
          %v1578 = vunpack.c.l.b16 %v1386
          %v1579 = vunpack.c.h.b16 %v1386
          %v1580 = vpack.c.b16 %v1454, %v1452
          %v1581 = vpack.c.b16 %v1455, %v1453
          %v1582 = vpack.c.b16 %v1458, %v1456
          %v1583 = vpack.c.b16 %v1459, %v1457
          %v1584 = vpack.c.b16 %v1462, %v1460
          %v1585 = vpack.c.b16 %v1463, %v1461
          %v1586 = vpack.c.b16 %v1466, %v1464
          %v1587 = vpack.c.b16 %v1467, %v1465
          %v1588 = vpack.c.b16 %v1470, %v1468
          %v1589 = vpack.c.b16 %v1471, %v1469
          %v1590 = vpack.c.b16 %v1474, %v1472
          %v1591 = vpack.c.b16 %v1475, %v1473
          %v1592 = vpack.c.b16 %v1478, %v1476
          %v1593 = vpack.c.b16 %v1479, %v1477
          %v1594 = vpack.c.b16 %v1482, %v1480
          %v1595 = vpack.c.b16 %v1483, %v1481
          %v1596 = vpack.c.b16 %v1486, %v1484
          %v1597 = vpack.c.b16 %v1487, %v1485
          %v1598 = vpack.c.b16 %v1490, %v1488
          %v1599 = vpack.c.b16 %v1491, %v1489
          %v1600 = vpack.c.b16 %v1494, %v1492
          %v1601 = vpack.c.b16 %v1495, %v1493
          %v1602 = vpack.c.b16 %v1498, %v1496
          %v1603 = vpack.c.b16 %v1499, %v1497
          %v1604 = vpack.c.b16 %v1502, %v1500
          %v1605 = vpack.c.b16 %v1503, %v1501
          %v1606 = vpack.c.b16 %v1506, %v1504
          %v1607 = vpack.c.b16 %v1507, %v1505
          %v1608 = vpack.c.b16 %v1510, %v1508
          %v1609 = vpack.c.b16 %v1511, %v1509
          %v1610 = vpack.c.b16 %v1514, %v1512
          %v1611 = vpack.c.b16 %v1515, %v1513
          %v1612 = vpack.c.b16 %v1518, %v1516
          %v1613 = vpack.c.b16 %v1519, %v1517
          %v1614 = vpack.c.b16 %v1522, %v1520
          %v1615 = vpack.c.b16 %v1523, %v1521
          %v1616 = vpack.c.b16 %v1526, %v1524
          %v1617 = vpack.c.b16 %v1527, %v1525
          %v1618 = vpack.c.b16 %v1530, %v1528
          %v1619 = vpack.c.b16 %v1531, %v1529
          %v1620 = vpack.c.b16 %v1534, %v1532
          %v1621 = vpack.c.b16 %v1535, %v1533
          %v1622 = vpack.c.b16 %v1538, %v1536
          %v1623 = vpack.c.b16 %v1539, %v1537
          %v1624 = vpack.c.b16 %v1542, %v1540
          %v1625 = vpack.c.b16 %v1543, %v1541
          %v1626 = vpack.c.b16 %v1546, %v1544
          %v1627 = vpack.c.b16 %v1547, %v1545
          %v1628 = vpack.c.b16 %v1550, %v1548
          %v1629 = vpack.c.b16 %v1551, %v1549
          %v1630 = vpack.c.b16 %v1554, %v1552
          %v1631 = vpack.c.b16 %v1555, %v1553
          %v1632 = vpack.c.b16 %v1558, %v1556
          %v1633 = vpack.c.b16 %v1559, %v1557
          %v1634 = vpack.c.b16 %v1562, %v1560
          %v1635 = vpack.c.b16 %v1563, %v1561
          %v1636 = vpack.c.b16 %v1566, %v1564
          %v1637 = vpack.c.b16 %v1567, %v1565
          %v1638 = vpack.c.b16 %v1570, %v1568
          %v1639 = vpack.c.b16 %v1571, %v1569
          %v1640 = vpack.c.b16 %v1574, %v1572
          %v1641 = vpack.c.b16 %v1575, %v1573
          %v1642 = vpack.c.b16 %v1578, %v1576
          %v1643 = vpack.c.b16 %v1579, %v1577
          %v1709 = vperm.slane %v1387, 0
          %v1710 = vperm.slane %v1387, 1
          %1713 = vmatpush.bf16.msra.mxu0 %v1594
          %1714 = vmatpush.bf16.msra.mxu0 %v1592
          %1715 = vmatpush.bf16.msra.mxu0 %v1590
          %1716 = vmatpush.bf16.msra.mxu0 %v1588
          %1717 = vmatpush.bf16.msra.mxu0 %v1586
          %1718 = vmatpush.bf16.msra.mxu0 %v1584
          %1719 = vmatpush.bf16.msra.mxu0 %v1582
          %1720 = vmatpush.bf16.msra.mxu0 %v1580
          %1721 = vmatmul.bf16.gmra.mxu0 %v1319
          %v1722 = vpop.f32.mrf.mxu0
          %v1723 = vadd.f32 %v1709, %v1722
          %v1724 = vpop.f32.mrf.mxu0
          %1725 = vdwg.mxu0
          %1726 = vmatpush.bf16.msra.mxu0 %v1610
          %1727 = vmatpush.bf16.msra.mxu0 %v1608
          %1728 = vmatpush.bf16.msra.mxu0 %v1606
          %1729 = vmatpush.bf16.msra.mxu0 %v1604
          %1730 = vmatpush.bf16.msra.mxu0 %v1602
          %1731 = vmatpush.bf16.msra.mxu0 %v1600
          %1732 = vmatpush.bf16.msra.mxu0 %v1598
          %1733 = vmatpush.bf16.msra.mxu0 %v1596
          %1734 = vmatmul.bf16.gmra.mxu0 %v1320
          %v1735 = vpop.f32.mrf.mxu0
          %v1736 = vadd.f32 %v1723, %v1735
          %v1737 = vpop.f32.mrf.mxu0
          %1738 = vdwg.mxu0
          %1739 = vmatpush.bf16.msra.mxu0 %v1626
          %1740 = vmatpush.bf16.msra.mxu0 %v1624
          %1741 = vmatpush.bf16.msra.mxu0 %v1622
          %1742 = vmatpush.bf16.msra.mxu0 %v1620
          %1743 = vmatpush.bf16.msra.mxu0 %v1618
          %1744 = vmatpush.bf16.msra.mxu0 %v1616
          %1745 = vmatpush.bf16.msra.mxu0 %v1614
          %1746 = vmatpush.bf16.msra.mxu0 %v1612
          %1747 = vmatmul.bf16.gmra.mxu0 %v1321
          %v1748 = vpop.f32.mrf.mxu0
          %v1749 = vadd.f32 %v1736, %v1748
          %v1750 = vpop.f32.mrf.mxu0
          %1751 = vdwg.mxu0
          %1752 = vmatpush.bf16.msra.mxu0 %v1642
          %1753 = vmatpush.bf16.msra.mxu0 %v1640
          %1754 = vmatpush.bf16.msra.mxu0 %v1638
          %1755 = vmatpush.bf16.msra.mxu0 %v1636
          %1756 = vmatpush.bf16.msra.mxu0 %v1634
          %1757 = vmatpush.bf16.msra.mxu0 %v1632
          %1758 = vmatpush.bf16.msra.mxu0 %v1630
          %1759 = vmatpush.bf16.msra.mxu0 %v1628
          %1760 = vmatmul.bf16.gmra.mxu0 %v1322
          %v1761 = vpop.f32.mrf.mxu0
          %v1762 = vadd.f32 %v1749, %v1761
          %v1763 = vpop.f32.mrf.mxu0
          %1764 = vdwg.mxu0
          %1765 = vmatpush.bf16.msra.mxu0 %v1595
          %1766 = vmatpush.bf16.msra.mxu0 %v1593
          %1767 = vmatpush.bf16.msra.mxu0 %v1591
          %1768 = vmatpush.bf16.msra.mxu0 %v1589
          %1769 = vmatpush.bf16.msra.mxu0 %v1587
          %1770 = vmatpush.bf16.msra.mxu0 %v1585
          %1771 = vmatpush.bf16.msra.mxu0 %v1583
          %1772 = vmatpush.bf16.msra.mxu0 %v1581
          %1773 = vmatmul.bf16.gmra.mxu0 %v1319
          %v1774 = vpop.f32.mrf.mxu0
          %v1775 = vadd.f32 %v1710, %v1774
          %v1776 = vpop.f32.mrf.mxu0
          %1777 = vdwg.mxu0
          %1778 = vmatpush.bf16.msra.mxu0 %v1611
          %1779 = vmatpush.bf16.msra.mxu0 %v1609
          %1780 = vmatpush.bf16.msra.mxu0 %v1607
          %1781 = vmatpush.bf16.msra.mxu0 %v1605
          %1782 = vmatpush.bf16.msra.mxu0 %v1603
          %1783 = vmatpush.bf16.msra.mxu0 %v1601
          %1784 = vmatpush.bf16.msra.mxu0 %v1599
          %1785 = vmatpush.bf16.msra.mxu0 %v1597
          %1786 = vmatmul.bf16.gmra.mxu0 %v1320
          %v1787 = vpop.f32.mrf.mxu0
          %v1788 = vadd.f32 %v1775, %v1787
          %v1789 = vpop.f32.mrf.mxu0
          %1790 = vdwg.mxu0
          %1791 = vmatpush.bf16.msra.mxu0 %v1627
          %1792 = vmatpush.bf16.msra.mxu0 %v1625
          %1793 = vmatpush.bf16.msra.mxu0 %v1623
          %1794 = vmatpush.bf16.msra.mxu0 %v1621
          %1795 = vmatpush.bf16.msra.mxu0 %v1619
          %1796 = vmatpush.bf16.msra.mxu0 %v1617
          %1797 = vmatpush.bf16.msra.mxu0 %v1615
          %1798 = vmatpush.bf16.msra.mxu0 %v1613
          %1799 = vmatmul.bf16.gmra.mxu0 %v1321
          %v1800 = vpop.f32.mrf.mxu0
          %v1801 = vadd.f32 %v1788, %v1800
          %v1802 = vpop.f32.mrf.mxu0
          %1803 = vdwg.mxu0
          %1804 = vmatpush.bf16.msra.mxu0 %v1643
          %1805 = vmatpush.bf16.msra.mxu0 %v1641
          %1806 = vmatpush.bf16.msra.mxu0 %v1639
          %1807 = vmatpush.bf16.msra.mxu0 %v1637
          %1808 = vmatpush.bf16.msra.mxu0 %v1635
          %1809 = vmatpush.bf16.msra.mxu0 %v1633
          %1810 = vmatpush.bf16.msra.mxu0 %v1631
          %1811 = vmatpush.bf16.msra.mxu0 %v1629
          %1812 = vmatmul.bf16.gmra.mxu0 %v1322
          %v1813 = vpop.f32.mrf.mxu0
          %v1814 = vadd.f32 %v1801, %v1813
          %v1815 = vpop.f32.mrf.mxu0
          %1816 = vdwg.mxu0
          %vm1817 = vcmp.gt.f32.partialorder %v1762, 0.0
          %vm1818 = vcmp.gt.f32.partialorder %v1814, 0.0
          %v1819 = vmul.f32 %v1762, 0.2
          %v1820 = vmul.f32 %v1814, 0.2
          %v1821 = vsel %vm1817, %v1762, %v1819
          %v1822 = vsel %vm1818, %v1814, %v1820
          %v1823 = vpack.c.bf16 %v1821, %v1821
          %v1824 = vpack.c.bf16 %v1822, %v1822
          %v1825 = vld [vmem:[%s14] sm:$0xf]
          %v1826 = vld [vmem:[%s14 + $0x4] sm:$0xf]
          %v1827 = vld [vmem:[%s14 + $0x8] sm:$0xf]
          %v1828 = vld [vmem:[%s14 + $0xc] sm:$0xf]
          %v1829 = vld [vmem:[%s14 + $0x10] sm:$0xf]
          %v1830 = vld [vmem:[%s14 + $0x14] sm:$0xf]
          %v1831 = vld [vmem:[%s14 + $0x18] sm:$0xf]
          %v1832 = vld [vmem:[%s14 + $0x1c] sm:$0xf]
          %v1833 = vld [vmem:[%s14 + $0x20] sm:$0xf]
          %v1834 = vld [vmem:[%s14 + $0x24] sm:$0xf]
          %v1835 = vld [vmem:[%s14 + $0x28] sm:$0xf]
          %v1836 = vld [vmem:[%s14 + $0x2c] sm:$0xf]
          %v1837 = vld [vmem:[%s14 + $0x30] sm:$0xf]
          %v1838 = vld [vmem:[%s14 + $0x34] sm:$0xf]
          %v1839 = vld [vmem:[%s14 + $0x38] sm:$0xf]
          %v1840 = vld [vmem:[%s14 + $0x3c] sm:$0xf]
          %v1841 = vld [vmem:[%s14 + $0x40] sm:$0xf]
          %v1842 = vld [vmem:[%s14 + $0x44] sm:$0xf]
          %v1843 = vld [vmem:[%s14 + $0x48] sm:$0xf]
          %v1844 = vld [vmem:[%s14 + $0x4c] sm:$0xf]
          %v1845 = vld [vmem:[%s14 + $0x50] sm:$0xf]
          %v1846 = vld [vmem:[%s14 + $0x54] sm:$0xf]
          %v1847 = vld [vmem:[%s14 + $0x58] sm:$0xf]
          %v1848 = vld [vmem:[%s14 + $0x5c] sm:$0xf]
          %v1849 = vld [vmem:[%s14 + $0x60] sm:$0xf]
          %v1850 = vld [vmem:[%s14 + $0x64] sm:$0xf]
          %v1851 = vld [vmem:[%s14 + $0x68] sm:$0xf]
          %v1852 = vld [vmem:[%s14 + $0x6c] sm:$0xf]
          %v1853 = vld [vmem:[%s14 + $0x70] sm:$0xf]
          %v1854 = vld [vmem:[%s14 + $0x74] sm:$0xf]
          %v1855 = vld [vmem:[%s14 + $0x78] sm:$0xf]
          %v1856 = vld [vmem:[%s14 + $0x7c] sm:$0xf]
          %v1857 = vld [vmem:[%s15] sm:$0x1]
          %v1890 = vunpack.c.l.b16 %v1825
          %v1891 = vunpack.c.l.b16 %v1826
          %v1892 = vunpack.c.l.b16 %v1827
          %v1893 = vunpack.c.l.b16 %v1828
          %v1894 = vunpack.c.l.b16 %v1829
          %v1895 = vunpack.c.l.b16 %v1830
          %v1896 = vunpack.c.l.b16 %v1831
          %v1897 = vunpack.c.l.b16 %v1832
          %v1898 = vunpack.c.l.b16 %v1833
          %v1899 = vunpack.c.l.b16 %v1834
          %v1900 = vunpack.c.l.b16 %v1835
          %v1901 = vunpack.c.l.b16 %v1836
          %v1902 = vunpack.c.l.b16 %v1837
          %v1903 = vunpack.c.l.b16 %v1838
          %v1904 = vunpack.c.l.b16 %v1839
          %v1905 = vunpack.c.l.b16 %v1840
          %v1906 = vunpack.c.l.b16 %v1841
          %v1907 = vunpack.c.l.b16 %v1842
          %v1908 = vunpack.c.l.b16 %v1843
          %v1909 = vunpack.c.l.b16 %v1844
          %v1910 = vunpack.c.l.b16 %v1845
          %v1911 = vunpack.c.l.b16 %v1846
          %v1912 = vunpack.c.l.b16 %v1847
          %v1913 = vunpack.c.l.b16 %v1848
          %v1914 = vunpack.c.l.b16 %v1849
          %v1915 = vunpack.c.l.b16 %v1850
          %v1916 = vunpack.c.l.b16 %v1851
          %v1917 = vunpack.c.l.b16 %v1852
          %v1918 = vunpack.c.l.b16 %v1853
          %v1919 = vunpack.c.l.b16 %v1854
          %v1920 = vunpack.c.l.b16 %v1855
          %v1921 = vunpack.c.l.b16 %v1856
          %v1922 = vpack.c.b16 %v1891, %v1890
          %v1923 = vpack.c.b16 %v1893, %v1892
          %v1924 = vpack.c.b16 %v1895, %v1894
          %v1925 = vpack.c.b16 %v1897, %v1896
          %v1926 = vpack.c.b16 %v1899, %v1898
          %v1927 = vpack.c.b16 %v1901, %v1900
          %v1928 = vpack.c.b16 %v1903, %v1902
          %v1929 = vpack.c.b16 %v1905, %v1904
          %v1930 = vpack.c.b16 %v1907, %v1906
          %v1931 = vpack.c.b16 %v1909, %v1908
          %v1932 = vpack.c.b16 %v1911, %v1910
          %v1933 = vpack.c.b16 %v1913, %v1912
          %v1934 = vpack.c.b16 %v1915, %v1914
          %v1935 = vpack.c.b16 %v1917, %v1916
          %v1936 = vpack.c.b16 %v1919, %v1918
          %v1937 = vpack.c.b16 %v1921, %v1920
          %1954 = vmatpush.bf16.msra.mxu0 %v1929
          %1955 = vmatpush.bf16.msra.mxu0 %v1928
          %1956 = vmatpush.bf16.msra.mxu0 %v1927
          %1957 = vmatpush.bf16.msra.mxu0 %v1926
          %1958 = vmatpush.bf16.msra.mxu0 %v1925
          %1959 = vmatpush.bf16.msra.mxu0 %v1924
          %1960 = vmatpush.bf16.msra.mxu0 %v1923
          %1961 = vmatpush.bf16.msra.mxu0 %v1922
          %1962 = vmatmul.bf16.gmra.mxu0 %v1823
          %v1963 = vpop.f32.mrf.mxu0
          %v1964 = vadd.f32 %v1857, %v1963
          %v1965 = vpop.f32.mrf.mxu0
          %1966 = vdwg.mxu0
          %1967 = vmatpush.bf16.msra.mxu0 %v1937
          %1968 = vmatpush.bf16.msra.mxu0 %v1936
          %1969 = vmatpush.bf16.msra.mxu0 %v1935
          %1970 = vmatpush.bf16.msra.mxu0 %v1934
          %1971 = vmatpush.bf16.msra.mxu0 %v1933
          %1972 = vmatpush.bf16.msra.mxu0 %v1932
          %1973 = vmatpush.bf16.msra.mxu0 %v1931
          %1974 = vmatpush.bf16.msra.mxu0 %v1930
          %1975 = vmatmul.bf16.gmra.mxu0 %v1824
          %v1976 = vpop.f32.mrf.mxu0
          %v1977 = vadd.f32 %v1964, %v1976
          %v1978 = vpop.f32.mrf.mxu0
          %1979 = vdwg.mxu0
          %vm1980 = vcmask 540672
          %1981 = vst.msk [vmem:[%s616] sm:$0x1] %vm1980, %v1977
        $region96: #{dgcnn_forward.7} parent=83 // pred_fallthru
          _
        %s1982 = sand.u32 %s414, 1
        %s1983 = scalar_lea.sflag [#allocation5], %s1982
        %s1984 = sand.u32 %s414, 1
        %s1985 = scalar_lea.vmem [#allocation4], %s1984
        // Predicated region
        $region97: #{dgcnn_forward.7} parent=83 // pred_check
          %p1986 = pneg %p424
        $region98: #{dgcnn_forward.7} parent=83 // pred_check_branch
          %1988 = sbr.rel (%p1986) target = $region100
        $region99: #{dgcnn_forward.7} parent=83 // pred_region
          %1990 = vsyncadd %s1983, 0
          %s1991 = scalar_lea.hbm %s16, %s34
          %s1993 = sshll.u32 %s1985, 4
          %s1994 = int_to_ptr.vmem [resolvable:$true] %s1993
          %s1995 = sshll.u32 %s1991, 4
          %s1996 = int_to_ptr.hbm [resolvable:$true] %s1995
          %1998 = dma.vmem_to_hbm [thread:$0]  %s1994, 16, %s1996, %s1983
        $region100: #{dgcnn_forward.7} parent=83 // pred_fallthru
          _
      $region84: #{dgcnn_forward.7} parent=5 // pred_fallthru
        _
      %p1999 = scmp.le.s32.totalorder 2, %s25
      // Predicated region
      $region101: #{dgcnn_forward.7} parent=5 // pred_check
        %p2000 = pneg %p1999
      $region102: #{dgcnn_forward.7} parent=5 // pred_check_branch
        %2002 = sbr.rel (%p2000) target = $region104
      $region103: #{dgcnn_forward.7} parent=5 // pred_region
        %s2003 = ssub.s32 %s25, 2
        // Predicated region
        $region105: #{dgcnn_forward.7} parent=103 // pred_check
          %p2004 = pneg %p430
        $region106: #{dgcnn_forward.7} parent=103 // pred_check_branch
          %2006 = sbr.rel (%p2004) target = $region108
        $region107: #{dgcnn_forward.7} parent=103 // pred_region
          %s2007 = sand.u32 %s415, 1
          %s2008 = scalar_lea.sflag [#allocation5], %s2007
          %s2009 = sand.u32 %s415, 1
          %s2010 = scalar_lea.vmem [#allocation4], %s2009
          %2012 = dma.done %s2008, 16
        $region108: #{dgcnn_forward.7} parent=103 // pred_fallthru
          _
      $region104: #{dgcnn_forward.7} parent=5 // pred_fallthru
        _
    $region6: #{dgcnn_forward.7} parent=1 // loop_footer
      %s29 = sadd.s32 1, %s25
    $region7: #{dgcnn_forward.7} parent=1 // loop_footer_branch
      %24 = sbr.rel target = $region3
    $region8: #{dgcnn_forward.7} parent=1 // loop_exit
      _
    %2013 = vsyncpa [#allocation5], 1
    %s2014 = scalar_lea.sflag [#allocation5], 1
    %2015 = vsyncpa %s2014, 1

</llo_original>
